<compile_context>
chip_gen: v7x
topology: tpu7x:2x2x1
jax: 0.10.0
libtpu: 0.0.40
codegen_flags: <defaults>
</compile_context>

<pallas_src>
import functools

import jax
import jax.numpy as jnp
from jax.experimental import pallas as pl
from jax.experimental.pallas import tpu as pltpu

NEG_SLOPE = 0.2      # LeakyReLU slope used by PyG GATConv
NEG_BIG = -1e30      # Python float (a jnp scalar here would be captured as a const)

LANE = 128           # lane width: pad last dims to multiples of this
SUB = 8              # sublane width
A_COLS = 128         # lane-padded width of the packed attention matrix


def _round_up(x, m):
    return (x + m - 1) // m * m


def _dot(a, b):
    """MXU matmul: bf16 inputs (full rate on v5e/v6e/v7x), f32 accumulation."""
    return jnp.dot(a.astype(jnp.bfloat16), b.astype(jnp.bfloat16),
                   preferred_element_type=jnp.float32)


# ---------------------------------------------------------------------------
# Fused Pallas kernel: all GAT layers + ReLU + global max pool in one call.
# ---------------------------------------------------------------------------
def gat_enc_kernel(x_ref, adj_ref, sel_ref, *refs, layer_meta, pool_rows):
    """
    x_ref   : [Np, Fin_pad]  zero-padded node features
    adj_ref : [Np, Np]       adj[i, j] = 1 iff message edge j -> i (self loops incl.)
    sel_ref : [Np, Bp]       sel[i, b] = 1 iff node i belongs to graph b and is kept
    refs    : (w_0, att_0, bias_0, ..., w_{L-1}, att_{L-1}, bias_{L-1}, out_ref)
      w_i   : [in_pad_i, heads_i * fo_pad_i]
      att_i : [heads_i * fo_pad_i, A_COLS]; col h = att_dst_h, col heads_i+h = att_src_h
      bias_i: [1, heads_i * fo_pad_i]
    out_ref : [Bp, heads_last * fo_pad_last]  pooled features
    """
    out_ref = refs[-1]
    n_layers = len(layer_meta)

    # Neighbour mask: computed once, reused by every layer and head.
    mask = adj_ref[...] > 0.0                                   # [Np, Np] bool

    h = x_ref[...]                                              # [Np, Fin_pad] f32
    for li, (heads, f_out, fo_pad) in enumerate(layer_meta):
        w_ref, att_ref, b_ref = refs[3 * li], refs[3 * li + 1], refs[3 * li + 2]

        # Linear transform (MXU).
        xp = _dot(h, w_ref[...])                                # [Np, heads*fo_pad]

        # All heads' attention logits with one small MXU matmul instead of
        # 2*heads cross-lane reductions.  One aligned transpose gives the
        # source-role alphas in row form (no per-head [N,1]->[1,N] transposes).
        alphas = _dot(xp, att_ref[...])                         # [Np, A_COLS]
        alphas_t = alphas.T                                     # [A_COLS, Np]

        head_outs = []
        for hd in range(heads):                                 # heads is tiny & static
            a_dst = alphas[:, hd:hd + 1]                        # [Np, 1]  target role
            a_src = alphas_t[heads + hd:heads + hd + 1, :]      # [1, Np]  source role

            e = a_dst + a_src                                   # e[i,j] = a_dst[i] + a_src[j]
            e = jnp.where(e > 0, e, NEG_SLOPE * e)              # LeakyReLU(0.2)
            e = jnp.where(mask, e, NEG_BIG)                     # mask non-edges

            # Softmax over neighbours j.  Self-loops guarantee >=1 unmasked entry;
            # masked entries underflow to exactly 0 after exp (no second where).
            m = jnp.max(e, axis=1, keepdims=True)
            p = jnp.exp(e - m)
            denom = jnp.sum(p, axis=1, keepdims=True)
            attn = p * pl.reciprocal(denom, approx=True)        # EUP slot

            # Aggregate messages (MXU).  Head slice offsets are 128-aligned.
            xph = xp[:, hd * fo_pad:(hd + 1) * fo_pad]
            head_outs.append(_dot(attn, xph))

        out = head_outs[0] if heads == 1 else jnp.concatenate(head_outs, axis=1)
        h = out + b_ref[...]
        if li + 1 != n_layers:
            h = jnp.maximum(h, 0.0)                             # ReLU between layers

    # Fused global max pool epilogue (saves a launch + HBM round trip of h).
    sel = sel_ref[...]                                          # [Np, Bp]
    rows = []
    for b in range(pool_rows):                                  # B_pad tiny & static
        keep = sel[:, b:b + 1] > 0.0                            # [Np, 1]
        masked = jnp.where(keep, h, NEG_BIG)
        rows.append(jnp.max(masked, axis=0, keepdims=True))     # [1, F]
    out_ref[...] = jnp.concatenate(rows, axis=0)                # [Bp, F] lane-dense store


# ---------------------------------------------------------------------------
# Wrapper: padding / packing glue + one pallas_call.
# ---------------------------------------------------------------------------
_VMEM = pl.BlockSpec(memory_space=pltpu.MemorySpace.VMEM)


def _pad_weight(w, heads_in, fin, fin_pad, heads_out, fout, fout_pad):
    """Scatter per-head blocks of w into the per-head 128-aligned layout."""
    wp = jnp.zeros((heads_in * fin_pad, heads_out * fout_pad), jnp.float32)
    for hi in range(heads_in):
        for ho in range(heads_out):
            blk = w[hi * fin:(hi + 1) * fin, ho * fout:(ho + 1) * fout]
            wp = wp.at[hi * fin_pad:hi * fin_pad + fin,
                       ho * fout_pad:ho * fout_pad + fout].set(blk)
    return wp


def _pack_att(a_src, a_dst, heads, fout, fout_pad):
    """[heads*fout_pad, A_COLS]: column h = att_dst_h, column heads+h = att_src_h."""
    A = jnp.zeros((heads * fout_pad, A_COLS), jnp.float32)
    for hd in range(heads):
        A = A.at[hd * fout_pad:hd * fout_pad + fout, hd].set(a_dst[hd])
        A = A.at[hd * fout_pad:hd * fout_pad + fout, heads + hd].set(a_src[hd])
    return A


def _pad_bias(bias, heads, fout, fout_pad):
    bp = jnp.zeros((1, heads * fout_pad), jnp.float32)
    for hd in range(heads):
        bp = bp.at[0, hd * fout_pad:hd * fout_pad + fout].set(
            bias[0, hd * fout:(hd + 1) * fout])
    return bp


def gat_enc_forward(x, edge_index, batch_id, v_mask, params, num_graphs):
    n, f_in = x.shape
    n_pad = _round_up(n, LANE)          # lane-dense adjacency / attention matrices
    f_in_pad = _round_up(f_in, LANE)
    b_pad = _round_up(num_graphs, SUB)

    # ---- glue (plain JAX): pad inputs, dense adjacency, pool selector ----
    x_p = jnp.zeros((n_pad, f_in_pad), jnp.float32).at[:n, :f_in].set(x)

    adj = jnp.zeros((n_pad, n_pad), jnp.float32)
    adj = adj.at[edge_index[1], edge_index[0]].set(1.0)        # message src -> dst
    # add_self_loops=True; also guarantees padded rows are never fully masked.
    adj = jnp.maximum(adj, jnp.eye(n_pad, dtype=jnp.float32))

    any_masked = jnp.any(v_mask)
    valid = jnp.where(any_masked, ~v_mask, jnp.ones_like(v_mask)).astype(jnp.float32)
    onehot = (batch_id[:, None] == jnp.arange(num_graphs)[None, :]).astype(jnp.float32)
    sel_t = jnp.zeros((n_pad, b_pad), jnp.float32).at[:n, :num_graphs].set(
        onehot * valid[:, None])                                # node-major [Np, Bp]

    # ---- pack per-layer parameters into lane-aligned per-head blocks ----
    layer_meta, flat = [], []
    heads_in, fin, fin_pad = 1, f_in, f_in_pad
    for p in params:
        heads, fout = p["heads"], p["f_out"]
        fout_pad = _round_up(fout, LANE)
        assert 2 * heads <= A_COLS
        flat.append(_pad_weight(p["w"], heads_in, fin, fin_pad, heads, fout, fout_pad))
        flat.append(_pack_att(p["a_src"], p["a_dst"], heads, fout, fout_pad))
        flat.append(_pad_bias(p["bias"], heads, fout, fout_pad))
        layer_meta.append((heads, fout, fout_pad))
        heads_in, fin, fin_pad = heads, fout, fout_pad

    last_heads, last_fout, last_fout_pad = layer_meta[-1]
    out_width = last_heads * last_fout_pad

    kernel = functools.partial(gat_enc_kernel,
                               layer_meta=tuple(layer_meta),
                               pool_rows=b_pad)
    pooled_pad = pl.pallas_call(
        kernel,
        out_shape=jax.ShapeDtypeStruct((b_pad, out_width), jnp.float32),
        in_specs=[_VMEM] * (3 + len(flat)),
        out_specs=_VMEM,
        compiler_params=pltpu.CompilerParams(vmem_limit_bytes=32 * 1024 * 1024),
    )(x_p, adj, sel_t, *flat)

    # Strip padding (real feature columns of each head block).
    cols = [pooled_pad[:num_graphs, hd * last_fout_pad:hd * last_fout_pad + last_fout]
            for hd in range(last_heads)]
    return cols[0] if last_heads == 1 else jnp.concatenate(cols, axis=1)


# ---------------------------------------------------------------------------
# Parameter construction (deterministic, synthetic)
# ---------------------------------------------------------------------------
def make_params(key, input_dim, hid_lyrs, z_dim, heads_num):
    e_fs = [input_dim] + list(hid_lyrs) + [z_dim]
    params = []
    for i, (fi_prev, fi) in enumerate(zip(e_fs[:-1], e_fs[1:])):
        if i != 0:
            fi_prev *= heads_num
        heads = heads_num if i != len(e_fs) - 2 else 1
        key, k1, k2, k3 = jax.random.split(key, 4)
        scale = 1.0 / jnp.sqrt(jnp.float32(fi_prev))
        params.append(dict(
            heads=heads,
            f_out=fi,
            w=jax.random.normal(k1, (fi_prev, heads * fi), jnp.float32) * scale,
            a_src=jax.random.normal(k2, (heads, fi), jnp.float32) * 0.1,
            a_dst=jax.random.normal(k3, (heads, fi), jnp.float32) * 0.1,
            bias=jnp.zeros((1, heads * fi), jnp.float32),
        ))
    return params


# ---------------------------------------------------------------------------
# Demo
# ---------------------------------------------------------------------------
if __name__ == "__main__":
    key = jax.random.PRNGKey(0)

    # Small synthetic config (rep_cfg implies input_dim = skel_dim + pose_dim).
    input_dim, hid_lyrs, z_dim, heads_num = 8, [16], 8, 2
    num_graphs, nodes_per_graph = 2, 8
    n = num_graphs * nodes_per_graph                 # 16 nodes total

    key, kx = jax.random.split(key)
    x = jax.random.normal(kx, (n, input_dim), jnp.float32)     # src_graph.src_x

    # Chain graph within each sub-graph, bidirectional edges.
    src, dst = [], []
    for g in range(num_graphs):
        base = g * nodes_per_graph
        for i in range(nodes_per_graph - 1):
            src.append(base + i);     dst.append(base + i + 1)
            src.append(base + i + 1); dst.append(base + i)
    edge_index = jnp.array([src, dst], jnp.int32)              # edge_index_bidirection

    batch_id = jnp.repeat(jnp.arange(num_graphs, dtype=jnp.int32), nodes_per_graph)
    v_mask = jnp.zeros((n,), jnp.bool_).at[jnp.array([3, 11])].set(True)  # src_graph.mask

    params = make_params(key, input_dim, hid_lyrs, z_dim, heads_num)

    pooled = gat_enc_forward(x, edge_index, batch_id, v_mask, params, num_graphs)
    pooled = jax.block_until_ready(pooled)

    assert pooled.shape == (num_graphs, z_dim)
    assert bool(jnp.all(jnp.isfinite(pooled)))
    print("KERNEL_OK")
</pallas_src>

<mosaic_0001>
module attributes {stable_mosaic.version = 11 : i64} {
  func.func @gat_enc_kernel(%arg0: memref<128x128xf32, #tpu.memory_space<vmem>>, %arg1: memref<128x128xf32, #tpu.memory_space<vmem>>, %arg2: memref<128x8xf32, #tpu.memory_space<vmem>>, %arg3: memref<128x256xf32, #tpu.memory_space<vmem>>, %arg4: memref<256x128xf32, #tpu.memory_space<vmem>>, %arg5: memref<1x256xf32, #tpu.memory_space<vmem>>, %arg6: memref<256x128xf32, #tpu.memory_space<vmem>>, %arg7: memref<128x128xf32, #tpu.memory_space<vmem>>, %arg8: memref<1x128xf32, #tpu.memory_space<vmem>>, %arg9: memref<8x128xf32, #tpu.memory_space<vmem>>) attributes {dimension_semantics = [], scalar_prefetch = 0 : i64, scratch_operands = 0 : i64, tpu.core_type = #tpu.core_type<tc>} {
    %c0 = arith.constant 0 : index
    %c0_0 = arith.constant 0 : index
    %0 = vector.load %arg1[%c0, %c0_0] : memref<128x128xf32, #tpu.memory_space<vmem>>, vector<128x128xf32>
    %cst = arith.constant 0.000000e+00 : f32
    %1 = vector.broadcast %cst : f32 to vector<128x128xf32>
    %2 = arith.cmpf ogt, %0, %1 : vector<128x128xf32>
    %c0_1 = arith.constant 0 : index
    %c0_2 = arith.constant 0 : index
    %3 = vector.load %arg0[%c0_1, %c0_2] : memref<128x128xf32, #tpu.memory_space<vmem>>, vector<128x128xf32>
    %c0_3 = arith.constant 0 : index
    %c0_4 = arith.constant 0 : index
    %4 = vector.load %arg3[%c0_3, %c0_4] : memref<128x256xf32, #tpu.memory_space<vmem>>, vector<128x256xf32>
    %5 = arith.truncf %3 : vector<128x128xf32> to vector<128x128xbf16>
    %6 = arith.truncf %4 : vector<128x256xf32> to vector<128x256xbf16>
    %cst_5 = arith.constant dense<0.000000e+00> : vector<128x256xf32>
    %7 = tpu.matmul %5, %6, %cst_5 {dimension_numbers = #tpu.dot_dimension_numbers<[1], [0], [0], [1], [0, 0, 1, 1], [], []>} : vector<128x128xbf16>, vector<128x256xbf16>, vector<128x256xf32> -> vector<128x256xf32>
    %c0_6 = arith.constant 0 : index
    %c0_7 = arith.constant 0 : index
    %8 = vector.load %arg4[%c0_6, %c0_7] : memref<256x128xf32, #tpu.memory_space<vmem>>, vector<256x128xf32>
    %9 = arith.truncf %7 : vector<128x256xf32> to vector<128x256xbf16>
    %10 = arith.truncf %8 : vector<256x128xf32> to vector<256x128xbf16>
    %cst_8 = arith.constant dense<0.000000e+00> : vector<128x128xf32>
    %11 = tpu.matmul %9, %10, %cst_8 {dimension_numbers = #tpu.dot_dimension_numbers<[1], [0], [0], [1], [0, 0, 1, 1], [], []>} : vector<128x256xbf16>, vector<256x128xbf16>, vector<128x128xf32> -> vector<128x128xf32>
    %12 = tpu.transpose %11, [1, 0] : vector<128x128xf32> -> vector<128x128xf32>
    %13 = vector.extract_strided_slice %11 {offsets = [0, 0], sizes = [128, 1], strides = [1, 1]} : vector<128x128xf32> to vector<128x1xf32>
    %14 = vector.extract_strided_slice %12 {offsets = [2, 0], sizes = [1, 128], strides = [1, 1]} : vector<128x128xf32> to vector<1x128xf32>
    %15 = vector.broadcast %13 : vector<128x1xf32> to vector<128x128xf32>
    %16 = vector.broadcast %14 : vector<1x128xf32> to vector<128x128xf32>
    %17 = arith.addf %15, %16 : vector<128x128xf32>
    %cst_9 = arith.constant 0.000000e+00 : f32
    %18 = vector.broadcast %cst_9 : f32 to vector<128x128xf32>
    %19 = arith.cmpf ogt, %17, %18 : vector<128x128xf32>
    %cst_10 = arith.constant 2.000000e-01 : f32
    %20 = vector.broadcast %cst_10 : f32 to vector<128x128xf32>
    %21 = arith.mulf %20, %17 : vector<128x128xf32>
    %22 = arith.select %19, %17, %21 : vector<128x128xi1>, vector<128x128xf32>
    %cst_11 = arith.constant -1.000000e+30 : f32
    %23 = vector.broadcast %cst_11 : f32 to vector<128x128xf32>
    %24 = arith.select %2, %22, %23 : vector<128x128xi1>, vector<128x128xf32>
    %cst_12 = arith.constant dense<0xFF800000> : vector<128xf32>
    %25 = vector.multi_reduction <maximumf>, %24, %cst_12 [1] : vector<128x128xf32> to vector<128xf32>
    %26 = vector.shape_cast %25 : vector<128xf32> to vector<128x1xf32>
    %27 = vector.broadcast %26 : vector<128x1xf32> to vector<128x128xf32>
    %28 = arith.subf %24, %27 : vector<128x128xf32>
    %29 = math.exp %28 : vector<128x128xf32>
    %cst_13 = arith.constant dense<0.000000e+00> : vector<128xf32>
    %30 = vector.multi_reduction <add>, %29, %cst_13 [1] : vector<128x128xf32> to vector<128xf32>
    %31 = vector.shape_cast %30 : vector<128xf32> to vector<128x1xf32>
    %32 = tpu.reciprocal %31 {approx = true} : vector<128x1xf32> -> vector<128x1xf32>
    %33 = vector.broadcast %32 : vector<128x1xf32> to vector<128x128xf32>
    %34 = arith.mulf %29, %33 : vector<128x128xf32>
    %35 = vector.extract_strided_slice %7 {offsets = [0, 0], sizes = [128, 128], strides = [1, 1]} : vector<128x256xf32> to vector<128x128xf32>
    %36 = arith.truncf %34 : vector<128x128xf32> to vector<128x128xbf16>
    %37 = arith.truncf %35 : vector<128x128xf32> to vector<128x128xbf16>
    %cst_14 = arith.constant dense<0.000000e+00> : vector<128x128xf32>
    %38 = tpu.matmul %36, %37, %cst_14 {dimension_numbers = #tpu.dot_dimension_numbers<[1], [0], [0], [1], [0, 0, 1, 1], [], []>} : vector<128x128xbf16>, vector<128x128xbf16>, vector<128x128xf32> -> vector<128x128xf32>
    %39 = vector.extract_strided_slice %11 {offsets = [0, 1], sizes = [128, 1], strides = [1, 1]} : vector<128x128xf32> to vector<128x1xf32>
    %40 = vector.extract_strided_slice %12 {offsets = [3, 0], sizes = [1, 128], strides = [1, 1]} : vector<128x128xf32> to vector<1x128xf32>
    %41 = vector.broadcast %39 : vector<128x1xf32> to vector<128x128xf32>
    %42 = vector.broadcast %40 : vector<1x128xf32> to vector<128x128xf32>
    %43 = arith.addf %41, %42 : vector<128x128xf32>
    %cst_15 = arith.constant 0.000000e+00 : f32
    %44 = vector.broadcast %cst_15 : f32 to vector<128x128xf32>
    %45 = arith.cmpf ogt, %43, %44 : vector<128x128xf32>
    %cst_16 = arith.constant 2.000000e-01 : f32
    %46 = vector.broadcast %cst_16 : f32 to vector<128x128xf32>
    %47 = arith.mulf %46, %43 : vector<128x128xf32>
    %48 = arith.select %45, %43, %47 : vector<128x128xi1>, vector<128x128xf32>
    %cst_17 = arith.constant -1.000000e+30 : f32
    %49 = vector.broadcast %cst_17 : f32 to vector<128x128xf32>
    %50 = arith.select %2, %48, %49 : vector<128x128xi1>, vector<128x128xf32>
    %cst_18 = arith.constant dense<0xFF800000> : vector<128xf32>
    %51 = vector.multi_reduction <maximumf>, %50, %cst_18 [1] : vector<128x128xf32> to vector<128xf32>
    %52 = vector.shape_cast %51 : vector<128xf32> to vector<128x1xf32>
    %53 = vector.broadcast %52 : vector<128x1xf32> to vector<128x128xf32>
    %54 = arith.subf %50, %53 : vector<128x128xf32>
    %55 = math.exp %54 : vector<128x128xf32>
    %cst_19 = arith.constant dense<0.000000e+00> : vector<128xf32>
    %56 = vector.multi_reduction <add>, %55, %cst_19 [1] : vector<128x128xf32> to vector<128xf32>
    %57 = vector.shape_cast %56 : vector<128xf32> to vector<128x1xf32>
    %58 = tpu.reciprocal %57 {approx = true} : vector<128x1xf32> -> vector<128x1xf32>
    %59 = vector.broadcast %58 : vector<128x1xf32> to vector<128x128xf32>
    %60 = arith.mulf %55, %59 : vector<128x128xf32>
    %61 = vector.extract_strided_slice %7 {offsets = [0, 128], sizes = [128, 128], strides = [1, 1]} : vector<128x256xf32> to vector<128x128xf32>
    %62 = arith.truncf %60 : vector<128x128xf32> to vector<128x128xbf16>
    %63 = arith.truncf %61 : vector<128x128xf32> to vector<128x128xbf16>
    %cst_20 = arith.constant dense<0.000000e+00> : vector<128x128xf32>
    %64 = tpu.matmul %62, %63, %cst_20 {dimension_numbers = #tpu.dot_dimension_numbers<[1], [0], [0], [1], [0, 0, 1, 1], [], []>} : vector<128x128xbf16>, vector<128x128xbf16>, vector<128x128xf32> -> vector<128x128xf32>
    %65 = tpu.concatenate %38, %64 in 1 : vector<128x128xf32>, vector<128x128xf32> -> vector<128x256xf32>
    %c0_21 = arith.constant 0 : index
    %c0_22 = arith.constant 0 : index
    %66 = vector.load %arg5[%c0_21, %c0_22] : memref<1x256xf32, #tpu.memory_space<vmem>>, vector<1x256xf32>
    %67 = vector.broadcast %66 : vector<1x256xf32> to vector<128x256xf32>
    %68 = arith.addf %65, %67 : vector<128x256xf32>
    %cst_23 = arith.constant 0.000000e+00 : f32
    %69 = vector.broadcast %cst_23 : f32 to vector<128x256xf32>
    %70 = arith.maximumf %68, %69 : vector<128x256xf32>
    %c0_24 = arith.constant 0 : index
    %c0_25 = arith.constant 0 : index
    %71 = vector.load %arg6[%c0_24, %c0_25] : memref<256x128xf32, #tpu.memory_space<vmem>>, vector<256x128xf32>
    %72 = arith.truncf %70 : vector<128x256xf32> to vector<128x256xbf16>
    %73 = arith.truncf %71 : vector<256x128xf32> to vector<256x128xbf16>
    %cst_26 = arith.constant dense<0.000000e+00> : vector<128x128xf32>
    %74 = tpu.matmul %72, %73, %cst_26 {dimension_numbers = #tpu.dot_dimension_numbers<[1], [0], [0], [1], [0, 0, 1, 1], [], []>} : vector<128x256xbf16>, vector<256x128xbf16>, vector<128x128xf32> -> vector<128x128xf32>
    %c0_27 = arith.constant 0 : index
    %c0_28 = arith.constant 0 : index
    %75 = vector.load %arg7[%c0_27, %c0_28] : memref<128x128xf32, #tpu.memory_space<vmem>>, vector<128x128xf32>
    %76 = arith.truncf %74 : vector<128x128xf32> to vector<128x128xbf16>
    %77 = arith.truncf %75 : vector<128x128xf32> to vector<128x128xbf16>
    %cst_29 = arith.constant dense<0.000000e+00> : vector<128x128xf32>
    %78 = tpu.matmul %76, %77, %cst_29 {dimension_numbers = #tpu.dot_dimension_numbers<[1], [0], [0], [1], [0, 0, 1, 1], [], []>} : vector<128x128xbf16>, vector<128x128xbf16>, vector<128x128xf32> -> vector<128x128xf32>
    %79 = tpu.transpose %78, [1, 0] : vector<128x128xf32> -> vector<128x128xf32>
    %80 = vector.extract_strided_slice %78 {offsets = [0, 0], sizes = [128, 1], strides = [1, 1]} : vector<128x128xf32> to vector<128x1xf32>
    %81 = vector.extract_strided_slice %79 {offsets = [1, 0], sizes = [1, 128], strides = [1, 1]} : vector<128x128xf32> to vector<1x128xf32>
    %82 = vector.broadcast %80 : vector<128x1xf32> to vector<128x128xf32>
    %83 = vector.broadcast %81 : vector<1x128xf32> to vector<128x128xf32>
    %84 = arith.addf %82, %83 : vector<128x128xf32>
    %cst_30 = arith.constant 0.000000e+00 : f32
    %85 = vector.broadcast %cst_30 : f32 to vector<128x128xf32>
    %86 = arith.cmpf ogt, %84, %85 : vector<128x128xf32>
    %cst_31 = arith.constant 2.000000e-01 : f32
    %87 = vector.broadcast %cst_31 : f32 to vector<128x128xf32>
    %88 = arith.mulf %87, %84 : vector<128x128xf32>
    %89 = arith.select %86, %84, %88 : vector<128x128xi1>, vector<128x128xf32>
    %cst_32 = arith.constant -1.000000e+30 : f32
    %90 = vector.broadcast %cst_32 : f32 to vector<128x128xf32>
    %91 = arith.select %2, %89, %90 : vector<128x128xi1>, vector<128x128xf32>
    %cst_33 = arith.constant dense<0xFF800000> : vector<128xf32>
    %92 = vector.multi_reduction <maximumf>, %91, %cst_33 [1] : vector<128x128xf32> to vector<128xf32>
    %93 = vector.shape_cast %92 : vector<128xf32> to vector<128x1xf32>
    %94 = vector.broadcast %93 : vector<128x1xf32> to vector<128x128xf32>
    %95 = arith.subf %91, %94 : vector<128x128xf32>
    %96 = math.exp %95 : vector<128x128xf32>
    %cst_34 = arith.constant dense<0.000000e+00> : vector<128xf32>
    %97 = vector.multi_reduction <add>, %96, %cst_34 [1] : vector<128x128xf32> to vector<128xf32>
    %98 = vector.shape_cast %97 : vector<128xf32> to vector<128x1xf32>
    %99 = tpu.reciprocal %98 {approx = true} : vector<128x1xf32> -> vector<128x1xf32>
    %100 = vector.broadcast %99 : vector<128x1xf32> to vector<128x128xf32>
    %101 = arith.mulf %96, %100 : vector<128x128xf32>
    %102 = arith.truncf %101 : vector<128x128xf32> to vector<128x128xbf16>
    %103 = arith.truncf %74 : vector<128x128xf32> to vector<128x128xbf16>
    %cst_35 = arith.constant dense<0.000000e+00> : vector<128x128xf32>
    %104 = tpu.matmul %102, %103, %cst_35 {dimension_numbers = #tpu.dot_dimension_numbers<[1], [0], [0], [1], [0, 0, 1, 1], [], []>} : vector<128x128xbf16>, vector<128x128xbf16>, vector<128x128xf32> -> vector<128x128xf32>
    %c0_36 = arith.constant 0 : index
    %c0_37 = arith.constant 0 : index
    %105 = vector.load %arg8[%c0_36, %c0_37] : memref<1x128xf32, #tpu.memory_space<vmem>>, vector<1x128xf32>
    %106 = vector.broadcast %105 : vector<1x128xf32> to vector<128x128xf32>
    %107 = arith.addf %104, %106 : vector<128x128xf32>
    %c0_38 = arith.constant 0 : index
    %c0_39 = arith.constant 0 : index
    %108 = vector.load %arg2[%c0_38, %c0_39] : memref<128x8xf32, #tpu.memory_space<vmem>>, vector<128x8xf32>
    %109 = vector.extract_strided_slice %108 {offsets = [0, 0], sizes = [128, 1], strides = [1, 1]} : vector<128x8xf32> to vector<128x1xf32>
    %cst_40 = arith.constant 0.000000e+00 : f32
    %110 = vector.broadcast %cst_40 : f32 to vector<128x1xf32>
    %111 = arith.cmpf ogt, %109, %110 : vector<128x1xf32>
    %cst_41 = arith.constant -1.000000e+30 : f32
    %112 = vector.shape_cast %111 : vector<128x1xi1> to vector<128x1xi1>
    %113 = vector.broadcast %112 : vector<128x1xi1> to vector<128x128xi1>
    %114 = vector.broadcast %cst_41 : f32 to vector<128x128xf32>
    %115 = arith.select %113, %107, %114 : vector<128x128xi1>, vector<128x128xf32>
    %cst_42 = arith.constant dense<0xFF800000> : vector<128xf32>
    %116 = vector.multi_reduction <maximumf>, %115, %cst_42 [0] : vector<128x128xf32> to vector<128xf32>
    %117 = vector.shape_cast %116 : vector<128xf32> to vector<1x128xf32>
    %118 = vector.extract_strided_slice %108 {offsets = [0, 1], sizes = [128, 1], strides = [1, 1]} : vector<128x8xf32> to vector<128x1xf32>
    %cst_43 = arith.constant 0.000000e+00 : f32
    %119 = vector.broadcast %cst_43 : f32 to vector<128x1xf32>
    %120 = arith.cmpf ogt, %118, %119 : vector<128x1xf32>
    %cst_44 = arith.constant -1.000000e+30 : f32
    %121 = vector.shape_cast %120 : vector<128x1xi1> to vector<128x1xi1>
    %122 = vector.broadcast %121 : vector<128x1xi1> to vector<128x128xi1>
    %123 = vector.broadcast %cst_44 : f32 to vector<128x128xf32>
    %124 = arith.select %122, %107, %123 : vector<128x128xi1>, vector<128x128xf32>
    %cst_45 = arith.constant dense<0xFF800000> : vector<128xf32>
    %125 = vector.multi_reduction <maximumf>, %124, %cst_45 [0] : vector<128x128xf32> to vector<128xf32>
    %126 = vector.shape_cast %125 : vector<128xf32> to vector<1x128xf32>
    %127 = vector.extract_strided_slice %108 {offsets = [0, 2], sizes = [128, 1], strides = [1, 1]} : vector<128x8xf32> to vector<128x1xf32>
    %cst_46 = arith.constant 0.000000e+00 : f32
    %128 = vector.broadcast %cst_46 : f32 to vector<128x1xf32>
    %129 = arith.cmpf ogt, %127, %128 : vector<128x1xf32>
    %cst_47 = arith.constant -1.000000e+30 : f32
    %130 = vector.shape_cast %129 : vector<128x1xi1> to vector<128x1xi1>
    %131 = vector.broadcast %130 : vector<128x1xi1> to vector<128x128xi1>
    %132 = vector.broadcast %cst_47 : f32 to vector<128x128xf32>
    %133 = arith.select %131, %107, %132 : vector<128x128xi1>, vector<128x128xf32>
    %cst_48 = arith.constant dense<0xFF800000> : vector<128xf32>
    %134 = vector.multi_reduction <maximumf>, %133, %cst_48 [0] : vector<128x128xf32> to vector<128xf32>
    %135 = vector.shape_cast %134 : vector<128xf32> to vector<1x128xf32>
    %136 = vector.extract_strided_slice %108 {offsets = [0, 3], sizes = [128, 1], strides = [1, 1]} : vector<128x8xf32> to vector<128x1xf32>
    %cst_49 = arith.constant 0.000000e+00 : f32
    %137 = vector.broadcast %cst_49 : f32 to vector<128x1xf32>
    %138 = arith.cmpf ogt, %136, %137 : vector<128x1xf32>
    %cst_50 = arith.constant -1.000000e+30 : f32
    %139 = vector.shape_cast %138 : vector<128x1xi1> to vector<128x1xi1>
    %140 = vector.broadcast %139 : vector<128x1xi1> to vector<128x128xi1>
    %141 = vector.broadcast %cst_50 : f32 to vector<128x128xf32>
    %142 = arith.select %140, %107, %141 : vector<128x128xi1>, vector<128x128xf32>
    %cst_51 = arith.constant dense<0xFF800000> : vector<128xf32>
    %143 = vector.multi_reduction <maximumf>, %142, %cst_51 [0] : vector<128x128xf32> to vector<128xf32>
    %144 = vector.shape_cast %143 : vector<128xf32> to vector<1x128xf32>
    %145 = vector.extract_strided_slice %108 {offsets = [0, 4], sizes = [128, 1], strides = [1, 1]} : vector<128x8xf32> to vector<128x1xf32>
    %cst_52 = arith.constant 0.000000e+00 : f32
    %146 = vector.broadcast %cst_52 : f32 to vector<128x1xf32>
    %147 = arith.cmpf ogt, %145, %146 : vector<128x1xf32>
    %cst_53 = arith.constant -1.000000e+30 : f32
    %148 = vector.shape_cast %147 : vector<128x1xi1> to vector<128x1xi1>
    %149 = vector.broadcast %148 : vector<128x1xi1> to vector<128x128xi1>
    %150 = vector.broadcast %cst_53 : f32 to vector<128x128xf32>
    %151 = arith.select %149, %107, %150 : vector<128x128xi1>, vector<128x128xf32>
    %cst_54 = arith.constant dense<0xFF800000> : vector<128xf32>
    %152 = vector.multi_reduction <maximumf>, %151, %cst_54 [0] : vector<128x128xf32> to vector<128xf32>
    %153 = vector.shape_cast %152 : vector<128xf32> to vector<1x128xf32>
    %154 = vector.extract_strided_slice %108 {offsets = [0, 5], sizes = [128, 1], strides = [1, 1]} : vector<128x8xf32> to vector<128x1xf32>
    %cst_55 = arith.constant 0.000000e+00 : f32
    %155 = vector.broadcast %cst_55 : f32 to vector<128x1xf32>
    %156 = arith.cmpf ogt, %154, %155 : vector<128x1xf32>
    %cst_56 = arith.constant -1.000000e+30 : f32
    %157 = vector.shape_cast %156 : vector<128x1xi1> to vector<128x1xi1>
    %158 = vector.broadcast %157 : vector<128x1xi1> to vector<128x128xi1>
    %159 = vector.broadcast %cst_56 : f32 to vector<128x128xf32>
    %160 = arith.select %158, %107, %159 : vector<128x128xi1>, vector<128x128xf32>
    %cst_57 = arith.constant dense<0xFF800000> : vector<128xf32>
    %161 = vector.multi_reduction <maximumf>, %160, %cst_57 [0] : vector<128x128xf32> to vector<128xf32>
    %162 = vector.shape_cast %161 : vector<128xf32> to vector<1x128xf32>
    %163 = vector.extract_strided_slice %108 {offsets = [0, 6], sizes = [128, 1], strides = [1, 1]} : vector<128x8xf32> to vector<128x1xf32>
    %cst_58 = arith.constant 0.000000e+00 : f32
    %164 = vector.broadcast %cst_58 : f32 to vector<128x1xf32>
    %165 = arith.cmpf ogt, %163, %164 : vector<128x1xf32>
    %cst_59 = arith.constant -1.000000e+30 : f32
    %166 = vector.shape_cast %165 : vector<128x1xi1> to vector<128x1xi1>
    %167 = vector.broadcast %166 : vector<128x1xi1> to vector<128x128xi1>
    %168 = vector.broadcast %cst_59 : f32 to vector<128x128xf32>
    %169 = arith.select %167, %107, %168 : vector<128x128xi1>, vector<128x128xf32>
    %cst_60 = arith.constant dense<0xFF800000> : vector<128xf32>
    %170 = vector.multi_reduction <maximumf>, %169, %cst_60 [0] : vector<128x128xf32> to vector<128xf32>
    %171 = vector.shape_cast %170 : vector<128xf32> to vector<1x128xf32>
    %172 = vector.extract_strided_slice %108 {offsets = [0, 7], sizes = [128, 1], strides = [1, 1]} : vector<128x8xf32> to vector<128x1xf32>
    %cst_61 = arith.constant 0.000000e+00 : f32
    %173 = vector.broadcast %cst_61 : f32 to vector<128x1xf32>
    %174 = arith.cmpf ogt, %172, %173 : vector<128x1xf32>
    %cst_62 = arith.constant -1.000000e+30 : f32
    %175 = vector.shape_cast %174 : vector<128x1xi1> to vector<128x1xi1>
    %176 = vector.broadcast %175 : vector<128x1xi1> to vector<128x128xi1>
    %177 = vector.broadcast %cst_62 : f32 to vector<128x128xf32>
    %178 = arith.select %176, %107, %177 : vector<128x128xi1>, vector<128x128xf32>
    %cst_63 = arith.constant dense<0xFF800000> : vector<128xf32>
    %179 = vector.multi_reduction <maximumf>, %178, %cst_63 [0] : vector<128x128xf32> to vector<128xf32>
    %180 = vector.shape_cast %179 : vector<128xf32> to vector<1x128xf32>
    %181 = tpu.concatenate %117, %126, %135, %144, %153, %162, %171, %180 in 0 : vector<1x128xf32>, vector<1x128xf32>, vector<1x128xf32>, vector<1x128xf32>, vector<1x128xf32>, vector<1x128xf32>, vector<1x128xf32>, vector<1x128xf32> -> vector<8x128xf32>
    %c0_64 = arith.constant 0 : index
    %c0_65 = arith.constant 0 : index
    %182 = vector.load %arg9[%c0_64, %c0_65] : memref<8x128xf32, #tpu.memory_space<vmem>>, vector<8x128xf32>
    tpu.vector_store %arg9[%c0_64, %c0_65], %181 {strides = array<i32>} : memref<8x128xf32, #tpu.memory_space<vmem>>, vector<8x128xf32>,
    return
  }
}

</mosaic_0001>

<llo_original>
// kernel: tpu_custom_call.1
$region0: #{tpu_custom_call.1}
  #allocation0 [shape = 'u32[]', space=smem, size = 0x4, offset = 0x4, fixed_abs, tag = 'smem constant byte address 0x4 - core index']
  #allocation1 [shape = 'u32[144,128]{1,0:T(1,128)}', space=vmem, size = 0x12000, scoped, tag = 'internal scratch']
  %s0 = inlined_call_operand.vmem [shape: f32[128,128], index: 0, kind: input, shape index: {}]
  %s1 = inlined_call_operand.hbm [shape: f32[128,128], index: 1, kind: input, shape index: {}]
  %s2 = inlined_call_operand.vmem [shape: f32[128,8], index: 2, kind: input, shape index: {}]
  %s3 = inlined_call_operand.hbm [shape: f32[128,256], index: 3, kind: input, shape index: {}]
  %s4 = inlined_call_operand.hbm [shape: f32[256,128], index: 4, kind: input, shape index: {}]
  %s5 = inlined_call_operand.vmem [shape: f32[1,256], index: 5, kind: input, shape index: {}]
  %s6 = inlined_call_operand.hbm [shape: f32[256,128], index: 6, kind: input, shape index: {}]
  %s7 = inlined_call_operand.hbm [shape: f32[128,128], index: 7, kind: input, shape index: {}]
  %s8 = inlined_call_operand.vmem [shape: f32[1,128], index: 8, kind: input, shape index: {}]
  %s9 = inlined_call_operand.hbm [shape: f32[8,128], index: 9, kind: output, shape index: {}]
  %s10 = sld [smem:[#allocation0]]
  $region66: #{tpu_custom_call.1} parent=0
    _
  %s12 = ssub.s32 1, %s10
  %s13 = scalar_select 0, %s12, %s10
  $region1: #{tpu_custom_call.1} parent=0
    #allocation2 [shape = 'u8[65536]{0}', space=vmem, size = 0x10000, scoped, tag = 'input window, operand 1, single buffered']
    #allocation3 [shape = 's32[1]{0}', space=sflag, size = 0x4, scoped, tag = 'scoped memory for tpu_custom_call.1']
    #allocation4 [shape = 's32[1]{0}', space=sflag, size = 0x4, scoped, tag = 'scoped memory for tpu_custom_call.1']
    #allocation5 [shape = 'u8[131072]{0}', space=vmem, size = 0x20000, scoped, tag = 'input window, operand 3, single buffered']
    #allocation6 [shape = 's32[1]{0}', space=sflag, size = 0x4, scoped, tag = 'scoped memory for tpu_custom_call.1']
    #allocation7 [shape = 'u8[131072]{0}', space=vmem, size = 0x20000, scoped, tag = 'input window, operand 4, single buffered']
    #allocation8 [shape = 'u8[131072]{0}', space=vmem, size = 0x20000, scoped, tag = 'input window, operand 6, single buffered']
    #allocation9 [shape = 's32[1]{0}', space=sflag, size = 0x4, scoped, tag = 'scoped memory for tpu_custom_call.1']
    #allocation10 [shape = 'u8[65536]{0}', space=vmem, size = 0x10000, scoped, tag = 'input window, operand 7, single buffered']
    #allocation11 [shape = 'u8[4096]{0}', space=vmem, size = 0x1000, scoped, tag = 'output window, operand 0, single buffered']
    %14 = vsyncpa [#allocation3], 0
    %15 = vsyncpa [#allocation6], 0
    %16 = vsyncpa [#allocation9], 0
    %17 = vsyncpa [#allocation4], 0
    // Predicated region
    $region2: #{tpu_custom_call.1} parent=1 // pred_check
      _
    $region3: #{tpu_custom_call.1} parent=1 // pred_check_branch
      %19 = sbr.rel (0) target = $region5
    $region4: #{tpu_custom_call.1} parent=1 // pred_region
      _
    $region5: #{tpu_custom_call.1} parent=1 // pred_fallthru
      _
    // Predicated region
    $region6: #{tpu_custom_call.1} parent=1 // pred_check
      _
    $region7: #{tpu_custom_call.1} parent=1 // pred_check_branch
      %21 = sbr.rel (0) target = $region9
    $region8: #{tpu_custom_call.1} parent=1 // pred_region
      %s23 = ssub.s32 2048, 2048
      %24 = vsyncadd [#allocation3], %s23
      %s25 = sshll.u32 [#allocation2], 4
      %s26 = int_to_ptr.vmem [resolvable:$true] %s25
      %31 = dma.hbm_to_vmem [thread:$0]  %s1, 2048, %s26, [#allocation3], 128, 128, 8
    $region9: #{tpu_custom_call.1} parent=1 // pred_fallthru
      _
    // Predicated region
    $region10: #{tpu_custom_call.1} parent=1 // pred_check
      _
    $region11: #{tpu_custom_call.1} parent=1 // pred_check_branch
      %33 = sbr.rel (0) target = $region13
    $region12: #{tpu_custom_call.1} parent=1 // pred_region
      _
    $region13: #{tpu_custom_call.1} parent=1 // pred_fallthru
      _
    // Predicated region
    $region14: #{tpu_custom_call.1} parent=1 // pred_check
      _
    $region15: #{tpu_custom_call.1} parent=1 // pred_check_branch
      %35 = sbr.rel (0) target = $region17
    $region16: #{tpu_custom_call.1} parent=1 // pred_region
      %s37 = ssub.s32 4096, 4096
      %38 = vsyncadd [#allocation6], %s37
      %s39 = sshll.u32 [#allocation5], 4
      %s40 = int_to_ptr.vmem [resolvable:$true] %s39
      %45 = dma.hbm_to_vmem [thread:$0]  %s3, 4096, %s40, [#allocation6], 256, 256, 16
    $region17: #{tpu_custom_call.1} parent=1 // pred_fallthru
      _
    // Predicated region
    $region18: #{tpu_custom_call.1} parent=1 // pred_check
      _
    $region19: #{tpu_custom_call.1} parent=1 // pred_check_branch
      %47 = sbr.rel (0) target = $region21
    $region20: #{tpu_custom_call.1} parent=1 // pred_region
      %s49 = ssub.s32 4096, 4096
      %50 = vsyncadd [#allocation6], %s49
      %s51 = sshll.u32 [#allocation7], 4
      %s52 = int_to_ptr.vmem [resolvable:$true] %s51
      %57 = dma.hbm_to_vmem [thread:$0]  %s4, 4096, %s52, [#allocation6], 128, 128, 8
    $region21: #{tpu_custom_call.1} parent=1 // pred_fallthru
      _
    // Predicated region
    $region22: #{tpu_custom_call.1} parent=1 // pred_check
      _
    $region23: #{tpu_custom_call.1} parent=1 // pred_check_branch
      %59 = sbr.rel (0) target = $region25
    $region24: #{tpu_custom_call.1} parent=1 // pred_region
      _
    $region25: #{tpu_custom_call.1} parent=1 // pred_fallthru
      _
    // Predicated region
    $region26: #{tpu_custom_call.1} parent=1 // pred_check
      _
    $region27: #{tpu_custom_call.1} parent=1 // pred_check_branch
      %61 = sbr.rel (0) target = $region29
    $region28: #{tpu_custom_call.1} parent=1 // pred_region
      %s63 = ssub.s32 4096, 4096
      %64 = vsyncadd [#allocation9], %s63
      %s65 = sshll.u32 [#allocation8], 4
      %s66 = int_to_ptr.vmem [resolvable:$true] %s65
      %71 = dma.hbm_to_vmem [thread:$0]  %s6, 4096, %s66, [#allocation9], 128, 128, 8
    $region29: #{tpu_custom_call.1} parent=1 // pred_fallthru
      _
    // Predicated region
    $region30: #{tpu_custom_call.1} parent=1 // pred_check
      _
    $region31: #{tpu_custom_call.1} parent=1 // pred_check_branch
      %73 = sbr.rel (0) target = $region33
    $region32: #{tpu_custom_call.1} parent=1 // pred_region
      %s75 = ssub.s32 2048, 2048
      %76 = vsyncadd [#allocation9], %s75
      %s77 = sshll.u32 [#allocation10], 4
      %s78 = int_to_ptr.vmem [resolvable:$true] %s77
      %83 = dma.hbm_to_vmem [thread:$0]  %s7, 2048, %s78, [#allocation9], 128, 128, 8
    $region33: #{tpu_custom_call.1} parent=1 // pred_fallthru
      _
    // Predicated region
    $region34: #{tpu_custom_call.1} parent=1 // pred_check
      _
    $region35: #{tpu_custom_call.1} parent=1 // pred_check_branch
      %85 = sbr.rel (0) target = $region37
    $region36: #{tpu_custom_call.1} parent=1 // pred_region
      _
    $region37: #{tpu_custom_call.1} parent=1 // pred_fallthru
      _
    // Predicated region
    $region38: #{tpu_custom_call.1} parent=1 // pred_check
      _
    $region39: #{tpu_custom_call.1} parent=1 // pred_check_branch
      %87 = sbr.rel (0) target = $region41
    $region40: #{tpu_custom_call.1} parent=1 // pred_region
      %88 = dma.done [#allocation3], 2048
    $region41: #{tpu_custom_call.1} parent=1 // pred_fallthru
      _
    // Predicated region
    $region42: #{tpu_custom_call.1} parent=1 // pred_check
      _
    $region43: #{tpu_custom_call.1} parent=1 // pred_check_branch
      %90 = sbr.rel (0) target = $region45
    $region44: #{tpu_custom_call.1} parent=1 // pred_region
      %91 = dma.done [#allocation6], 4096
    $region45: #{tpu_custom_call.1} parent=1 // pred_fallthru
      _
    // Predicated region
    $region46: #{tpu_custom_call.1} parent=1 // pred_check
      _
    $region47: #{tpu_custom_call.1} parent=1 // pred_check_branch
      %93 = sbr.rel (0) target = $region49
    $region48: #{tpu_custom_call.1} parent=1 // pred_region
      %94 = dma.done [#allocation6], 4096
    $region49: #{tpu_custom_call.1} parent=1 // pred_fallthru
      _
    // Predicated region
    $region50: #{tpu_custom_call.1} parent=1 // pred_check
      _
    $region51: #{tpu_custom_call.1} parent=1 // pred_check_branch
      %96 = sbr.rel (0) target = $region53
    $region52: #{tpu_custom_call.1} parent=1 // pred_region
      %97 = dma.done [#allocation9], 4096
    $region53: #{tpu_custom_call.1} parent=1 // pred_fallthru
      _
    // Predicated region
    $region54: #{tpu_custom_call.1} parent=1 // pred_check
      _
    $region55: #{tpu_custom_call.1} parent=1 // pred_check_branch
      %99 = sbr.rel (0) target = $region57
    $region56: #{tpu_custom_call.1} parent=1 // pred_region
      %100 = dma.done [#allocation9], 2048
    $region57: #{tpu_custom_call.1} parent=1 // pred_fallthru
      _
    %v102 = vld [vmem:[#allocation2] sm:$0xff]
    %v103 = vld [vmem:[#allocation2 + $0x8] sm:$0xff]
    %v104 = vld [vmem:[#allocation2 + $0x10] sm:$0xff]
    %v105 = vld [vmem:[#allocation2 + $0x18] sm:$0xff]
    %v106 = vld [vmem:[#allocation2 + $0x20] sm:$0xff]
    %v107 = vld [vmem:[#allocation2 + $0x28] sm:$0xff]
    %v108 = vld [vmem:[#allocation2 + $0x30] sm:$0xff]
    %v109 = vld [vmem:[#allocation2 + $0x38] sm:$0xff]
    %v110 = vld [vmem:[#allocation2 + $0x40] sm:$0xff]
    %v111 = vld [vmem:[#allocation2 + $0x48] sm:$0xff]
    %v112 = vld [vmem:[#allocation2 + $0x50] sm:$0xff]
    %v113 = vld [vmem:[#allocation2 + $0x58] sm:$0xff]
    %v114 = vld [vmem:[#allocation2 + $0x60] sm:$0xff]
    %v115 = vld [vmem:[#allocation2 + $0x68] sm:$0xff]
    %v116 = vld [vmem:[#allocation2 + $0x70] sm:$0xff]
    %v117 = vld [vmem:[#allocation2 + $0x78] sm:$0xff]
    %vm118 = vcmp.gt.f32.partialorder %v102, 0.0
    %vm119 = vcmp.gt.f32.partialorder %v103, 0.0
    %vm120 = vcmp.gt.f32.partialorder %v104, 0.0
    %vm121 = vcmp.gt.f32.partialorder %v105, 0.0
    %vm122 = vcmp.gt.f32.partialorder %v106, 0.0
    %vm123 = vcmp.gt.f32.partialorder %v107, 0.0
    %vm124 = vcmp.gt.f32.partialorder %v108, 0.0
    %vm125 = vcmp.gt.f32.partialorder %v109, 0.0
    %vm126 = vcmp.gt.f32.partialorder %v110, 0.0
    %vm127 = vcmp.gt.f32.partialorder %v111, 0.0
    %vm128 = vcmp.gt.f32.partialorder %v112, 0.0
    %vm129 = vcmp.gt.f32.partialorder %v113, 0.0
    %vm130 = vcmp.gt.f32.partialorder %v114, 0.0
    %vm131 = vcmp.gt.f32.partialorder %v115, 0.0
    %vm132 = vcmp.gt.f32.partialorder %v116, 0.0
    %vm133 = vcmp.gt.f32.partialorder %v117, 0.0
    %v134 = vld [vmem:[%s0] sm:$0xff]
    %v135 = vld [vmem:[%s0 + $0x8] sm:$0xff]
    %v136 = vld [vmem:[%s0 + $0x10] sm:$0xff]
    %v137 = vld [vmem:[%s0 + $0x18] sm:$0xff]
    %v138 = vld [vmem:[%s0 + $0x20] sm:$0xff]
    %v139 = vld [vmem:[%s0 + $0x28] sm:$0xff]
    %v140 = vld [vmem:[%s0 + $0x30] sm:$0xff]
    %v141 = vld [vmem:[%s0 + $0x38] sm:$0xff]
    %v142 = vld [vmem:[%s0 + $0x40] sm:$0xff]
    %v143 = vld [vmem:[%s0 + $0x48] sm:$0xff]
    %v144 = vld [vmem:[%s0 + $0x50] sm:$0xff]
    %v145 = vld [vmem:[%s0 + $0x58] sm:$0xff]
    %v146 = vld [vmem:[%s0 + $0x60] sm:$0xff]
    %v147 = vld [vmem:[%s0 + $0x68] sm:$0xff]
    %v148 = vld [vmem:[%s0 + $0x70] sm:$0xff]
    %v149 = vld [vmem:[%s0 + $0x78] sm:$0xff]
    %v150 = vld [vmem:[#allocation5] sm:$0xff]
    %v151 = vld [vmem:[#allocation5 + $0x8] sm:$0xff]
    %v152 = vld [vmem:[#allocation5 + $0x10] sm:$0xff]
    %v153 = vld [vmem:[#allocation5 + $0x18] sm:$0xff]
    %v154 = vld [vmem:[#allocation5 + $0x20] sm:$0xff]
    %v155 = vld [vmem:[#allocation5 + $0x28] sm:$0xff]
    %v156 = vld [vmem:[#allocation5 + $0x30] sm:$0xff]
    %v157 = vld [vmem:[#allocation5 + $0x38] sm:$0xff]
    %v158 = vld [vmem:[#allocation5 + $0x40] sm:$0xff]
    %v159 = vld [vmem:[#allocation5 + $0x48] sm:$0xff]
    %v160 = vld [vmem:[#allocation5 + $0x50] sm:$0xff]
    %v161 = vld [vmem:[#allocation5 + $0x58] sm:$0xff]
    %v162 = vld [vmem:[#allocation5 + $0x60] sm:$0xff]
    %v163 = vld [vmem:[#allocation5 + $0x68] sm:$0xff]
    %v164 = vld [vmem:[#allocation5 + $0x70] sm:$0xff]
    %v165 = vld [vmem:[#allocation5 + $0x78] sm:$0xff]
    %v166 = vld [vmem:[#allocation5 + $0x80] sm:$0xff]
    %v167 = vld [vmem:[#allocation5 + $0x88] sm:$0xff]
    %v168 = vld [vmem:[#allocation5 + $0x90] sm:$0xff]
    %v169 = vld [vmem:[#allocation5 + $0x98] sm:$0xff]
    %v170 = vld [vmem:[#allocation5 + $0xa0] sm:$0xff]
    %v171 = vld [vmem:[#allocation5 + $0xa8] sm:$0xff]
    %v172 = vld [vmem:[#allocation5 + $0xb0] sm:$0xff]
    %v173 = vld [vmem:[#allocation5 + $0xb8] sm:$0xff]
    %v174 = vld [vmem:[#allocation5 + $0xc0] sm:$0xff]
    %v175 = vld [vmem:[#allocation5 + $0xc8] sm:$0xff]
    %v176 = vld [vmem:[#allocation5 + $0xd0] sm:$0xff]
    %v177 = vld [vmem:[#allocation5 + $0xd8] sm:$0xff]
    %v178 = vld [vmem:[#allocation5 + $0xe0] sm:$0xff]
    %v179 = vld [vmem:[#allocation5 + $0xe8] sm:$0xff]
    %v180 = vld [vmem:[#allocation5 + $0xf0] sm:$0xff]
    %v181 = vld [vmem:[#allocation5 + $0xf8] sm:$0xff]
    %v182 = vpack.c.bf16 %v135, %v134
    %v183 = vpack.c.bf16 %v137, %v136
    %v184 = vpack.c.bf16 %v139, %v138
    %v185 = vpack.c.bf16 %v141, %v140
    %v186 = vpack.c.bf16 %v143, %v142
    %v187 = vpack.c.bf16 %v145, %v144
    %v188 = vpack.c.bf16 %v147, %v146
    %v189 = vpack.c.bf16 %v149, %v148
    %v190 = vpack.c.bf16 %v152, %v150
    %v191 = vpack.c.bf16 %v153, %v151
    %v192 = vpack.c.bf16 %v156, %v154
    %v193 = vpack.c.bf16 %v157, %v155
    %v194 = vpack.c.bf16 %v160, %v158
    %v195 = vpack.c.bf16 %v161, %v159
    %v196 = vpack.c.bf16 %v164, %v162
    %v197 = vpack.c.bf16 %v165, %v163
    %v198 = vpack.c.bf16 %v168, %v166
    %v199 = vpack.c.bf16 %v169, %v167
    %v200 = vpack.c.bf16 %v172, %v170
    %v201 = vpack.c.bf16 %v173, %v171
    %v202 = vpack.c.bf16 %v176, %v174
    %v203 = vpack.c.bf16 %v177, %v175
    %v204 = vpack.c.bf16 %v180, %v178
    %v205 = vpack.c.bf16 %v181, %v179
    %206 = vmatprep.subr.bf16.mxu0 %v191
    %207 = vmatpush1.bf16.msra.mxu0 %v190
    %208 = vmatprep.subr.bf16.mxu0 %v193
    %209 = vmatpush1.bf16.msra.mxu0 %v192
    %210 = vmatprep.subr.bf16.mxu0 %v195
    %211 = vmatpush1.bf16.msra.mxu0 %v194
    %212 = vmatprep.subr.bf16.mxu0 %v197
    %213 = vmatpush1.bf16.msra.mxu0 %v196
    %214 = vmatprep.subr.bf16.mxu0 %v199
    %215 = vmatpush1.bf16.msra.mxu0 %v198
    %216 = vmatprep.subr.bf16.mxu0 %v201
    %217 = vmatpush1.bf16.msra.mxu0 %v200
    %218 = vmatprep.subr.bf16.mxu0 %v203
    %219 = vmatpush1.bf16.msra.mxu0 %v202
    %220 = vmatprep.subr.bf16.mxu0 %v205
    %221 = vmatpush1.bf16.msra.mxu0 %v204
    %222 = vmatprep.subr.bf16.mxu0 0
    %223 = vmatpush1.bf16.msra.mxu0 0
    %224 = vmatprep.subr.bf16.mxu0 0
    %225 = vmatpush1.bf16.msra.mxu0 0
    %226 = vmatprep.subr.bf16.mxu0 0
    %227 = vmatpush1.bf16.msra.mxu0 0
    %228 = vmatprep.subr.bf16.mxu0 0
    %229 = vmatpush1.bf16.msra.mxu0 0
    %230 = vmatprep.subr.bf16.mxu0 0
    %231 = vmatpush1.bf16.msra.mxu0 0
    %232 = vmatprep.subr.bf16.mxu0 0
    %233 = vmatpush1.bf16.msra.mxu0 0
    %234 = vmatprep.subr.bf16.mxu0 0
    %235 = vmatpush1.bf16.msra.mxu0 0
    %236 = vmatprep.subr.bf16.mxu0 0
    %237 = vmatpush1.bf16.msra.mxu0 0
    %238 = vmatprep.mubr.bf16.mxu0 0
    %239 = vmatmul.mubr.bf16.gmra.mrb[0].mxu0 %v182
    %v240 = vpop.f32.mrb[0].mxu0
    %v241 = vadd.f32 0.0, %v240
    %v242 = vpop.f32.mrb[0].mxu0
    %v243 = vadd.f32 0.0, %v242
    %v244 = vpop.f32.mrb[0].mxu0
    %v245 = vadd.f32 0.0, %v244
    %v246 = vpop.f32.mrb[0].mxu0
    %v247 = vadd.f32 0.0, %v246
    %248 = vmatprep.mubr.bf16.mxu0 0
    %249 = vmatmul.mubr.bf16.gmra.mrb[0].mxu0 %v183
    %v250 = vpop.f32.mrb[0].mxu0
    %v251 = vadd.f32 0.0, %v250
    %v252 = vpop.f32.mrb[0].mxu0
    %v253 = vadd.f32 0.0, %v252
    %v254 = vpop.f32.mrb[0].mxu0
    %v255 = vadd.f32 0.0, %v254
    %v256 = vpop.f32.mrb[0].mxu0
    %v257 = vadd.f32 0.0, %v256
    %258 = vmatprep.mubr.bf16.mxu0 0
    %259 = vmatmul.mubr.bf16.gmra.mrb[0].mxu0 %v184
    %v260 = vpop.f32.mrb[0].mxu0
    %v261 = vadd.f32 0.0, %v260
    %v262 = vpop.f32.mrb[0].mxu0
    %v263 = vadd.f32 0.0, %v262
    %v264 = vpop.f32.mrb[0].mxu0
    %v265 = vadd.f32 0.0, %v264
    %v266 = vpop.f32.mrb[0].mxu0
    %v267 = vadd.f32 0.0, %v266
    %268 = vmatprep.mubr.bf16.mxu0 0
    %269 = vmatmul.mubr.bf16.gmra.mrb[0].mxu0 %v185
    %v270 = vpop.f32.mrb[0].mxu0
    %v271 = vadd.f32 0.0, %v270
    %v272 = vpop.f32.mrb[0].mxu0
    %v273 = vadd.f32 0.0, %v272
    %v274 = vpop.f32.mrb[0].mxu0
    %v275 = vadd.f32 0.0, %v274
    %v276 = vpop.f32.mrb[0].mxu0
    %v277 = vadd.f32 0.0, %v276
    %278 = vmatprep.mubr.bf16.mxu0 0
    %279 = vmatmul.mubr.bf16.gmra.mrb[0].mxu0 %v186
    %v280 = vpop.f32.mrb[0].mxu0
    %v281 = vadd.f32 0.0, %v280
    %v282 = vpop.f32.mrb[0].mxu0
    %v283 = vadd.f32 0.0, %v282
    %v284 = vpop.f32.mrb[0].mxu0
    %v285 = vadd.f32 0.0, %v284
    %v286 = vpop.f32.mrb[0].mxu0
    %v287 = vadd.f32 0.0, %v286
    %288 = vmatprep.mubr.bf16.mxu0 0
    %289 = vmatmul.mubr.bf16.gmra.mrb[0].mxu0 %v187
    %v290 = vpop.f32.mrb[0].mxu0
    %v291 = vadd.f32 0.0, %v290
    %v292 = vpop.f32.mrb[0].mxu0
    %v293 = vadd.f32 0.0, %v292
    %v294 = vpop.f32.mrb[0].mxu0
    %v295 = vadd.f32 0.0, %v294
    %v296 = vpop.f32.mrb[0].mxu0
    %v297 = vadd.f32 0.0, %v296
    %298 = vmatprep.mubr.bf16.mxu0 0
    %299 = vmatmul.mubr.bf16.gmra.mrb[0].mxu0 %v188
    %v300 = vpop.f32.mrb[0].mxu0
    %v301 = vadd.f32 0.0, %v300
    %v302 = vpop.f32.mrb[0].mxu0
    %v303 = vadd.f32 0.0, %v302
    %v304 = vpop.f32.mrb[0].mxu0
    %v305 = vadd.f32 0.0, %v304
    %v306 = vpop.f32.mrb[0].mxu0
    %v307 = vadd.f32 0.0, %v306
    %308 = vmatprep.mubr.bf16.mxu0 0
    %309 = vmatmul.mubr.bf16.gmra.mrb[0].mxu0 %v189
    %v310 = vpop.f32.mrb[0].mxu0
    %v311 = vadd.f32 0.0, %v310
    %v312 = vpop.f32.mrb[0].mxu0
    %v313 = vadd.f32 0.0, %v312
    %v314 = vpop.f32.mrb[0].mxu0
    %v315 = vadd.f32 0.0, %v314
    %v316 = vpop.f32.mrb[0].mxu0
    %v317 = vadd.f32 0.0, %v316
    %318 = vdwg.mxu0
    %v319 = vld [vmem:[#allocation7] sm:$0xff]
    %v320 = vld [vmem:[#allocation7 + $0x8] sm:$0xff]
    %v321 = vld [vmem:[#allocation7 + $0x10] sm:$0xff]
    %v322 = vld [vmem:[#allocation7 + $0x18] sm:$0xff]
    %v323 = vld [vmem:[#allocation7 + $0x20] sm:$0xff]
    %v324 = vld [vmem:[#allocation7 + $0x28] sm:$0xff]
    %v325 = vld [vmem:[#allocation7 + $0x30] sm:$0xff]
    %v326 = vld [vmem:[#allocation7 + $0x38] sm:$0xff]
    %v327 = vld [vmem:[#allocation7 + $0x40] sm:$0xff]
    %v328 = vld [vmem:[#allocation7 + $0x48] sm:$0xff]
    %v329 = vld [vmem:[#allocation7 + $0x50] sm:$0xff]
    %v330 = vld [vmem:[#allocation7 + $0x58] sm:$0xff]
    %v331 = vld [vmem:[#allocation7 + $0x60] sm:$0xff]
    %v332 = vld [vmem:[#allocation7 + $0x68] sm:$0xff]
    %v333 = vld [vmem:[#allocation7 + $0x70] sm:$0xff]
    %v334 = vld [vmem:[#allocation7 + $0x78] sm:$0xff]
    %v335 = vld [vmem:[#allocation7 + $0x80] sm:$0xff]
    %v336 = vld [vmem:[#allocation7 + $0x88] sm:$0xff]
    %v337 = vld [vmem:[#allocation7 + $0x90] sm:$0xff]
    %v338 = vld [vmem:[#allocation7 + $0x98] sm:$0xff]
    %v339 = vld [vmem:[#allocation7 + $0xa0] sm:$0xff]
    %v340 = vld [vmem:[#allocation7 + $0xa8] sm:$0xff]
    %v341 = vld [vmem:[#allocation7 + $0xb0] sm:$0xff]
    %v342 = vld [vmem:[#allocation7 + $0xb8] sm:$0xff]
    %v343 = vld [vmem:[#allocation7 + $0xc0] sm:$0xff]
    %v344 = vld [vmem:[#allocation7 + $0xc8] sm:$0xff]
    %v345 = vld [vmem:[#allocation7 + $0xd0] sm:$0xff]
    %v346 = vld [vmem:[#allocation7 + $0xd8] sm:$0xff]
    %v347 = vld [vmem:[#allocation7 + $0xe0] sm:$0xff]
    %v348 = vld [vmem:[#allocation7 + $0xe8] sm:$0xff]
    %v349 = vld [vmem:[#allocation7 + $0xf0] sm:$0xff]
    %v350 = vld [vmem:[#allocation7 + $0xf8] sm:$0xff]
    %v351 = vpack.c.bf16 %v245, %v241
    %v352 = vpack.c.bf16 %v247, %v243
    %v353 = vpack.c.bf16 %v255, %v251
    %v354 = vpack.c.bf16 %v257, %v253
    %v355 = vpack.c.bf16 %v265, %v261
    %v356 = vpack.c.bf16 %v267, %v263
    %v357 = vpack.c.bf16 %v275, %v271
    %v358 = vpack.c.bf16 %v277, %v273
    %v359 = vpack.c.bf16 %v285, %v281
    %v360 = vpack.c.bf16 %v287, %v283
    %v361 = vpack.c.bf16 %v295, %v291
    %v362 = vpack.c.bf16 %v297, %v293
    %v363 = vpack.c.bf16 %v305, %v301
    %v364 = vpack.c.bf16 %v307, %v303
    %v365 = vpack.c.bf16 %v315, %v311
    %v366 = vpack.c.bf16 %v317, %v313
    %v367 = vpack.c.bf16 %v320, %v319
    %v368 = vpack.c.bf16 %v322, %v321
    %v369 = vpack.c.bf16 %v324, %v323
    %v370 = vpack.c.bf16 %v326, %v325
    %v371 = vpack.c.bf16 %v328, %v327
    %v372 = vpack.c.bf16 %v330, %v329
    %v373 = vpack.c.bf16 %v332, %v331
    %v374 = vpack.c.bf16 %v334, %v333
    %v375 = vpack.c.bf16 %v336, %v335
    %v376 = vpack.c.bf16 %v338, %v337
    %v377 = vpack.c.bf16 %v340, %v339
    %v378 = vpack.c.bf16 %v342, %v341
    %v379 = vpack.c.bf16 %v344, %v343
    %v380 = vpack.c.bf16 %v346, %v345
    %v381 = vpack.c.bf16 %v348, %v347
    %v382 = vpack.c.bf16 %v350, %v349
    %383 = vmatprep.subr.bf16.mxu0 0
    %384 = vmatpush1.bf16.msra.mxu0 %v367
    %385 = vmatprep.subr.bf16.mxu0 0
    %386 = vmatpush1.bf16.msra.mxu0 %v368
    %387 = vmatprep.subr.bf16.mxu0 0
    %388 = vmatpush1.bf16.msra.mxu0 %v369
    %389 = vmatprep.subr.bf16.mxu0 0
    %390 = vmatpush1.bf16.msra.mxu0 %v370
    %391 = vmatprep.subr.bf16.mxu0 0
    %392 = vmatpush1.bf16.msra.mxu0 %v371
    %393 = vmatprep.subr.bf16.mxu0 0
    %394 = vmatpush1.bf16.msra.mxu0 %v372
    %395 = vmatprep.subr.bf16.mxu0 0
    %396 = vmatpush1.bf16.msra.mxu0 %v373
    %397 = vmatprep.subr.bf16.mxu0 0
    %398 = vmatpush1.bf16.msra.mxu0 %v374
    %399 = vmatprep.subr.bf16.mxu0 0
    %400 = vmatpush1.bf16.msra.mxu0 %v375
    %401 = vmatprep.subr.bf16.mxu0 0
    %402 = vmatpush1.bf16.msra.mxu0 %v376
    %403 = vmatprep.subr.bf16.mxu0 0
    %404 = vmatpush1.bf16.msra.mxu0 %v377
    %405 = vmatprep.subr.bf16.mxu0 0
    %406 = vmatpush1.bf16.msra.mxu0 %v378
    %407 = vmatprep.subr.bf16.mxu0 0
    %408 = vmatpush1.bf16.msra.mxu0 %v379
    %409 = vmatprep.subr.bf16.mxu0 0
    %410 = vmatpush1.bf16.msra.mxu0 %v380
    %411 = vmatprep.subr.bf16.mxu0 0
    %412 = vmatpush1.bf16.msra.mxu0 %v381
    %413 = vmatprep.subr.bf16.mxu0 0
    %414 = vmatpush1.bf16.msra.mxu0 %v382
    %415 = vmatprep.mubr.bf16.mxu0 %v352
    %416 = vmatmul.mubr.bf16.gmra.mrb[0].mxu0 %v351
    %v417 = vpop.f32.mrb[0].mxu0
    %v418 = vadd.f32 0.0, %v417
    %v419 = vpop.f32.mrb[0].mxu0
    %v420 = vpop.f32.mrb[0].mxu0
    %v421 = vadd.f32 0.0, %v420
    %v422 = vpop.f32.mrb[0].mxu0
    %423 = vmatprep.mubr.bf16.mxu0 %v354
    %424 = vmatmul.mubr.bf16.gmra.mrb[0].mxu0 %v353
    %v425 = vpop.f32.mrb[0].mxu0
    %v426 = vadd.f32 0.0, %v425
    %v427 = vpop.f32.mrb[0].mxu0
    %v428 = vpop.f32.mrb[0].mxu0
    %v429 = vadd.f32 0.0, %v428
    %v430 = vpop.f32.mrb[0].mxu0
    %431 = vmatprep.mubr.bf16.mxu0 %v356
    %432 = vmatmul.mubr.bf16.gmra.mrb[0].mxu0 %v355
    %v433 = vpop.f32.mrb[0].mxu0
    %v434 = vadd.f32 0.0, %v433
    %v435 = vpop.f32.mrb[0].mxu0
    %v436 = vpop.f32.mrb[0].mxu0
    %v437 = vadd.f32 0.0, %v436
    %v438 = vpop.f32.mrb[0].mxu0
    %439 = vmatprep.mubr.bf16.mxu0 %v358
    %440 = vmatmul.mubr.bf16.gmra.mrb[0].mxu0 %v357
    %v441 = vpop.f32.mrb[0].mxu0
    %v442 = vadd.f32 0.0, %v441
    %v443 = vpop.f32.mrb[0].mxu0
    %v444 = vpop.f32.mrb[0].mxu0
    %v445 = vadd.f32 0.0, %v444
    %v446 = vpop.f32.mrb[0].mxu0
    %447 = vmatprep.mubr.bf16.mxu0 %v360
    %448 = vmatmul.mubr.bf16.gmra.mrb[0].mxu0 %v359
    %v449 = vpop.f32.mrb[0].mxu0
    %v450 = vadd.f32 0.0, %v449
    %v451 = vpop.f32.mrb[0].mxu0
    %v452 = vpop.f32.mrb[0].mxu0
    %v453 = vadd.f32 0.0, %v452
    %v454 = vpop.f32.mrb[0].mxu0
    %455 = vmatprep.mubr.bf16.mxu0 %v362
    %456 = vmatmul.mubr.bf16.gmra.mrb[0].mxu0 %v361
    %v457 = vpop.f32.mrb[0].mxu0
    %v458 = vadd.f32 0.0, %v457
    %v459 = vpop.f32.mrb[0].mxu0
    %v460 = vpop.f32.mrb[0].mxu0
    %v461 = vadd.f32 0.0, %v460
    %v462 = vpop.f32.mrb[0].mxu0
    %463 = vmatprep.mubr.bf16.mxu0 %v364
    %464 = vmatmul.mubr.bf16.gmra.mrb[0].mxu0 %v363
    %v465 = vpop.f32.mrb[0].mxu0
    %v466 = vadd.f32 0.0, %v465
    %v467 = vpop.f32.mrb[0].mxu0
    %v468 = vpop.f32.mrb[0].mxu0
    %v469 = vadd.f32 0.0, %v468
    %v470 = vpop.f32.mrb[0].mxu0
    %471 = vmatprep.mubr.bf16.mxu0 %v366
    %472 = vmatmul.mubr.bf16.gmra.mrb[0].mxu0 %v365
    %v473 = vpop.f32.mrb[0].mxu0
    %v474 = vadd.f32 0.0, %v473
    %v475 = vpop.f32.mrb[0].mxu0
    %v476 = vpop.f32.mrb[0].mxu0
    %v477 = vadd.f32 0.0, %v476
    %v478 = vpop.f32.mrb[0].mxu0
    %479 = vdwg.mxu0
    %480 = vxpose.xlu0.b32.start [1/16] %v418, 128
    %481 = vxpose.xlu0.b32.cont [2/16] %v421, 128
    %482 = vxpose.xlu0.b32.cont [3/16] %v426, 128
    %483 = vxpose.xlu0.b32.cont [4/16] %v429, 128
    %484 = vxpose.xlu0.b32.cont [5/16] %v434, 128
    %485 = vxpose.xlu0.b32.cont [6/16] %v437, 128
    %486 = vxpose.xlu0.b32.cont [7/16] %v442, 128
    %487 = vxpose.xlu0.b32.cont [8/16] %v445, 128
    %488 = vxpose.xlu0.b32.cont [9/16] %v450, 128
    %489 = vxpose.xlu0.b32.cont [10/16] %v453, 128
    %490 = vxpose.xlu0.b32.cont [11/16] %v458, 128
    %491 = vxpose.xlu0.b32.cont [12/16] %v461, 128
    %492 = vxpose.xlu0.b32.cont [13/16] %v466, 128
    %493 = vxpose.xlu0.b32.cont [14/16] %v469, 128
    %494 = vxpose.xlu0.b32.cont [15/16] %v474, 128
    %495 = vxpose.xlu0.b32.end [16/16] %v477, 128
    %v496 = vpop.trf.xlu0
    %v497 = vpop.trf.xlu0
    %v498 = vpop.trf.xlu0
    %v499 = vpop.trf.xlu0
    %v500 = vpop.trf.xlu0
    %v501 = vpop.trf.xlu0
    %v502 = vpop.trf.xlu0
    %v503 = vpop.trf.xlu0
    %v504 = vpop.trf.xlu0
    %v505 = vpop.trf.xlu0
    %v506 = vpop.trf.xlu0
    %v507 = vpop.trf.xlu0
    %v508 = vpop.trf.xlu0
    %v509 = vpop.trf.xlu0
    %v510 = vpop.trf.xlu0
    %v511 = vpop.trf.xlu0
    %513 = vset.pattern.permute.xlu0 0
    %514 = vperm.xlu0 %513, %v418
    %v515 = vpop.permute.xlu0 %514
    %518 = vset.pattern.permute.xlu0 0
    %519 = vperm.xlu0 %518, %v421
    %v520 = vpop.permute.xlu0 %519
    %523 = vset.pattern.permute.xlu0 0
    %524 = vperm.xlu0 %523, %v426
    %v525 = vpop.permute.xlu0 %524
    %528 = vset.pattern.permute.xlu0 0
    %529 = vperm.xlu0 %528, %v429
    %v530 = vpop.permute.xlu0 %529
    %533 = vset.pattern.permute.xlu0 0
    %534 = vperm.xlu0 %533, %v434
    %v535 = vpop.permute.xlu0 %534
    %538 = vset.pattern.permute.xlu0 0
    %539 = vperm.xlu0 %538, %v437
    %v540 = vpop.permute.xlu0 %539
    %543 = vset.pattern.permute.xlu0 0
    %544 = vperm.xlu0 %543, %v442
    %v545 = vpop.permute.xlu0 %544
    %548 = vset.pattern.permute.xlu0 0
    %549 = vperm.xlu0 %548, %v445
    %v550 = vpop.permute.xlu0 %549
    %553 = vset.pattern.permute.xlu0 0
    %554 = vperm.xlu0 %553, %v450
    %v555 = vpop.permute.xlu0 %554
    %558 = vset.pattern.permute.xlu0 0
    %559 = vperm.xlu0 %558, %v453
    %v560 = vpop.permute.xlu0 %559
    %563 = vset.pattern.permute.xlu0 0
    %564 = vperm.xlu0 %563, %v458
    %v565 = vpop.permute.xlu0 %564
    %568 = vset.pattern.permute.xlu0 0
    %569 = vperm.xlu0 %568, %v461
    %v570 = vpop.permute.xlu0 %569
    %573 = vset.pattern.permute.xlu0 0
    %574 = vperm.xlu0 %573, %v466
    %v575 = vpop.permute.xlu0 %574
    %578 = vset.pattern.permute.xlu0 0
    %579 = vperm.xlu0 %578, %v469
    %v580 = vpop.permute.xlu0 %579
    %583 = vset.pattern.permute.xlu0 0
    %584 = vperm.xlu0 %583, %v474
    %v585 = vpop.permute.xlu0 %584
    %588 = vset.pattern.permute.xlu0 0
    %589 = vperm.xlu0 %588, %v477
    %v590 = vpop.permute.xlu0 %589
    %v592 = vlaneseq
    %v593 = vshrl.u32 %v592, 7
    %v594 = vsub.s32 2, %v593
    %v595 = vrot.slane %v496, %v594
    %v596 = vadd.f32 %v515, %v595
    %v597 = vadd.f32 %v520, %v595
    %v598 = vadd.f32 %v525, %v595
    %v599 = vadd.f32 %v530, %v595
    %v600 = vadd.f32 %v535, %v595
    %v601 = vadd.f32 %v540, %v595
    %v602 = vadd.f32 %v545, %v595
    %v603 = vadd.f32 %v550, %v595
    %v604 = vadd.f32 %v555, %v595
    %v605 = vadd.f32 %v560, %v595
    %v606 = vadd.f32 %v565, %v595
    %v607 = vadd.f32 %v570, %v595
    %v608 = vadd.f32 %v575, %v595
    %v609 = vadd.f32 %v580, %v595
    %v610 = vadd.f32 %v585, %v595
    %v611 = vadd.f32 %v590, %v595
    %vm612 = vcmp.gt.f32.partialorder %v596, 0.0
    %vm613 = vcmp.gt.f32.partialorder %v597, 0.0
    %vm614 = vcmp.gt.f32.partialorder %v598, 0.0
    %vm615 = vcmp.gt.f32.partialorder %v599, 0.0
    %vm616 = vcmp.gt.f32.partialorder %v600, 0.0
    %vm617 = vcmp.gt.f32.partialorder %v601, 0.0
    %vm618 = vcmp.gt.f32.partialorder %v602, 0.0
    %vm619 = vcmp.gt.f32.partialorder %v603, 0.0
    %vm620 = vcmp.gt.f32.partialorder %v604, 0.0
    %vm621 = vcmp.gt.f32.partialorder %v605, 0.0
    %vm622 = vcmp.gt.f32.partialorder %v606, 0.0
    %vm623 = vcmp.gt.f32.partialorder %v607, 0.0
    %vm624 = vcmp.gt.f32.partialorder %v608, 0.0
    %vm625 = vcmp.gt.f32.partialorder %v609, 0.0
    %vm626 = vcmp.gt.f32.partialorder %v610, 0.0
    %vm627 = vcmp.gt.f32.partialorder %v611, 0.0
    %v628 = vmul.f32 %v596, 0.2
    %v629 = vmul.f32 %v597, 0.2
    %v630 = vmul.f32 %v598, 0.2
    %v631 = vmul.f32 %v599, 0.2
    %v632 = vmul.f32 %v600, 0.2
    %v633 = vmul.f32 %v601, 0.2
    %v634 = vmul.f32 %v602, 0.2
    %v635 = vmul.f32 %v603, 0.2
    %v636 = vmul.f32 %v604, 0.2
    %v637 = vmul.f32 %v605, 0.2
    %v638 = vmul.f32 %v606, 0.2
    %v639 = vmul.f32 %v607, 0.2
    %v640 = vmul.f32 %v608, 0.2
    %v641 = vmul.f32 %v609, 0.2
    %v642 = vmul.f32 %v610, 0.2
    %v643 = vmul.f32 %v611, 0.2
    %v644 = vsel %vm612, %v596, %v628
    %v645 = vsel %vm613, %v597, %v629
    %v646 = vsel %vm614, %v598, %v630
    %v647 = vsel %vm615, %v599, %v631
    %v648 = vsel %vm616, %v600, %v632
    %v649 = vsel %vm617, %v601, %v633
    %v650 = vsel %vm618, %v602, %v634
    %v651 = vsel %vm619, %v603, %v635
    %v652 = vsel %vm620, %v604, %v636
    %v653 = vsel %vm621, %v605, %v637
    %v654 = vsel %vm622, %v606, %v638
    %v655 = vsel %vm623, %v607, %v639
    %v656 = vsel %vm624, %v608, %v640
    %v657 = vsel %vm625, %v609, %v641
    %v658 = vsel %vm626, %v610, %v642
    %v659 = vsel %vm627, %v611, %v643
    %v660 = vsel %vm118, %v644, -1e+30
    %v661 = vsel %vm119, %v645, -1e+30
    %v662 = vsel %vm120, %v646, -1e+30
    %v663 = vsel %vm121, %v647, -1e+30
    %v664 = vsel %vm122, %v648, -1e+30
    %v665 = vsel %vm123, %v649, -1e+30
    %v666 = vsel %vm124, %v650, -1e+30
    %v667 = vsel %vm125, %v651, -1e+30
    %v668 = vsel %vm126, %v652, -1e+30
    %v669 = vsel %vm127, %v653, -1e+30
    %v670 = vsel %vm128, %v654, -1e+30
    %v671 = vsel %vm129, %v655, -1e+30
    %v672 = vsel %vm130, %v656, -1e+30
    %v673 = vsel %vm131, %v657, -1e+30
    %v674 = vsel %vm132, %v658, -1e+30
    %v675 = vsel %vm133, %v659, -1e+30
    %676 = vmax.xlane.f32.xlu0 %v660
    %v677 = vpop.xlane.xlu0 %676
    %678 = vmax.xlane.f32.xlu0 %v661
    %v679 = vpop.xlane.xlu0 %678
    %680 = vmax.xlane.f32.xlu0 %v662
    %v681 = vpop.xlane.xlu0 %680
    %682 = vmax.xlane.f32.xlu0 %v663
    %v683 = vpop.xlane.xlu0 %682
    %684 = vmax.xlane.f32.xlu0 %v664
    %v685 = vpop.xlane.xlu0 %684
    %686 = vmax.xlane.f32.xlu0 %v665
    %v687 = vpop.xlane.xlu0 %686
    %688 = vmax.xlane.f32.xlu0 %v666
    %v689 = vpop.xlane.xlu0 %688
    %690 = vmax.xlane.f32.xlu0 %v667
    %v691 = vpop.xlane.xlu0 %690
    %692 = vmax.xlane.f32.xlu0 %v668
    %v693 = vpop.xlane.xlu0 %692
    %694 = vmax.xlane.f32.xlu0 %v669
    %v695 = vpop.xlane.xlu0 %694
    %696 = vmax.xlane.f32.xlu0 %v670
    %v697 = vpop.xlane.xlu0 %696
    %698 = vmax.xlane.f32.xlu0 %v671
    %v699 = vpop.xlane.xlu0 %698
    %700 = vmax.xlane.f32.xlu0 %v672
    %v701 = vpop.xlane.xlu0 %700
    %702 = vmax.xlane.f32.xlu0 %v673
    %v703 = vpop.xlane.xlu0 %702
    %704 = vmax.xlane.f32.xlu0 %v674
    %v705 = vpop.xlane.xlu0 %704
    %706 = vmax.xlane.f32.xlu0 %v675
    %v707 = vpop.xlane.xlu0 %706
    %v708 = vsub.f32 %v660, %v677
    %v709 = vsub.f32 %v661, %v679
    %v710 = vsub.f32 %v662, %v681
    %v711 = vsub.f32 %v663, %v683
    %v712 = vsub.f32 %v664, %v685
    %v713 = vsub.f32 %v665, %v687
    %v714 = vsub.f32 %v666, %v689
    %v715 = vsub.f32 %v667, %v691
    %v716 = vsub.f32 %v668, %v693
    %v717 = vsub.f32 %v669, %v695
    %v718 = vsub.f32 %v670, %v697
    %v719 = vsub.f32 %v671, %v699
    %v720 = vsub.f32 %v672, %v701
    %v721 = vsub.f32 %v673, %v703
    %v722 = vsub.f32 %v674, %v705
    %v723 = vsub.f32 %v675, %v707
    %v724 = vmul.f32 %v708, 1.442695
    %v725 = vpow.pop %v724
    %v726 = vmul.f32 %v709, 1.442695
    %v727 = vpow.pop %v726
    %v728 = vmul.f32 %v710, 1.442695
    %v729 = vpow.pop %v728
    %v730 = vmul.f32 %v711, 1.442695
    %v731 = vpow.pop %v730
    %v732 = vmul.f32 %v712, 1.442695
    %v733 = vpow.pop %v732
    %v734 = vmul.f32 %v713, 1.442695
    %v735 = vpow.pop %v734
    %v736 = vmul.f32 %v714, 1.442695
    %v737 = vpow.pop %v736
    %v738 = vmul.f32 %v715, 1.442695
    %v739 = vpow.pop %v738
    %v740 = vmul.f32 %v716, 1.442695
    %v741 = vpow.pop %v740
    %v742 = vmul.f32 %v717, 1.442695
    %v743 = vpow.pop %v742
    %v744 = vmul.f32 %v718, 1.442695
    %v745 = vpow.pop %v744
    %v746 = vmul.f32 %v719, 1.442695
    %v747 = vpow.pop %v746
    %v748 = vmul.f32 %v720, 1.442695
    %v749 = vpow.pop %v748
    %v750 = vmul.f32 %v721, 1.442695
    %v751 = vpow.pop %v750
    %v752 = vmul.f32 %v722, 1.442695
    %v753 = vpow.pop %v752
    %v754 = vmul.f32 %v723, 1.442695
    %v755 = vpow.pop %v754
    %756 = vadd.xlane.f32.xlu0 %v725
    %v757 = vpop.xlane.xlu0 %756
    %758 = vadd.xlane.f32.xlu0 %v727
    %v759 = vpop.xlane.xlu0 %758
    %760 = vadd.xlane.f32.xlu0 %v729
    %v761 = vpop.xlane.xlu0 %760
    %762 = vadd.xlane.f32.xlu0 %v731
    %v763 = vpop.xlane.xlu0 %762
    %764 = vadd.xlane.f32.xlu0 %v733
    %v765 = vpop.xlane.xlu0 %764
    %766 = vadd.xlane.f32.xlu0 %v735
    %v767 = vpop.xlane.xlu0 %766
    %768 = vadd.xlane.f32.xlu0 %v737
    %v769 = vpop.xlane.xlu0 %768
    %770 = vadd.xlane.f32.xlu0 %v739
    %v771 = vpop.xlane.xlu0 %770
    %772 = vadd.xlane.f32.xlu0 %v741
    %v773 = vpop.xlane.xlu0 %772
    %774 = vadd.xlane.f32.xlu0 %v743
    %v775 = vpop.xlane.xlu0 %774
    %776 = vadd.xlane.f32.xlu0 %v745
    %v777 = vpop.xlane.xlu0 %776
    %778 = vadd.xlane.f32.xlu0 %v747
    %v779 = vpop.xlane.xlu0 %778
    %780 = vadd.xlane.f32.xlu0 %v749
    %v781 = vpop.xlane.xlu0 %780
    %782 = vadd.xlane.f32.xlu0 %v751
    %v783 = vpop.xlane.xlu0 %782
    %784 = vadd.xlane.f32.xlu0 %v753
    %v785 = vpop.xlane.xlu0 %784
    %786 = vadd.xlane.f32.xlu0 %v755
    %v787 = vpop.xlane.xlu0 %786
    %v788 = vrcp.pop %v757
    %v789 = vrcp.pop %v759
    %v790 = vrcp.pop %v761
    %v791 = vrcp.pop %v763
    %v792 = vrcp.pop %v765
    %v793 = vrcp.pop %v767
    %v794 = vrcp.pop %v769
    %v795 = vrcp.pop %v771
    %v796 = vrcp.pop %v773
    %v797 = vrcp.pop %v775
    %v798 = vrcp.pop %v777
    %v799 = vrcp.pop %v779
    %v800 = vrcp.pop %v781
    %v801 = vrcp.pop %v783
    %v802 = vrcp.pop %v785
    %v803 = vrcp.pop %v787
    %v804 = vmul.f32 %v725, %v788
    %v805 = vmul.f32 %v727, %v789
    %v806 = vmul.f32 %v729, %v790
    %v807 = vmul.f32 %v731, %v791
    %v808 = vmul.f32 %v733, %v792
    %v809 = vmul.f32 %v735, %v793
    %v810 = vmul.f32 %v737, %v794
    %v811 = vmul.f32 %v739, %v795
    %v812 = vmul.f32 %v741, %v796
    %v813 = vmul.f32 %v743, %v797
    %v814 = vmul.f32 %v745, %v798
    %v815 = vmul.f32 %v747, %v799
    %v816 = vmul.f32 %v749, %v800
    %v817 = vmul.f32 %v751, %v801
    %v818 = vmul.f32 %v753, %v802
    %v819 = vmul.f32 %v755, %v803
    %v820 = vpack.c.bf16 %v805, %v804
    %v821 = vpack.c.bf16 %v807, %v806
    %v822 = vpack.c.bf16 %v809, %v808
    %v823 = vpack.c.bf16 %v811, %v810
    %v824 = vpack.c.bf16 %v813, %v812
    %v825 = vpack.c.bf16 %v815, %v814
    %v826 = vpack.c.bf16 %v817, %v816
    %v827 = vpack.c.bf16 %v819, %v818
    %828 = vmatprep.subr.bf16.mxu0 0
    %829 = vmatpush1.bf16.msra.mxu0 %v351
    %830 = vmatprep.subr.bf16.mxu0 0
    %831 = vmatpush1.bf16.msra.mxu0 %v353
    %832 = vmatprep.subr.bf16.mxu0 0
    %833 = vmatpush1.bf16.msra.mxu0 %v355
    %834 = vmatprep.subr.bf16.mxu0 0
    %835 = vmatpush1.bf16.msra.mxu0 %v357
    %836 = vmatprep.subr.bf16.mxu0 0
    %837 = vmatpush1.bf16.msra.mxu0 %v359
    %838 = vmatprep.subr.bf16.mxu0 0
    %839 = vmatpush1.bf16.msra.mxu0 %v361
    %840 = vmatprep.subr.bf16.mxu0 0
    %841 = vmatpush1.bf16.msra.mxu0 %v363
    %842 = vmatprep.subr.bf16.mxu0 0
    %843 = vmatpush1.bf16.msra.mxu0 %v365
    %844 = vmatprep.subr.bf16.mxu0 0
    %845 = vmatpush1.bf16.msra.mxu0 0
    %846 = vmatprep.subr.bf16.mxu0 0
    %847 = vmatpush1.bf16.msra.mxu0 0
    %848 = vmatprep.subr.bf16.mxu0 0
    %849 = vmatpush1.bf16.msra.mxu0 0
    %850 = vmatprep.subr.bf16.mxu0 0
    %851 = vmatpush1.bf16.msra.mxu0 0
    %852 = vmatprep.subr.bf16.mxu0 0
    %853 = vmatpush1.bf16.msra.mxu0 0
    %854 = vmatprep.subr.bf16.mxu0 0
    %855 = vmatpush1.bf16.msra.mxu0 0
    %856 = vmatprep.subr.bf16.mxu0 0
    %857 = vmatpush1.bf16.msra.mxu0 0
    %858 = vmatprep.subr.bf16.mxu0 0
    %859 = vmatpush1.bf16.msra.mxu0 0
    %860 = vmatprep.mubr.bf16.mxu0 0
    %861 = vmatmul.mubr.bf16.gmra.mrb[0].mxu0 %v820
    %v862 = vpop.f32.mrb[0].mxu0
    %v863 = vadd.f32 0.0, %v862
    %v864 = vpop.f32.mrb[0].mxu0
    %v865 = vpop.f32.mrb[0].mxu0
    %v866 = vadd.f32 0.0, %v865
    %v867 = vpop.f32.mrb[0].mxu0
    %868 = vmatprep.mubr.bf16.mxu0 0
    %869 = vmatmul.mubr.bf16.gmra.mrb[0].mxu0 %v821
    %v870 = vpop.f32.mrb[0].mxu0
    %v871 = vadd.f32 0.0, %v870
    %v872 = vpop.f32.mrb[0].mxu0
    %v873 = vpop.f32.mrb[0].mxu0
    %v874 = vadd.f32 0.0, %v873
    %v875 = vpop.f32.mrb[0].mxu0
    %876 = vmatprep.mubr.bf16.mxu0 0
    %877 = vmatmul.mubr.bf16.gmra.mrb[0].mxu0 %v822
    %v878 = vpop.f32.mrb[0].mxu0
    %v879 = vadd.f32 0.0, %v878
    %v880 = vpop.f32.mrb[0].mxu0
    %v881 = vpop.f32.mrb[0].mxu0
    %v882 = vadd.f32 0.0, %v881
    %v883 = vpop.f32.mrb[0].mxu0
    %884 = vmatprep.mubr.bf16.mxu0 0
    %885 = vmatmul.mubr.bf16.gmra.mrb[0].mxu0 %v823
    %v886 = vpop.f32.mrb[0].mxu0
    %v887 = vadd.f32 0.0, %v886
    %v888 = vpop.f32.mrb[0].mxu0
    %v889 = vpop.f32.mrb[0].mxu0
    %v890 = vadd.f32 0.0, %v889
    %v891 = vpop.f32.mrb[0].mxu0
    %892 = vmatprep.mubr.bf16.mxu0 0
    %893 = vmatmul.mubr.bf16.gmra.mrb[0].mxu0 %v824
    %v894 = vpop.f32.mrb[0].mxu0
    %v895 = vadd.f32 0.0, %v894
    %v896 = vpop.f32.mrb[0].mxu0
    %v897 = vpop.f32.mrb[0].mxu0
    %v898 = vadd.f32 0.0, %v897
    %v899 = vpop.f32.mrb[0].mxu0
    %900 = vmatprep.mubr.bf16.mxu0 0
    %901 = vmatmul.mubr.bf16.gmra.mrb[0].mxu0 %v825
    %v902 = vpop.f32.mrb[0].mxu0
    %v903 = vadd.f32 0.0, %v902
    %v904 = vpop.f32.mrb[0].mxu0
    %v905 = vpop.f32.mrb[0].mxu0
    %v906 = vadd.f32 0.0, %v905
    %v907 = vpop.f32.mrb[0].mxu0
    %908 = vmatprep.mubr.bf16.mxu0 0
    %909 = vmatmul.mubr.bf16.gmra.mrb[0].mxu0 %v826
    %v910 = vpop.f32.mrb[0].mxu0
    %v911 = vadd.f32 0.0, %v910
    %v912 = vpop.f32.mrb[0].mxu0
    %v913 = vpop.f32.mrb[0].mxu0
    %v914 = vadd.f32 0.0, %v913
    %v915 = vpop.f32.mrb[0].mxu0
    %916 = vmatprep.mubr.bf16.mxu0 0
    %917 = vmatmul.mubr.bf16.gmra.mrb[0].mxu0 %v827
    %v918 = vpop.f32.mrb[0].mxu0
    %v919 = vadd.f32 0.0, %v918
    %v920 = vpop.f32.mrb[0].mxu0
    %v921 = vpop.f32.mrb[0].mxu0
    %v922 = vadd.f32 0.0, %v921
    %v923 = vpop.f32.mrb[0].mxu0
    %924 = vdwg.mxu0
    %925 = vset.pattern.permute.xlu0 1
    %926 = vperm.xlu0 %925, %v418
    %v927 = vpop.permute.xlu0 %926
    %929 = vset.pattern.permute.xlu0 1
    %930 = vperm.xlu0 %929, %v421
    %v931 = vpop.permute.xlu0 %930
    %933 = vset.pattern.permute.xlu0 1
    %934 = vperm.xlu0 %933, %v426
    %v935 = vpop.permute.xlu0 %934
    %937 = vset.pattern.permute.xlu0 1
    %938 = vperm.xlu0 %937, %v429
    %v939 = vpop.permute.xlu0 %938
    %941 = vset.pattern.permute.xlu0 1
    %942 = vperm.xlu0 %941, %v434
    %v943 = vpop.permute.xlu0 %942
    %945 = vset.pattern.permute.xlu0 1
    %946 = vperm.xlu0 %945, %v437
    %v947 = vpop.permute.xlu0 %946
    %949 = vset.pattern.permute.xlu0 1
    %950 = vperm.xlu0 %949, %v442
    %v951 = vpop.permute.xlu0 %950
    %953 = vset.pattern.permute.xlu0 1
    %954 = vperm.xlu0 %953, %v445
    %v955 = vpop.permute.xlu0 %954
    %957 = vset.pattern.permute.xlu0 1
    %958 = vperm.xlu0 %957, %v450
    %v959 = vpop.permute.xlu0 %958
    %961 = vset.pattern.permute.xlu0 1
    %962 = vperm.xlu0 %961, %v453
    %v963 = vpop.permute.xlu0 %962
    %965 = vset.pattern.permute.xlu0 1
    %966 = vperm.xlu0 %965, %v458
    %v967 = vpop.permute.xlu0 %966
    %969 = vset.pattern.permute.xlu0 1
    %970 = vperm.xlu0 %969, %v461
    %v971 = vpop.permute.xlu0 %970
    %973 = vset.pattern.permute.xlu0 1
    %974 = vperm.xlu0 %973, %v466
    %v975 = vpop.permute.xlu0 %974
    %977 = vset.pattern.permute.xlu0 1
    %978 = vperm.xlu0 %977, %v469
    %v979 = vpop.permute.xlu0 %978
    %981 = vset.pattern.permute.xlu0 1
    %982 = vperm.xlu0 %981, %v474
    %v983 = vpop.permute.xlu0 %982
    %985 = vset.pattern.permute.xlu0 1
    %986 = vperm.xlu0 %985, %v477
    %v987 = vpop.permute.xlu0 %986
    %v989 = vlaneseq
    %v990 = vshrl.u32 %v989, 7
    %v991 = vsub.s32 3, %v990
    %v992 = vrot.slane %v496, %v991
    %v993 = vadd.f32 %v927, %v992
    %v994 = vadd.f32 %v931, %v992
    %v995 = vadd.f32 %v935, %v992
    %v996 = vadd.f32 %v939, %v992
    %v997 = vadd.f32 %v943, %v992
    %v998 = vadd.f32 %v947, %v992
    %v999 = vadd.f32 %v951, %v992
    %v1000 = vadd.f32 %v955, %v992
    %v1001 = vadd.f32 %v959, %v992
    %v1002 = vadd.f32 %v963, %v992
    %v1003 = vadd.f32 %v967, %v992
    %v1004 = vadd.f32 %v971, %v992
    %v1005 = vadd.f32 %v975, %v992
    %v1006 = vadd.f32 %v979, %v992
    %v1007 = vadd.f32 %v983, %v992
    %v1008 = vadd.f32 %v987, %v992
    %vm1009 = vcmp.gt.f32.partialorder %v993, 0.0
    %vm1010 = vcmp.gt.f32.partialorder %v994, 0.0
    %vm1011 = vcmp.gt.f32.partialorder %v995, 0.0
    %vm1012 = vcmp.gt.f32.partialorder %v996, 0.0
    %vm1013 = vcmp.gt.f32.partialorder %v997, 0.0
    %vm1014 = vcmp.gt.f32.partialorder %v998, 0.0
    %vm1015 = vcmp.gt.f32.partialorder %v999, 0.0
    %vm1016 = vcmp.gt.f32.partialorder %v1000, 0.0
    %vm1017 = vcmp.gt.f32.partialorder %v1001, 0.0
    %vm1018 = vcmp.gt.f32.partialorder %v1002, 0.0
    %vm1019 = vcmp.gt.f32.partialorder %v1003, 0.0
    %vm1020 = vcmp.gt.f32.partialorder %v1004, 0.0
    %vm1021 = vcmp.gt.f32.partialorder %v1005, 0.0
    %vm1022 = vcmp.gt.f32.partialorder %v1006, 0.0
    %vm1023 = vcmp.gt.f32.partialorder %v1007, 0.0
    %vm1024 = vcmp.gt.f32.partialorder %v1008, 0.0
    %v1025 = vmul.f32 %v993, 0.2
    %v1026 = vmul.f32 %v994, 0.2
    %v1027 = vmul.f32 %v995, 0.2
    %v1028 = vmul.f32 %v996, 0.2
    %v1029 = vmul.f32 %v997, 0.2
    %v1030 = vmul.f32 %v998, 0.2
    %v1031 = vmul.f32 %v999, 0.2
    %v1032 = vmul.f32 %v1000, 0.2
    %v1033 = vmul.f32 %v1001, 0.2
    %v1034 = vmul.f32 %v1002, 0.2
    %v1035 = vmul.f32 %v1003, 0.2
    %v1036 = vmul.f32 %v1004, 0.2
    %v1037 = vmul.f32 %v1005, 0.2
    %v1038 = vmul.f32 %v1006, 0.2
    %v1039 = vmul.f32 %v1007, 0.2
    %v1040 = vmul.f32 %v1008, 0.2
    %v1041 = vsel %vm1009, %v993, %v1025
    %v1042 = vsel %vm1010, %v994, %v1026
    %v1043 = vsel %vm1011, %v995, %v1027
    %v1044 = vsel %vm1012, %v996, %v1028
    %v1045 = vsel %vm1013, %v997, %v1029
    %v1046 = vsel %vm1014, %v998, %v1030
    %v1047 = vsel %vm1015, %v999, %v1031
    %v1048 = vsel %vm1016, %v1000, %v1032
    %v1049 = vsel %vm1017, %v1001, %v1033
    %v1050 = vsel %vm1018, %v1002, %v1034
    %v1051 = vsel %vm1019, %v1003, %v1035
    %v1052 = vsel %vm1020, %v1004, %v1036
    %v1053 = vsel %vm1021, %v1005, %v1037
    %v1054 = vsel %vm1022, %v1006, %v1038
    %v1055 = vsel %vm1023, %v1007, %v1039
    %v1056 = vsel %vm1024, %v1008, %v1040
    %v1057 = vsel %vm118, %v1041, -1e+30
    %v1058 = vsel %vm119, %v1042, -1e+30
    %v1059 = vsel %vm120, %v1043, -1e+30
    %v1060 = vsel %vm121, %v1044, -1e+30
    %v1061 = vsel %vm122, %v1045, -1e+30
    %v1062 = vsel %vm123, %v1046, -1e+30
    %v1063 = vsel %vm124, %v1047, -1e+30
    %v1064 = vsel %vm125, %v1048, -1e+30
    %v1065 = vsel %vm126, %v1049, -1e+30
    %v1066 = vsel %vm127, %v1050, -1e+30
    %v1067 = vsel %vm128, %v1051, -1e+30
    %v1068 = vsel %vm129, %v1052, -1e+30
    %v1069 = vsel %vm130, %v1053, -1e+30
    %v1070 = vsel %vm131, %v1054, -1e+30
    %v1071 = vsel %vm132, %v1055, -1e+30
    %v1072 = vsel %vm133, %v1056, -1e+30
    %1073 = vmax.xlane.f32.xlu0 %v1057
    %v1074 = vpop.xlane.xlu0 %1073
    %1075 = vmax.xlane.f32.xlu0 %v1058
    %v1076 = vpop.xlane.xlu0 %1075
    %1077 = vmax.xlane.f32.xlu0 %v1059
    %v1078 = vpop.xlane.xlu0 %1077
    %1079 = vmax.xlane.f32.xlu0 %v1060
    %v1080 = vpop.xlane.xlu0 %1079
    %1081 = vmax.xlane.f32.xlu0 %v1061
    %v1082 = vpop.xlane.xlu0 %1081
    %1083 = vmax.xlane.f32.xlu0 %v1062
    %v1084 = vpop.xlane.xlu0 %1083
    %1085 = vmax.xlane.f32.xlu0 %v1063
    %v1086 = vpop.xlane.xlu0 %1085
    %1087 = vmax.xlane.f32.xlu0 %v1064
    %v1088 = vpop.xlane.xlu0 %1087
    %1089 = vmax.xlane.f32.xlu0 %v1065
    %v1090 = vpop.xlane.xlu0 %1089
    %1091 = vmax.xlane.f32.xlu0 %v1066
    %v1092 = vpop.xlane.xlu0 %1091
    %1093 = vmax.xlane.f32.xlu0 %v1067
    %v1094 = vpop.xlane.xlu0 %1093
    %1095 = vmax.xlane.f32.xlu0 %v1068
    %v1096 = vpop.xlane.xlu0 %1095
    %1097 = vmax.xlane.f32.xlu0 %v1069
    %v1098 = vpop.xlane.xlu0 %1097
    %1099 = vmax.xlane.f32.xlu0 %v1070
    %v1100 = vpop.xlane.xlu0 %1099
    %1101 = vmax.xlane.f32.xlu0 %v1071
    %v1102 = vpop.xlane.xlu0 %1101
    %1103 = vmax.xlane.f32.xlu0 %v1072
    %v1104 = vpop.xlane.xlu0 %1103
    %v1105 = vsub.f32 %v1057, %v1074
    %v1106 = vsub.f32 %v1058, %v1076
    %v1107 = vsub.f32 %v1059, %v1078
    %v1108 = vsub.f32 %v1060, %v1080
    %v1109 = vsub.f32 %v1061, %v1082
    %v1110 = vsub.f32 %v1062, %v1084
    %v1111 = vsub.f32 %v1063, %v1086
    %v1112 = vsub.f32 %v1064, %v1088
    %v1113 = vsub.f32 %v1065, %v1090
    %v1114 = vsub.f32 %v1066, %v1092
    %v1115 = vsub.f32 %v1067, %v1094
    %v1116 = vsub.f32 %v1068, %v1096
    %v1117 = vsub.f32 %v1069, %v1098
    %v1118 = vsub.f32 %v1070, %v1100
    %v1119 = vsub.f32 %v1071, %v1102
    %v1120 = vsub.f32 %v1072, %v1104
    %v1121 = vmul.f32 %v1105, 1.442695
    %v1122 = vpow.pop %v1121
    %v1123 = vmul.f32 %v1106, 1.442695
    %v1124 = vpow.pop %v1123
    %v1125 = vmul.f32 %v1107, 1.442695
    %v1126 = vpow.pop %v1125
    %v1127 = vmul.f32 %v1108, 1.442695
    %v1128 = vpow.pop %v1127
    %v1129 = vmul.f32 %v1109, 1.442695
    %v1130 = vpow.pop %v1129
    %v1131 = vmul.f32 %v1110, 1.442695
    %v1132 = vpow.pop %v1131
    %v1133 = vmul.f32 %v1111, 1.442695
    %v1134 = vpow.pop %v1133
    %v1135 = vmul.f32 %v1112, 1.442695
    %v1136 = vpow.pop %v1135
    %v1137 = vmul.f32 %v1113, 1.442695
    %v1138 = vpow.pop %v1137
    %v1139 = vmul.f32 %v1114, 1.442695
    %v1140 = vpow.pop %v1139
    %v1141 = vmul.f32 %v1115, 1.442695
    %v1142 = vpow.pop %v1141
    %v1143 = vmul.f32 %v1116, 1.442695
    %v1144 = vpow.pop %v1143
    %v1145 = vmul.f32 %v1117, 1.442695
    %v1146 = vpow.pop %v1145
    %v1147 = vmul.f32 %v1118, 1.442695
    %v1148 = vpow.pop %v1147
    %v1149 = vmul.f32 %v1119, 1.442695
    %v1150 = vpow.pop %v1149
    %v1151 = vmul.f32 %v1120, 1.442695
    %v1152 = vpow.pop %v1151
    %1153 = vadd.xlane.f32.xlu0 %v1122
    %v1154 = vpop.xlane.xlu0 %1153
    %1155 = vadd.xlane.f32.xlu0 %v1124
    %v1156 = vpop.xlane.xlu0 %1155
    %1157 = vadd.xlane.f32.xlu0 %v1126
    %v1158 = vpop.xlane.xlu0 %1157
    %1159 = vadd.xlane.f32.xlu0 %v1128
    %v1160 = vpop.xlane.xlu0 %1159
    %1161 = vadd.xlane.f32.xlu0 %v1130
    %v1162 = vpop.xlane.xlu0 %1161
    %1163 = vadd.xlane.f32.xlu0 %v1132
    %v1164 = vpop.xlane.xlu0 %1163
    %1165 = vadd.xlane.f32.xlu0 %v1134
    %v1166 = vpop.xlane.xlu0 %1165
    %1167 = vadd.xlane.f32.xlu0 %v1136
    %v1168 = vpop.xlane.xlu0 %1167
    %1169 = vadd.xlane.f32.xlu0 %v1138
    %v1170 = vpop.xlane.xlu0 %1169
    %1171 = vadd.xlane.f32.xlu0 %v1140
    %v1172 = vpop.xlane.xlu0 %1171
    %1173 = vadd.xlane.f32.xlu0 %v1142
    %v1174 = vpop.xlane.xlu0 %1173
    %1175 = vadd.xlane.f32.xlu0 %v1144
    %v1176 = vpop.xlane.xlu0 %1175
    %1177 = vadd.xlane.f32.xlu0 %v1146
    %v1178 = vpop.xlane.xlu0 %1177
    %1179 = vadd.xlane.f32.xlu0 %v1148
    %v1180 = vpop.xlane.xlu0 %1179
    %1181 = vadd.xlane.f32.xlu0 %v1150
    %v1182 = vpop.xlane.xlu0 %1181
    %1183 = vadd.xlane.f32.xlu0 %v1152
    %v1184 = vpop.xlane.xlu0 %1183
    %v1185 = vrcp.pop %v1154
    %v1186 = vrcp.pop %v1156
    %v1187 = vrcp.pop %v1158
    %v1188 = vrcp.pop %v1160
    %v1189 = vrcp.pop %v1162
    %v1190 = vrcp.pop %v1164
    %v1191 = vrcp.pop %v1166
    %v1192 = vrcp.pop %v1168
    %v1193 = vrcp.pop %v1170
    %v1194 = vrcp.pop %v1172
    %v1195 = vrcp.pop %v1174
    %v1196 = vrcp.pop %v1176
    %v1197 = vrcp.pop %v1178
    %v1198 = vrcp.pop %v1180
    %v1199 = vrcp.pop %v1182
    %v1200 = vrcp.pop %v1184
    %v1201 = vmul.f32 %v1122, %v1185
    %v1202 = vmul.f32 %v1124, %v1186
    %v1203 = vmul.f32 %v1126, %v1187
    %v1204 = vmul.f32 %v1128, %v1188
    %v1205 = vmul.f32 %v1130, %v1189
    %v1206 = vmul.f32 %v1132, %v1190
    %v1207 = vmul.f32 %v1134, %v1191
    %v1208 = vmul.f32 %v1136, %v1192
    %v1209 = vmul.f32 %v1138, %v1193
    %v1210 = vmul.f32 %v1140, %v1194
    %v1211 = vmul.f32 %v1142, %v1195
    %v1212 = vmul.f32 %v1144, %v1196
    %v1213 = vmul.f32 %v1146, %v1197
    %v1214 = vmul.f32 %v1148, %v1198
    %v1215 = vmul.f32 %v1150, %v1199
    %v1216 = vmul.f32 %v1152, %v1200
    %v1217 = vpack.c.bf16 %v1202, %v1201
    %v1218 = vpack.c.bf16 %v1204, %v1203
    %v1219 = vpack.c.bf16 %v1206, %v1205
    %v1220 = vpack.c.bf16 %v1208, %v1207
    %v1221 = vpack.c.bf16 %v1210, %v1209
    %v1222 = vpack.c.bf16 %v1212, %v1211
    %v1223 = vpack.c.bf16 %v1214, %v1213
    %v1224 = vpack.c.bf16 %v1216, %v1215
    %1225 = vmatprep.subr.bf16.mxu0 0
    %1226 = vmatpush1.bf16.msra.mxu0 %v352
    %1227 = vmatprep.subr.bf16.mxu0 0
    %1228 = vmatpush1.bf16.msra.mxu0 %v354
    %1229 = vmatprep.subr.bf16.mxu0 0
    %1230 = vmatpush1.bf16.msra.mxu0 %v356
    %1231 = vmatprep.subr.bf16.mxu0 0
    %1232 = vmatpush1.bf16.msra.mxu0 %v358
    %1233 = vmatprep.subr.bf16.mxu0 0
    %1234 = vmatpush1.bf16.msra.mxu0 %v360
    %1235 = vmatprep.subr.bf16.mxu0 0
    %1236 = vmatpush1.bf16.msra.mxu0 %v362
    %1237 = vmatprep.subr.bf16.mxu0 0
    %1238 = vmatpush1.bf16.msra.mxu0 %v364
    %1239 = vmatprep.subr.bf16.mxu0 0
    %1240 = vmatpush1.bf16.msra.mxu0 %v366
    %1241 = vmatprep.subr.bf16.mxu0 0
    %1242 = vmatpush1.bf16.msra.mxu0 0
    %1243 = vmatprep.subr.bf16.mxu0 0
    %1244 = vmatpush1.bf16.msra.mxu0 0
    %1245 = vmatprep.subr.bf16.mxu0 0
    %1246 = vmatpush1.bf16.msra.mxu0 0
    %1247 = vmatprep.subr.bf16.mxu0 0
    %1248 = vmatpush1.bf16.msra.mxu0 0
    %1249 = vmatprep.subr.bf16.mxu0 0
    %1250 = vmatpush1.bf16.msra.mxu0 0
    %1251 = vmatprep.subr.bf16.mxu0 0
    %1252 = vmatpush1.bf16.msra.mxu0 0
    %1253 = vmatprep.subr.bf16.mxu0 0
    %1254 = vmatpush1.bf16.msra.mxu0 0
    %1255 = vmatprep.subr.bf16.mxu0 0
    %1256 = vmatpush1.bf16.msra.mxu0 0
    %1257 = vmatprep.mubr.bf16.mxu0 0
    %1258 = vmatmul.mubr.bf16.gmra.mrb[0].mxu0 %v1217
    %v1259 = vpop.f32.mrb[0].mxu0
    %v1260 = vadd.f32 0.0, %v1259
    %v1261 = vpop.f32.mrb[0].mxu0
    %v1262 = vpop.f32.mrb[0].mxu0
    %v1263 = vadd.f32 0.0, %v1262
    %v1264 = vpop.f32.mrb[0].mxu0
    %1265 = vmatprep.mubr.bf16.mxu0 0
    %1266 = vmatmul.mubr.bf16.gmra.mrb[0].mxu0 %v1218
    %v1267 = vpop.f32.mrb[0].mxu0
    %v1268 = vadd.f32 0.0, %v1267
    %v1269 = vpop.f32.mrb[0].mxu0
    %v1270 = vpop.f32.mrb[0].mxu0
    %v1271 = vadd.f32 0.0, %v1270
    %v1272 = vpop.f32.mrb[0].mxu0
    %1273 = vmatprep.mubr.bf16.mxu0 0
    %1274 = vmatmul.mubr.bf16.gmra.mrb[0].mxu0 %v1219
    %v1275 = vpop.f32.mrb[0].mxu0
    %v1276 = vadd.f32 0.0, %v1275
    %v1277 = vpop.f32.mrb[0].mxu0
    %v1278 = vpop.f32.mrb[0].mxu0
    %v1279 = vadd.f32 0.0, %v1278
    %v1280 = vpop.f32.mrb[0].mxu0
    %1281 = vmatprep.mubr.bf16.mxu0 0
    %1282 = vmatmul.mubr.bf16.gmra.mrb[0].mxu0 %v1220
    %v1283 = vpop.f32.mrb[0].mxu0
    %v1284 = vadd.f32 0.0, %v1283
    %v1285 = vpop.f32.mrb[0].mxu0
    %v1286 = vpop.f32.mrb[0].mxu0
    %v1287 = vadd.f32 0.0, %v1286
    %v1288 = vpop.f32.mrb[0].mxu0
    %1289 = vmatprep.mubr.bf16.mxu0 0
    %1290 = vmatmul.mubr.bf16.gmra.mrb[0].mxu0 %v1221
    %v1291 = vpop.f32.mrb[0].mxu0
    %v1292 = vadd.f32 0.0, %v1291
    %v1293 = vpop.f32.mrb[0].mxu0
    %v1294 = vpop.f32.mrb[0].mxu0
    %v1295 = vadd.f32 0.0, %v1294
    %v1296 = vpop.f32.mrb[0].mxu0
    %1297 = vmatprep.mubr.bf16.mxu0 0
    %1298 = vmatmul.mubr.bf16.gmra.mrb[0].mxu0 %v1222
    %v1299 = vpop.f32.mrb[0].mxu0
    %v1300 = vadd.f32 0.0, %v1299
    %v1301 = vpop.f32.mrb[0].mxu0
    %v1302 = vpop.f32.mrb[0].mxu0
    %v1303 = vadd.f32 0.0, %v1302
    %v1304 = vpop.f32.mrb[0].mxu0
    %1305 = vmatprep.mubr.bf16.mxu0 0
    %1306 = vmatmul.mubr.bf16.gmra.mrb[0].mxu0 %v1223
    %v1307 = vpop.f32.mrb[0].mxu0
    %v1308 = vadd.f32 0.0, %v1307
    %v1309 = vpop.f32.mrb[0].mxu0
    %v1310 = vpop.f32.mrb[0].mxu0
    %v1311 = vadd.f32 0.0, %v1310
    %v1312 = vpop.f32.mrb[0].mxu0
    %1313 = vmatprep.mubr.bf16.mxu0 0
    %1314 = vmatmul.mubr.bf16.gmra.mrb[0].mxu0 %v1224
    %v1315 = vpop.f32.mrb[0].mxu0
    %v1316 = vadd.f32 0.0, %v1315
    %v1317 = vpop.f32.mrb[0].mxu0
    %v1318 = vpop.f32.mrb[0].mxu0
    %v1319 = vadd.f32 0.0, %v1318
    %v1320 = vpop.f32.mrb[0].mxu0
    %1321 = vdwg.mxu0
    %v1322 = vld [vmem:[%s5] sm:$0x3]
    %v1324 = vlaneseq
    %v1325 = vshrl.u32 %v1324, 7
    %v1326 = vsub.s32 0, %v1325
    %v1327 = vrot.slane %v1322, %v1326
    %v1328 = vlaneseq
    %v1329 = vshrl.u32 %v1328, 7
    %v1330 = vsub.s32 1, %v1329
    %v1331 = vrot.slane %v1322, %v1330
    %v1334 = vadd.f32 %v863, %v1327
    %v1335 = vadd.f32 %v1260, %v1331
    %v1336 = vadd.f32 %v866, %v1327
    %v1337 = vadd.f32 %v1263, %v1331
    %v1338 = vadd.f32 %v871, %v1327
    %v1339 = vadd.f32 %v1268, %v1331
    %v1340 = vadd.f32 %v874, %v1327
    %v1341 = vadd.f32 %v1271, %v1331
    %v1342 = vadd.f32 %v879, %v1327
    %v1343 = vadd.f32 %v1276, %v1331
    %v1344 = vadd.f32 %v882, %v1327
    %v1345 = vadd.f32 %v1279, %v1331
    %v1346 = vadd.f32 %v887, %v1327
    %v1347 = vadd.f32 %v1284, %v1331
    %v1348 = vadd.f32 %v890, %v1327
    %v1349 = vadd.f32 %v1287, %v1331
    %v1350 = vadd.f32 %v895, %v1327
    %v1351 = vadd.f32 %v1292, %v1331
    %v1352 = vadd.f32 %v898, %v1327
    %v1353 = vadd.f32 %v1295, %v1331
    %v1354 = vadd.f32 %v903, %v1327
    %v1355 = vadd.f32 %v1300, %v1331
    %v1356 = vadd.f32 %v906, %v1327
    %v1357 = vadd.f32 %v1303, %v1331
    %v1358 = vadd.f32 %v911, %v1327
    %v1359 = vadd.f32 %v1308, %v1331
    %v1360 = vadd.f32 %v914, %v1327
    %v1361 = vadd.f32 %v1311, %v1331
    %v1362 = vadd.f32 %v919, %v1327
    %v1363 = vadd.f32 %v1316, %v1331
    %v1364 = vadd.f32 %v922, %v1327
    %v1365 = vadd.f32 %v1319, %v1331
    %v1366 = vmax.f32 %v1334, 0.0
    %v1367 = vmax.f32 %v1335, 0.0
    %v1368 = vmax.f32 %v1336, 0.0
    %v1369 = vmax.f32 %v1337, 0.0
    %v1370 = vmax.f32 %v1338, 0.0
    %v1371 = vmax.f32 %v1339, 0.0
    %v1372 = vmax.f32 %v1340, 0.0
    %v1373 = vmax.f32 %v1341, 0.0
    %v1374 = vmax.f32 %v1342, 0.0
    %v1375 = vmax.f32 %v1343, 0.0
    %v1376 = vmax.f32 %v1344, 0.0
    %v1377 = vmax.f32 %v1345, 0.0
    %v1378 = vmax.f32 %v1346, 0.0
    %v1379 = vmax.f32 %v1347, 0.0
    %v1380 = vmax.f32 %v1348, 0.0
    %v1381 = vmax.f32 %v1349, 0.0
    %v1382 = vmax.f32 %v1350, 0.0
    %v1383 = vmax.f32 %v1351, 0.0
    %v1384 = vmax.f32 %v1352, 0.0
    %v1385 = vmax.f32 %v1353, 0.0
    %v1386 = vmax.f32 %v1354, 0.0
    %v1387 = vmax.f32 %v1355, 0.0
    %v1388 = vmax.f32 %v1356, 0.0
    %v1389 = vmax.f32 %v1357, 0.0
    %v1390 = vmax.f32 %v1358, 0.0
    %v1391 = vmax.f32 %v1359, 0.0
    %v1392 = vmax.f32 %v1360, 0.0
    %v1393 = vmax.f32 %v1361, 0.0
    %v1394 = vmax.f32 %v1362, 0.0
    %v1395 = vmax.f32 %v1363, 0.0
    %v1396 = vmax.f32 %v1364, 0.0
    %v1397 = vmax.f32 %v1365, 0.0
    %v1398 = vld [vmem:[#allocation8] sm:$0xff]
    %v1399 = vld [vmem:[#allocation8 + $0x8] sm:$0xff]
    %v1400 = vld [vmem:[#allocation8 + $0x10] sm:$0xff]
    %v1401 = vld [vmem:[#allocation8 + $0x18] sm:$0xff]
    %v1402 = vld [vmem:[#allocation8 + $0x20] sm:$0xff]
    %v1403 = vld [vmem:[#allocation8 + $0x28] sm:$0xff]
    %v1404 = vld [vmem:[#allocation8 + $0x30] sm:$0xff]
    %v1405 = vld [vmem:[#allocation8 + $0x38] sm:$0xff]
    %v1406 = vld [vmem:[#allocation8 + $0x40] sm:$0xff]
    %v1407 = vld [vmem:[#allocation8 + $0x48] sm:$0xff]
    %v1408 = vld [vmem:[#allocation8 + $0x50] sm:$0xff]
    %v1409 = vld [vmem:[#allocation8 + $0x58] sm:$0xff]
    %v1410 = vld [vmem:[#allocation8 + $0x60] sm:$0xff]
    %v1411 = vld [vmem:[#allocation8 + $0x68] sm:$0xff]
    %v1412 = vld [vmem:[#allocation8 + $0x70] sm:$0xff]
    %v1413 = vld [vmem:[#allocation8 + $0x78] sm:$0xff]
    %v1414 = vld [vmem:[#allocation8 + $0x80] sm:$0xff]
    %v1415 = vld [vmem:[#allocation8 + $0x88] sm:$0xff]
    %v1416 = vld [vmem:[#allocation8 + $0x90] sm:$0xff]
    %v1417 = vld [vmem:[#allocation8 + $0x98] sm:$0xff]
    %v1418 = vld [vmem:[#allocation8 + $0xa0] sm:$0xff]
    %v1419 = vld [vmem:[#allocation8 + $0xa8] sm:$0xff]
    %v1420 = vld [vmem:[#allocation8 + $0xb0] sm:$0xff]
    %v1421 = vld [vmem:[#allocation8 + $0xb8] sm:$0xff]
    %v1422 = vld [vmem:[#allocation8 + $0xc0] sm:$0xff]
    %v1423 = vld [vmem:[#allocation8 + $0xc8] sm:$0xff]
    %v1424 = vld [vmem:[#allocation8 + $0xd0] sm:$0xff]
    %v1425 = vld [vmem:[#allocation8 + $0xd8] sm:$0xff]
    %v1426 = vld [vmem:[#allocation8 + $0xe0] sm:$0xff]
    %v1427 = vld [vmem:[#allocation8 + $0xe8] sm:$0xff]
    %v1428 = vld [vmem:[#allocation8 + $0xf0] sm:$0xff]
    %v1429 = vld [vmem:[#allocation8 + $0xf8] sm:$0xff]
    %v1430 = vpack.c.bf16 %v1368, %v1366
    %v1431 = vpack.c.bf16 %v1369, %v1367
    %v1432 = vpack.c.bf16 %v1372, %v1370
    %v1433 = vpack.c.bf16 %v1373, %v1371
    %v1434 = vpack.c.bf16 %v1376, %v1374
    %v1435 = vpack.c.bf16 %v1377, %v1375
    %v1436 = vpack.c.bf16 %v1380, %v1378
    %v1437 = vpack.c.bf16 %v1381, %v1379
    %v1438 = vpack.c.bf16 %v1384, %v1382
    %v1439 = vpack.c.bf16 %v1385, %v1383
    %v1440 = vpack.c.bf16 %v1388, %v1386
    %v1441 = vpack.c.bf16 %v1389, %v1387
    %v1442 = vpack.c.bf16 %v1392, %v1390
    %v1443 = vpack.c.bf16 %v1393, %v1391
    %v1444 = vpack.c.bf16 %v1396, %v1394
    %v1445 = vpack.c.bf16 %v1397, %v1395
    %v1446 = vpack.c.bf16 %v1399, %v1398
    %v1447 = vpack.c.bf16 %v1401, %v1400
    %v1448 = vpack.c.bf16 %v1403, %v1402
    %v1449 = vpack.c.bf16 %v1405, %v1404
    %v1450 = vpack.c.bf16 %v1407, %v1406
    %v1451 = vpack.c.bf16 %v1409, %v1408
    %v1452 = vpack.c.bf16 %v1411, %v1410
    %v1453 = vpack.c.bf16 %v1413, %v1412
    %v1454 = vpack.c.bf16 %v1415, %v1414
    %v1455 = vpack.c.bf16 %v1417, %v1416
    %v1456 = vpack.c.bf16 %v1419, %v1418
    %v1457 = vpack.c.bf16 %v1421, %v1420
    %v1458 = vpack.c.bf16 %v1423, %v1422
    %v1459 = vpack.c.bf16 %v1425, %v1424
    %v1460 = vpack.c.bf16 %v1427, %v1426
    %v1461 = vpack.c.bf16 %v1429, %v1428
    %1462 = vmatprep.subr.bf16.mxu0 0
    %1463 = vmatpush1.bf16.msra.mxu0 %v1446
    %1464 = vmatprep.subr.bf16.mxu0 0
    %1465 = vmatpush1.bf16.msra.mxu0 %v1447
    %1466 = vmatprep.subr.bf16.mxu0 0
    %1467 = vmatpush1.bf16.msra.mxu0 %v1448
    %1468 = vmatprep.subr.bf16.mxu0 0
    %1469 = vmatpush1.bf16.msra.mxu0 %v1449
    %1470 = vmatprep.subr.bf16.mxu0 0
    %1471 = vmatpush1.bf16.msra.mxu0 %v1450
    %1472 = vmatprep.subr.bf16.mxu0 0
    %1473 = vmatpush1.bf16.msra.mxu0 %v1451
    %1474 = vmatprep.subr.bf16.mxu0 0
    %1475 = vmatpush1.bf16.msra.mxu0 %v1452
    %1476 = vmatprep.subr.bf16.mxu0 0
    %1477 = vmatpush1.bf16.msra.mxu0 %v1453
    %1478 = vmatprep.subr.bf16.mxu0 0
    %1479 = vmatpush1.bf16.msra.mxu0 %v1454
    %1480 = vmatprep.subr.bf16.mxu0 0
    %1481 = vmatpush1.bf16.msra.mxu0 %v1455
    %1482 = vmatprep.subr.bf16.mxu0 0
    %1483 = vmatpush1.bf16.msra.mxu0 %v1456
    %1484 = vmatprep.subr.bf16.mxu0 0
    %1485 = vmatpush1.bf16.msra.mxu0 %v1457
    %1486 = vmatprep.subr.bf16.mxu0 0
    %1487 = vmatpush1.bf16.msra.mxu0 %v1458
    %1488 = vmatprep.subr.bf16.mxu0 0
    %1489 = vmatpush1.bf16.msra.mxu0 %v1459
    %1490 = vmatprep.subr.bf16.mxu0 0
    %1491 = vmatpush1.bf16.msra.mxu0 %v1460
    %1492 = vmatprep.subr.bf16.mxu0 0
    %1493 = vmatpush1.bf16.msra.mxu0 %v1461
    %1494 = vmatprep.mubr.bf16.mxu0 %v1431
    %1495 = vmatmul.mubr.bf16.gmra.mrb[0].mxu0 %v1430
    %v1496 = vpop.f32.mrb[0].mxu0
    %v1497 = vadd.f32 0.0, %v1496
    %v1498 = vpop.f32.mrb[0].mxu0
    %v1499 = vpop.f32.mrb[0].mxu0
    %v1500 = vadd.f32 0.0, %v1499
    %v1501 = vpop.f32.mrb[0].mxu0
    %1502 = vmatprep.mubr.bf16.mxu0 %v1433
    %1503 = vmatmul.mubr.bf16.gmra.mrb[0].mxu0 %v1432
    %v1504 = vpop.f32.mrb[0].mxu0
    %v1505 = vadd.f32 0.0, %v1504
    %v1506 = vpop.f32.mrb[0].mxu0
    %v1507 = vpop.f32.mrb[0].mxu0
    %v1508 = vadd.f32 0.0, %v1507
    %v1509 = vpop.f32.mrb[0].mxu0
    %1510 = vmatprep.mubr.bf16.mxu0 %v1435
    %1511 = vmatmul.mubr.bf16.gmra.mrb[0].mxu0 %v1434
    %v1512 = vpop.f32.mrb[0].mxu0
    %v1513 = vadd.f32 0.0, %v1512
    %v1514 = vpop.f32.mrb[0].mxu0
    %v1515 = vpop.f32.mrb[0].mxu0
    %v1516 = vadd.f32 0.0, %v1515
    %v1517 = vpop.f32.mrb[0].mxu0
    %1518 = vmatprep.mubr.bf16.mxu0 %v1437
    %1519 = vmatmul.mubr.bf16.gmra.mrb[0].mxu0 %v1436
    %v1520 = vpop.f32.mrb[0].mxu0
    %v1521 = vadd.f32 0.0, %v1520
    %v1522 = vpop.f32.mrb[0].mxu0
    %v1523 = vpop.f32.mrb[0].mxu0
    %v1524 = vadd.f32 0.0, %v1523
    %v1525 = vpop.f32.mrb[0].mxu0
    %1526 = vmatprep.mubr.bf16.mxu0 %v1439
    %1527 = vmatmul.mubr.bf16.gmra.mrb[0].mxu0 %v1438
    %v1528 = vpop.f32.mrb[0].mxu0
    %v1529 = vadd.f32 0.0, %v1528
    %v1530 = vpop.f32.mrb[0].mxu0
    %v1531 = vpop.f32.mrb[0].mxu0
    %v1532 = vadd.f32 0.0, %v1531
    %v1533 = vpop.f32.mrb[0].mxu0
    %1534 = vmatprep.mubr.bf16.mxu0 %v1441
    %1535 = vmatmul.mubr.bf16.gmra.mrb[0].mxu0 %v1440
    %v1536 = vpop.f32.mrb[0].mxu0
    %v1537 = vadd.f32 0.0, %v1536
    %v1538 = vpop.f32.mrb[0].mxu0
    %v1539 = vpop.f32.mrb[0].mxu0
    %v1540 = vadd.f32 0.0, %v1539
    %v1541 = vpop.f32.mrb[0].mxu0
    %1542 = vmatprep.mubr.bf16.mxu0 %v1443
    %1543 = vmatmul.mubr.bf16.gmra.mrb[0].mxu0 %v1442
    %v1544 = vpop.f32.mrb[0].mxu0
    %v1545 = vadd.f32 0.0, %v1544
    %v1546 = vpop.f32.mrb[0].mxu0
    %v1547 = vpop.f32.mrb[0].mxu0
    %v1548 = vadd.f32 0.0, %v1547
    %v1549 = vpop.f32.mrb[0].mxu0
    %1550 = vmatprep.mubr.bf16.mxu0 %v1445
    %1551 = vmatmul.mubr.bf16.gmra.mrb[0].mxu0 %v1444
    %v1552 = vpop.f32.mrb[0].mxu0
    %v1553 = vadd.f32 0.0, %v1552
    %v1554 = vpop.f32.mrb[0].mxu0
    %v1555 = vpop.f32.mrb[0].mxu0
    %v1556 = vadd.f32 0.0, %v1555
    %v1557 = vpop.f32.mrb[0].mxu0
    %1558 = vdwg.mxu0
    %v1559 = vld [vmem:[#allocation10] sm:$0xff]
    %v1560 = vld [vmem:[#allocation10 + $0x8] sm:$0xff]
    %v1561 = vld [vmem:[#allocation10 + $0x10] sm:$0xff]
    %v1562 = vld [vmem:[#allocation10 + $0x18] sm:$0xff]
    %v1563 = vld [vmem:[#allocation10 + $0x20] sm:$0xff]
    %v1564 = vld [vmem:[#allocation10 + $0x28] sm:$0xff]
    %v1565 = vld [vmem:[#allocation10 + $0x30] sm:$0xff]
    %v1566 = vld [vmem:[#allocation10 + $0x38] sm:$0xff]
    %v1567 = vld [vmem:[#allocation10 + $0x40] sm:$0xff]
    %v1568 = vld [vmem:[#allocation10 + $0x48] sm:$0xff]
    %v1569 = vld [vmem:[#allocation10 + $0x50] sm:$0xff]
    %v1570 = vld [vmem:[#allocation10 + $0x58] sm:$0xff]
    %v1571 = vld [vmem:[#allocation10 + $0x60] sm:$0xff]
    %v1572 = vld [vmem:[#allocation10 + $0x68] sm:$0xff]
    %v1573 = vld [vmem:[#allocation10 + $0x70] sm:$0xff]
    %v1574 = vld [vmem:[#allocation10 + $0x78] sm:$0xff]
    %v1575 = vpack.c.bf16 %v1500, %v1497
    %v1576 = vpack.c.bf16 %v1508, %v1505
    %v1577 = vpack.c.bf16 %v1516, %v1513
    %v1578 = vpack.c.bf16 %v1524, %v1521
    %v1579 = vpack.c.bf16 %v1532, %v1529
    %v1580 = vpack.c.bf16 %v1540, %v1537
    %v1581 = vpack.c.bf16 %v1548, %v1545
    %v1582 = vpack.c.bf16 %v1556, %v1553
    %v1583 = vpack.c.bf16 %v1560, %v1559
    %v1584 = vpack.c.bf16 %v1562, %v1561
    %v1585 = vpack.c.bf16 %v1564, %v1563
    %v1586 = vpack.c.bf16 %v1566, %v1565
    %v1587 = vpack.c.bf16 %v1568, %v1567
    %v1588 = vpack.c.bf16 %v1570, %v1569
    %v1589 = vpack.c.bf16 %v1572, %v1571
    %v1590 = vpack.c.bf16 %v1574, %v1573
    %1591 = vmatprep.subr.bf16.mxu0 0
    %1592 = vmatpush1.bf16.msra.mxu0 %v1583
    %1593 = vmatprep.subr.bf16.mxu0 0
    %1594 = vmatpush1.bf16.msra.mxu0 %v1584
    %1595 = vmatprep.subr.bf16.mxu0 0
    %1596 = vmatpush1.bf16.msra.mxu0 %v1585
    %1597 = vmatprep.subr.bf16.mxu0 0
    %1598 = vmatpush1.bf16.msra.mxu0 %v1586
    %1599 = vmatprep.subr.bf16.mxu0 0
    %1600 = vmatpush1.bf16.msra.mxu0 %v1587
    %1601 = vmatprep.subr.bf16.mxu0 0
    %1602 = vmatpush1.bf16.msra.mxu0 %v1588
    %1603 = vmatprep.subr.bf16.mxu0 0
    %1604 = vmatpush1.bf16.msra.mxu0 %v1589
    %1605 = vmatprep.subr.bf16.mxu0 0
    %1606 = vmatpush1.bf16.msra.mxu0 %v1590
    %1607 = vmatprep.subr.bf16.mxu0 0
    %1608 = vmatpush1.bf16.msra.mxu0 0
    %1609 = vmatprep.subr.bf16.mxu0 0
    %1610 = vmatpush1.bf16.msra.mxu0 0
    %1611 = vmatprep.subr.bf16.mxu0 0
    %1612 = vmatpush1.bf16.msra.mxu0 0
    %1613 = vmatprep.subr.bf16.mxu0 0
    %1614 = vmatpush1.bf16.msra.mxu0 0
    %1615 = vmatprep.subr.bf16.mxu0 0
    %1616 = vmatpush1.bf16.msra.mxu0 0
    %1617 = vmatprep.subr.bf16.mxu0 0
    %1618 = vmatpush1.bf16.msra.mxu0 0
    %1619 = vmatprep.subr.bf16.mxu0 0
    %1620 = vmatpush1.bf16.msra.mxu0 0
    %1621 = vmatprep.subr.bf16.mxu0 0
    %1622 = vmatpush1.bf16.msra.mxu0 0
    %1623 = vmatprep.mubr.bf16.mxu0 0
    %1624 = vmatmul.mubr.bf16.gmra.mrb[0].mxu0 %v1575
    %v1625 = vpop.f32.mrb[0].mxu0
    %v1626 = vadd.f32 0.0, %v1625
    %v1627 = vpop.f32.mrb[0].mxu0
    %v1628 = vpop.f32.mrb[0].mxu0
    %v1629 = vadd.f32 0.0, %v1628
    %v1630 = vpop.f32.mrb[0].mxu0
    %1631 = vmatprep.mubr.bf16.mxu0 0
    %1632 = vmatmul.mubr.bf16.gmra.mrb[0].mxu0 %v1576
    %v1633 = vpop.f32.mrb[0].mxu0
    %v1634 = vadd.f32 0.0, %v1633
    %v1635 = vpop.f32.mrb[0].mxu0
    %v1636 = vpop.f32.mrb[0].mxu0
    %v1637 = vadd.f32 0.0, %v1636
    %v1638 = vpop.f32.mrb[0].mxu0
    %1639 = vmatprep.mubr.bf16.mxu0 0
    %1640 = vmatmul.mubr.bf16.gmra.mrb[0].mxu0 %v1577
    %v1641 = vpop.f32.mrb[0].mxu0
    %v1642 = vadd.f32 0.0, %v1641
    %v1643 = vpop.f32.mrb[0].mxu0
    %v1644 = vpop.f32.mrb[0].mxu0
    %v1645 = vadd.f32 0.0, %v1644
    %v1646 = vpop.f32.mrb[0].mxu0
    %1647 = vmatprep.mubr.bf16.mxu0 0
    %1648 = vmatmul.mubr.bf16.gmra.mrb[0].mxu0 %v1578
    %v1649 = vpop.f32.mrb[0].mxu0
    %v1650 = vadd.f32 0.0, %v1649
    %v1651 = vpop.f32.mrb[0].mxu0
    %v1652 = vpop.f32.mrb[0].mxu0
    %v1653 = vadd.f32 0.0, %v1652
    %v1654 = vpop.f32.mrb[0].mxu0
    %1655 = vmatprep.mubr.bf16.mxu0 0
    %1656 = vmatmul.mubr.bf16.gmra.mrb[0].mxu0 %v1579
    %v1657 = vpop.f32.mrb[0].mxu0
    %v1658 = vadd.f32 0.0, %v1657
    %v1659 = vpop.f32.mrb[0].mxu0
    %v1660 = vpop.f32.mrb[0].mxu0
    %v1661 = vadd.f32 0.0, %v1660
    %v1662 = vpop.f32.mrb[0].mxu0
    %1663 = vmatprep.mubr.bf16.mxu0 0
    %1664 = vmatmul.mubr.bf16.gmra.mrb[0].mxu0 %v1580
    %v1665 = vpop.f32.mrb[0].mxu0
    %v1666 = vadd.f32 0.0, %v1665
    %v1667 = vpop.f32.mrb[0].mxu0
    %v1668 = vpop.f32.mrb[0].mxu0
    %v1669 = vadd.f32 0.0, %v1668
    %v1670 = vpop.f32.mrb[0].mxu0
    %1671 = vmatprep.mubr.bf16.mxu0 0
    %1672 = vmatmul.mubr.bf16.gmra.mrb[0].mxu0 %v1581
    %v1673 = vpop.f32.mrb[0].mxu0
    %v1674 = vadd.f32 0.0, %v1673
    %v1675 = vpop.f32.mrb[0].mxu0
    %v1676 = vpop.f32.mrb[0].mxu0
    %v1677 = vadd.f32 0.0, %v1676
    %v1678 = vpop.f32.mrb[0].mxu0
    %1679 = vmatprep.mubr.bf16.mxu0 0
    %1680 = vmatmul.mubr.bf16.gmra.mrb[0].mxu0 %v1582
    %v1681 = vpop.f32.mrb[0].mxu0
    %v1682 = vadd.f32 0.0, %v1681
    %v1683 = vpop.f32.mrb[0].mxu0
    %v1684 = vpop.f32.mrb[0].mxu0
    %v1685 = vadd.f32 0.0, %v1684
    %v1686 = vpop.f32.mrb[0].mxu0
    %1687 = vdwg.mxu0
    %1688 = vxpose.xlu0.b32.start [1/16] %v1626, 128
    %1689 = vxpose.xlu0.b32.cont [2/16] %v1629, 128
    %1690 = vxpose.xlu0.b32.cont [3/16] %v1634, 128
    %1691 = vxpose.xlu0.b32.cont [4/16] %v1637, 128
    %1692 = vxpose.xlu0.b32.cont [5/16] %v1642, 128
    %1693 = vxpose.xlu0.b32.cont [6/16] %v1645, 128
    %1694 = vxpose.xlu0.b32.cont [7/16] %v1650, 128
    %1695 = vxpose.xlu0.b32.cont [8/16] %v1653, 128
    %1696 = vxpose.xlu0.b32.cont [9/16] %v1658, 128
    %1697 = vxpose.xlu0.b32.cont [10/16] %v1661, 128
    %1698 = vxpose.xlu0.b32.cont [11/16] %v1666, 128
    %1699 = vxpose.xlu0.b32.cont [12/16] %v1669, 128
    %1700 = vxpose.xlu0.b32.cont [13/16] %v1674, 128
    %1701 = vxpose.xlu0.b32.cont [14/16] %v1677, 128
    %1702 = vxpose.xlu0.b32.cont [15/16] %v1682, 128
    %1703 = vxpose.xlu0.b32.end [16/16] %v1685, 128
    %v1704 = vpop.trf.xlu0
    %v1705 = vpop.trf.xlu0
    %v1706 = vpop.trf.xlu0
    %v1707 = vpop.trf.xlu0
    %v1708 = vpop.trf.xlu0
    %v1709 = vpop.trf.xlu0
    %v1710 = vpop.trf.xlu0
    %v1711 = vpop.trf.xlu0
    %v1712 = vpop.trf.xlu0
    %v1713 = vpop.trf.xlu0
    %v1714 = vpop.trf.xlu0
    %v1715 = vpop.trf.xlu0
    %v1716 = vpop.trf.xlu0
    %v1717 = vpop.trf.xlu0
    %v1718 = vpop.trf.xlu0
    %v1719 = vpop.trf.xlu0
    %1721 = vset.pattern.permute.xlu0 0
    %1722 = vperm.xlu0 %1721, %v1626
    %v1723 = vpop.permute.xlu0 %1722
    %1726 = vset.pattern.permute.xlu0 0
    %1727 = vperm.xlu0 %1726, %v1629
    %v1728 = vpop.permute.xlu0 %1727
    %1731 = vset.pattern.permute.xlu0 0
    %1732 = vperm.xlu0 %1731, %v1634
    %v1733 = vpop.permute.xlu0 %1732
    %1736 = vset.pattern.permute.xlu0 0
    %1737 = vperm.xlu0 %1736, %v1637
    %v1738 = vpop.permute.xlu0 %1737
    %1741 = vset.pattern.permute.xlu0 0
    %1742 = vperm.xlu0 %1741, %v1642
    %v1743 = vpop.permute.xlu0 %1742
    %1746 = vset.pattern.permute.xlu0 0
    %1747 = vperm.xlu0 %1746, %v1645
    %v1748 = vpop.permute.xlu0 %1747
    %1751 = vset.pattern.permute.xlu0 0
    %1752 = vperm.xlu0 %1751, %v1650
    %v1753 = vpop.permute.xlu0 %1752
    %1756 = vset.pattern.permute.xlu0 0
    %1757 = vperm.xlu0 %1756, %v1653
    %v1758 = vpop.permute.xlu0 %1757
    %1761 = vset.pattern.permute.xlu0 0
    %1762 = vperm.xlu0 %1761, %v1658
    %v1763 = vpop.permute.xlu0 %1762
    %1766 = vset.pattern.permute.xlu0 0
    %1767 = vperm.xlu0 %1766, %v1661
    %v1768 = vpop.permute.xlu0 %1767
    %1771 = vset.pattern.permute.xlu0 0
    %1772 = vperm.xlu0 %1771, %v1666
    %v1773 = vpop.permute.xlu0 %1772
    %1776 = vset.pattern.permute.xlu0 0
    %1777 = vperm.xlu0 %1776, %v1669
    %v1778 = vpop.permute.xlu0 %1777
    %1781 = vset.pattern.permute.xlu0 0
    %1782 = vperm.xlu0 %1781, %v1674
    %v1783 = vpop.permute.xlu0 %1782
    %1786 = vset.pattern.permute.xlu0 0
    %1787 = vperm.xlu0 %1786, %v1677
    %v1788 = vpop.permute.xlu0 %1787
    %1791 = vset.pattern.permute.xlu0 0
    %1792 = vperm.xlu0 %1791, %v1682
    %v1793 = vpop.permute.xlu0 %1792
    %1796 = vset.pattern.permute.xlu0 0
    %1797 = vperm.xlu0 %1796, %v1685
    %v1798 = vpop.permute.xlu0 %1797
    %v1800 = vlaneseq
    %v1801 = vshrl.u32 %v1800, 7
    %v1802 = vsub.s32 1, %v1801
    %v1803 = vrot.slane %v1704, %v1802
    %v1804 = vadd.f32 %v1723, %v1803
    %v1805 = vadd.f32 %v1728, %v1803
    %v1806 = vadd.f32 %v1733, %v1803
    %v1807 = vadd.f32 %v1738, %v1803
    %v1808 = vadd.f32 %v1743, %v1803
    %v1809 = vadd.f32 %v1748, %v1803
    %v1810 = vadd.f32 %v1753, %v1803
    %v1811 = vadd.f32 %v1758, %v1803
    %v1812 = vadd.f32 %v1763, %v1803
    %v1813 = vadd.f32 %v1768, %v1803
    %v1814 = vadd.f32 %v1773, %v1803
    %v1815 = vadd.f32 %v1778, %v1803
    %v1816 = vadd.f32 %v1783, %v1803
    %v1817 = vadd.f32 %v1788, %v1803
    %v1818 = vadd.f32 %v1793, %v1803
    %v1819 = vadd.f32 %v1798, %v1803
    %vm1820 = vcmp.gt.f32.partialorder %v1804, 0.0
    %vm1821 = vcmp.gt.f32.partialorder %v1805, 0.0
    %vm1822 = vcmp.gt.f32.partialorder %v1806, 0.0
    %vm1823 = vcmp.gt.f32.partialorder %v1807, 0.0
    %vm1824 = vcmp.gt.f32.partialorder %v1808, 0.0
    %vm1825 = vcmp.gt.f32.partialorder %v1809, 0.0
    %vm1826 = vcmp.gt.f32.partialorder %v1810, 0.0
    %vm1827 = vcmp.gt.f32.partialorder %v1811, 0.0
    %vm1828 = vcmp.gt.f32.partialorder %v1812, 0.0
    %vm1829 = vcmp.gt.f32.partialorder %v1813, 0.0
    %vm1830 = vcmp.gt.f32.partialorder %v1814, 0.0
    %vm1831 = vcmp.gt.f32.partialorder %v1815, 0.0
    %vm1832 = vcmp.gt.f32.partialorder %v1816, 0.0
    %vm1833 = vcmp.gt.f32.partialorder %v1817, 0.0
    %vm1834 = vcmp.gt.f32.partialorder %v1818, 0.0
    %vm1835 = vcmp.gt.f32.partialorder %v1819, 0.0
    %v1836 = vmul.f32 %v1804, 0.2
    %v1837 = vmul.f32 %v1805, 0.2
    %v1838 = vmul.f32 %v1806, 0.2
    %v1839 = vmul.f32 %v1807, 0.2
    %v1840 = vmul.f32 %v1808, 0.2
    %v1841 = vmul.f32 %v1809, 0.2
    %v1842 = vmul.f32 %v1810, 0.2
    %v1843 = vmul.f32 %v1811, 0.2
    %v1844 = vmul.f32 %v1812, 0.2
    %v1845 = vmul.f32 %v1813, 0.2
    %v1846 = vmul.f32 %v1814, 0.2
    %v1847 = vmul.f32 %v1815, 0.2
    %v1848 = vmul.f32 %v1816, 0.2
    %v1849 = vmul.f32 %v1817, 0.2
    %v1850 = vmul.f32 %v1818, 0.2
    %v1851 = vmul.f32 %v1819, 0.2
    %v1852 = vsel %vm1820, %v1804, %v1836
    %v1853 = vsel %vm1821, %v1805, %v1837
    %v1854 = vsel %vm1822, %v1806, %v1838
    %v1855 = vsel %vm1823, %v1807, %v1839
    %v1856 = vsel %vm1824, %v1808, %v1840
    %v1857 = vsel %vm1825, %v1809, %v1841
    %v1858 = vsel %vm1826, %v1810, %v1842
    %v1859 = vsel %vm1827, %v1811, %v1843
    %v1860 = vsel %vm1828, %v1812, %v1844
    %v1861 = vsel %vm1829, %v1813, %v1845
    %v1862 = vsel %vm1830, %v1814, %v1846
    %v1863 = vsel %vm1831, %v1815, %v1847
    %v1864 = vsel %vm1832, %v1816, %v1848
    %v1865 = vsel %vm1833, %v1817, %v1849
    %v1866 = vsel %vm1834, %v1818, %v1850
    %v1867 = vsel %vm1835, %v1819, %v1851
    %v1868 = vsel %vm118, %v1852, -1e+30
    %v1869 = vsel %vm119, %v1853, -1e+30
    %v1870 = vsel %vm120, %v1854, -1e+30
    %v1871 = vsel %vm121, %v1855, -1e+30
    %v1872 = vsel %vm122, %v1856, -1e+30
    %v1873 = vsel %vm123, %v1857, -1e+30
    %v1874 = vsel %vm124, %v1858, -1e+30
    %v1875 = vsel %vm125, %v1859, -1e+30
    %v1876 = vsel %vm126, %v1860, -1e+30
    %v1877 = vsel %vm127, %v1861, -1e+30
    %v1878 = vsel %vm128, %v1862, -1e+30
    %v1879 = vsel %vm129, %v1863, -1e+30
    %v1880 = vsel %vm130, %v1864, -1e+30
    %v1881 = vsel %vm131, %v1865, -1e+30
    %v1882 = vsel %vm132, %v1866, -1e+30
    %v1883 = vsel %vm133, %v1867, -1e+30
    %1884 = vmax.xlane.f32.xlu0 %v1868
    %v1885 = vpop.xlane.xlu0 %1884
    %1886 = vmax.xlane.f32.xlu0 %v1869
    %v1887 = vpop.xlane.xlu0 %1886
    %1888 = vmax.xlane.f32.xlu0 %v1870
    %v1889 = vpop.xlane.xlu0 %1888
    %1890 = vmax.xlane.f32.xlu0 %v1871
    %v1891 = vpop.xlane.xlu0 %1890
    %1892 = vmax.xlane.f32.xlu0 %v1872
    %v1893 = vpop.xlane.xlu0 %1892
    %1894 = vmax.xlane.f32.xlu0 %v1873
    %v1895 = vpop.xlane.xlu0 %1894
    %1896 = vmax.xlane.f32.xlu0 %v1874
    %v1897 = vpop.xlane.xlu0 %1896
    %1898 = vmax.xlane.f32.xlu0 %v1875
    %v1899 = vpop.xlane.xlu0 %1898
    %1900 = vmax.xlane.f32.xlu0 %v1876
    %v1901 = vpop.xlane.xlu0 %1900
    %1902 = vmax.xlane.f32.xlu0 %v1877
    %v1903 = vpop.xlane.xlu0 %1902
    %1904 = vmax.xlane.f32.xlu0 %v1878
    %v1905 = vpop.xlane.xlu0 %1904
    %1906 = vmax.xlane.f32.xlu0 %v1879
    %v1907 = vpop.xlane.xlu0 %1906
    %1908 = vmax.xlane.f32.xlu0 %v1880
    %v1909 = vpop.xlane.xlu0 %1908
    %1910 = vmax.xlane.f32.xlu0 %v1881
    %v1911 = vpop.xlane.xlu0 %1910
    %1912 = vmax.xlane.f32.xlu0 %v1882
    %v1913 = vpop.xlane.xlu0 %1912
    %1914 = vmax.xlane.f32.xlu0 %v1883
    %v1915 = vpop.xlane.xlu0 %1914
    %v1916 = vsub.f32 %v1868, %v1885
    %v1917 = vsub.f32 %v1869, %v1887
    %v1918 = vsub.f32 %v1870, %v1889
    %v1919 = vsub.f32 %v1871, %v1891
    %v1920 = vsub.f32 %v1872, %v1893
    %v1921 = vsub.f32 %v1873, %v1895
    %v1922 = vsub.f32 %v1874, %v1897
    %v1923 = vsub.f32 %v1875, %v1899
    %v1924 = vsub.f32 %v1876, %v1901
    %v1925 = vsub.f32 %v1877, %v1903
    %v1926 = vsub.f32 %v1878, %v1905
    %v1927 = vsub.f32 %v1879, %v1907
    %v1928 = vsub.f32 %v1880, %v1909
    %v1929 = vsub.f32 %v1881, %v1911
    %v1930 = vsub.f32 %v1882, %v1913
    %v1931 = vsub.f32 %v1883, %v1915
    %v1932 = vmul.f32 %v1916, 1.442695
    %v1933 = vpow.pop %v1932
    %v1934 = vmul.f32 %v1917, 1.442695
    %v1935 = vpow.pop %v1934
    %v1936 = vmul.f32 %v1918, 1.442695
    %v1937 = vpow.pop %v1936
    %v1938 = vmul.f32 %v1919, 1.442695
    %v1939 = vpow.pop %v1938
    %v1940 = vmul.f32 %v1920, 1.442695
    %v1941 = vpow.pop %v1940
    %v1942 = vmul.f32 %v1921, 1.442695
    %v1943 = vpow.pop %v1942
    %v1944 = vmul.f32 %v1922, 1.442695
    %v1945 = vpow.pop %v1944
    %v1946 = vmul.f32 %v1923, 1.442695
    %v1947 = vpow.pop %v1946
    %v1948 = vmul.f32 %v1924, 1.442695
    %v1949 = vpow.pop %v1948
    %v1950 = vmul.f32 %v1925, 1.442695
    %v1951 = vpow.pop %v1950
    %v1952 = vmul.f32 %v1926, 1.442695
    %v1953 = vpow.pop %v1952
    %v1954 = vmul.f32 %v1927, 1.442695
    %v1955 = vpow.pop %v1954
    %v1956 = vmul.f32 %v1928, 1.442695
    %v1957 = vpow.pop %v1956
    %v1958 = vmul.f32 %v1929, 1.442695
    %v1959 = vpow.pop %v1958
    %v1960 = vmul.f32 %v1930, 1.442695
    %v1961 = vpow.pop %v1960
    %v1962 = vmul.f32 %v1931, 1.442695
    %v1963 = vpow.pop %v1962
    %1964 = vadd.xlane.f32.xlu0 %v1933
    %v1965 = vpop.xlane.xlu0 %1964
    %1966 = vadd.xlane.f32.xlu0 %v1935
    %v1967 = vpop.xlane.xlu0 %1966
    %1968 = vadd.xlane.f32.xlu0 %v1937
    %v1969 = vpop.xlane.xlu0 %1968
    %1970 = vadd.xlane.f32.xlu0 %v1939
    %v1971 = vpop.xlane.xlu0 %1970
    %1972 = vadd.xlane.f32.xlu0 %v1941
    %v1973 = vpop.xlane.xlu0 %1972
    %1974 = vadd.xlane.f32.xlu0 %v1943
    %v1975 = vpop.xlane.xlu0 %1974
    %1976 = vadd.xlane.f32.xlu0 %v1945
    %v1977 = vpop.xlane.xlu0 %1976
    %1978 = vadd.xlane.f32.xlu0 %v1947
    %v1979 = vpop.xlane.xlu0 %1978
    %1980 = vadd.xlane.f32.xlu0 %v1949
    %v1981 = vpop.xlane.xlu0 %1980
    %1982 = vadd.xlane.f32.xlu0 %v1951
    %v1983 = vpop.xlane.xlu0 %1982
    %1984 = vadd.xlane.f32.xlu0 %v1953
    %v1985 = vpop.xlane.xlu0 %1984
    %1986 = vadd.xlane.f32.xlu0 %v1955
    %v1987 = vpop.xlane.xlu0 %1986
    %1988 = vadd.xlane.f32.xlu0 %v1957
    %v1989 = vpop.xlane.xlu0 %1988
    %1990 = vadd.xlane.f32.xlu0 %v1959
    %v1991 = vpop.xlane.xlu0 %1990
    %1992 = vadd.xlane.f32.xlu0 %v1961
    %v1993 = vpop.xlane.xlu0 %1992
    %1994 = vadd.xlane.f32.xlu0 %v1963
    %v1995 = vpop.xlane.xlu0 %1994
    %v1996 = vrcp.pop %v1965
    %v1997 = vrcp.pop %v1967
    %v1998 = vrcp.pop %v1969
    %v1999 = vrcp.pop %v1971
    %v2000 = vrcp.pop %v1973
    %v2001 = vrcp.pop %v1975
    %v2002 = vrcp.pop %v1977
    %v2003 = vrcp.pop %v1979
    %v2004 = vrcp.pop %v1981
    %v2005 = vrcp.pop %v1983
    %v2006 = vrcp.pop %v1985
    %v2007 = vrcp.pop %v1987
    %v2008 = vrcp.pop %v1989
    %v2009 = vrcp.pop %v1991
    %v2010 = vrcp.pop %v1993
    %v2011 = vrcp.pop %v1995
    %v2012 = vmul.f32 %v1933, %v1996
    %v2013 = vmul.f32 %v1935, %v1997
    %v2014 = vmul.f32 %v1937, %v1998
    %v2015 = vmul.f32 %v1939, %v1999
    %v2016 = vmul.f32 %v1941, %v2000
    %v2017 = vmul.f32 %v1943, %v2001
    %v2018 = vmul.f32 %v1945, %v2002
    %v2019 = vmul.f32 %v1947, %v2003
    %v2020 = vmul.f32 %v1949, %v2004
    %v2021 = vmul.f32 %v1951, %v2005
    %v2022 = vmul.f32 %v1953, %v2006
    %v2023 = vmul.f32 %v1955, %v2007
    %v2024 = vmul.f32 %v1957, %v2008
    %v2025 = vmul.f32 %v1959, %v2009
    %v2026 = vmul.f32 %v1961, %v2010
    %v2027 = vmul.f32 %v1963, %v2011
    %v2028 = vpack.c.bf16 %v2013, %v2012
    %v2029 = vpack.c.bf16 %v2015, %v2014
    %v2030 = vpack.c.bf16 %v2017, %v2016
    %v2031 = vpack.c.bf16 %v2019, %v2018
    %v2032 = vpack.c.bf16 %v2021, %v2020
    %v2033 = vpack.c.bf16 %v2023, %v2022
    %v2034 = vpack.c.bf16 %v2025, %v2024
    %v2035 = vpack.c.bf16 %v2027, %v2026
    %v2036 = vld [vmem:[%s8] sm:$0x1]
    %v2038 = vlaneseq
    %v2039 = vshrl.u32 %v2038, 7
    %v2040 = vsub.s32 0, %v2039
    %v2041 = vrot.slane %v2036, %v2040
    %2043 = vmatprep.subr.bf16.mxu0 0
    %2044 = vmatpush1.bf16.msra.mxu0 %v1575
    %2045 = vmatprep.subr.bf16.mxu0 0
    %2046 = vmatpush1.bf16.msra.mxu0 %v1576
    %2047 = vmatprep.subr.bf16.mxu0 0
    %2048 = vmatpush1.bf16.msra.mxu0 %v1577
    %2049 = vmatprep.subr.bf16.mxu0 0
    %2050 = vmatpush1.bf16.msra.mxu0 %v1578
    %2051 = vmatprep.subr.bf16.mxu0 0
    %2052 = vmatpush1.bf16.msra.mxu0 %v1579
    %2053 = vmatprep.subr.bf16.mxu0 0
    %2054 = vmatpush1.bf16.msra.mxu0 %v1580
    %2055 = vmatprep.subr.bf16.mxu0 0
    %2056 = vmatpush1.bf16.msra.mxu0 %v1581
    %2057 = vmatprep.subr.bf16.mxu0 0
    %2058 = vmatpush1.bf16.msra.mxu0 %v1582
    %2059 = vmatprep.subr.bf16.mxu0 0
    %2060 = vmatpush1.bf16.msra.mxu0 0
    %2061 = vmatprep.subr.bf16.mxu0 0
    %2062 = vmatpush1.bf16.msra.mxu0 0
    %2063 = vmatprep.subr.bf16.mxu0 0
    %2064 = vmatpush1.bf16.msra.mxu0 0
    %2065 = vmatprep.subr.bf16.mxu0 0
    %2066 = vmatpush1.bf16.msra.mxu0 0
    %2067 = vmatprep.subr.bf16.mxu0 0
    %2068 = vmatpush1.bf16.msra.mxu0 0
    %2069 = vmatprep.subr.bf16.mxu0 0
    %2070 = vmatpush1.bf16.msra.mxu0 0
    %2071 = vmatprep.subr.bf16.mxu0 0
    %2072 = vmatpush1.bf16.msra.mxu0 0
    %2073 = vmatprep.subr.bf16.mxu0 0
    %2074 = vmatpush1.bf16.msra.mxu0 0
    %2075 = vmatprep.mubr.bf16.mxu0 0
    %2076 = vmatmul.mubr.bf16.gmra.mrb[0].mxu0 %v2028
    %v2077 = vpop.f32.mrb[0].mxu0
    %v2078 = vadd.f32 %v2041, %v2077
    %v2079 = vpop.f32.mrb[0].mxu0
    %v2080 = vpop.f32.mrb[0].mxu0
    %v2081 = vadd.f32 %v2041, %v2080
    %v2082 = vpop.f32.mrb[0].mxu0
    %2083 = vmatprep.mubr.bf16.mxu0 0
    %2084 = vmatmul.mubr.bf16.gmra.mrb[0].mxu0 %v2029
    %v2085 = vpop.f32.mrb[0].mxu0
    %v2086 = vadd.f32 %v2041, %v2085
    %v2087 = vpop.f32.mrb[0].mxu0
    %v2088 = vpop.f32.mrb[0].mxu0
    %v2089 = vadd.f32 %v2041, %v2088
    %v2090 = vpop.f32.mrb[0].mxu0
    %2091 = vmatprep.mubr.bf16.mxu0 0
    %2092 = vmatmul.mubr.bf16.gmra.mrb[0].mxu0 %v2030
    %v2093 = vpop.f32.mrb[0].mxu0
    %v2094 = vadd.f32 %v2041, %v2093
    %v2095 = vpop.f32.mrb[0].mxu0
    %v2096 = vpop.f32.mrb[0].mxu0
    %v2097 = vadd.f32 %v2041, %v2096
    %v2098 = vpop.f32.mrb[0].mxu0
    %2099 = vmatprep.mubr.bf16.mxu0 0
    %2100 = vmatmul.mubr.bf16.gmra.mrb[0].mxu0 %v2031
    %v2101 = vpop.f32.mrb[0].mxu0
    %v2102 = vadd.f32 %v2041, %v2101
    %v2103 = vpop.f32.mrb[0].mxu0
    %v2104 = vpop.f32.mrb[0].mxu0
    %v2105 = vadd.f32 %v2041, %v2104
    %v2106 = vpop.f32.mrb[0].mxu0
    %2107 = vmatprep.mubr.bf16.mxu0 0
    %2108 = vmatmul.mubr.bf16.gmra.mrb[0].mxu0 %v2032
    %v2109 = vpop.f32.mrb[0].mxu0
    %v2110 = vadd.f32 %v2041, %v2109
    %v2111 = vpop.f32.mrb[0].mxu0
    %v2112 = vpop.f32.mrb[0].mxu0
    %v2113 = vadd.f32 %v2041, %v2112
    %v2114 = vpop.f32.mrb[0].mxu0
    %2115 = vmatprep.mubr.bf16.mxu0 0
    %2116 = vmatmul.mubr.bf16.gmra.mrb[0].mxu0 %v2033
    %v2117 = vpop.f32.mrb[0].mxu0
    %v2118 = vadd.f32 %v2041, %v2117
    %v2119 = vpop.f32.mrb[0].mxu0
    %v2120 = vpop.f32.mrb[0].mxu0
    %v2121 = vadd.f32 %v2041, %v2120
    %v2122 = vpop.f32.mrb[0].mxu0
    %2123 = vmatprep.mubr.bf16.mxu0 0
    %2124 = vmatmul.mubr.bf16.gmra.mrb[0].mxu0 %v2034
    %v2125 = vpop.f32.mrb[0].mxu0
    %v2126 = vadd.f32 %v2041, %v2125
    %v2127 = vpop.f32.mrb[0].mxu0
    %v2128 = vpop.f32.mrb[0].mxu0
    %v2129 = vadd.f32 %v2041, %v2128
    %v2130 = vpop.f32.mrb[0].mxu0
    %2131 = vmatprep.mubr.bf16.mxu0 0
    %2132 = vmatmul.mubr.bf16.gmra.mrb[0].mxu0 %v2035
    %v2133 = vpop.f32.mrb[0].mxu0
    %v2134 = vadd.f32 %v2041, %v2133
    %v2135 = vpop.f32.mrb[0].mxu0
    %v2136 = vpop.f32.mrb[0].mxu0
    %v2137 = vadd.f32 %v2041, %v2136
    %v2138 = vpop.f32.mrb[0].mxu0
    %2139 = vdwg.mxu0
    %v2140 = vld [vmem:[%s2] sm:$0xff]
    %v2141 = vld [vmem:[%s2 + $0x8] sm:$0xff]
    %v2142 = vld [vmem:[%s2 + $0x10] sm:$0xff]
    %v2143 = vld [vmem:[%s2 + $0x18] sm:$0xff]
    %v2144 = vld [vmem:[%s2 + $0x20] sm:$0xff]
    %v2145 = vld [vmem:[%s2 + $0x28] sm:$0xff]
    %v2146 = vld [vmem:[%s2 + $0x30] sm:$0xff]
    %v2147 = vld [vmem:[%s2 + $0x38] sm:$0xff]
    %v2148 = vld [vmem:[%s2 + $0x40] sm:$0xff]
    %v2149 = vld [vmem:[%s2 + $0x48] sm:$0xff]
    %v2150 = vld [vmem:[%s2 + $0x50] sm:$0xff]
    %v2151 = vld [vmem:[%s2 + $0x58] sm:$0xff]
    %v2152 = vld [vmem:[%s2 + $0x60] sm:$0xff]
    %v2153 = vld [vmem:[%s2 + $0x68] sm:$0xff]
    %v2154 = vld [vmem:[%s2 + $0x70] sm:$0xff]
    %v2155 = vld [vmem:[%s2 + $0x78] sm:$0xff]
    %vm2156 = vcmp.gt.f32.partialorder %v2140, 0.0
    %vm2157 = vcmp.gt.f32.partialorder %v2141, 0.0
    %vm2158 = vcmp.gt.f32.partialorder %v2142, 0.0
    %vm2159 = vcmp.gt.f32.partialorder %v2143, 0.0
    %vm2160 = vcmp.gt.f32.partialorder %v2144, 0.0
    %vm2161 = vcmp.gt.f32.partialorder %v2145, 0.0
    %vm2162 = vcmp.gt.f32.partialorder %v2146, 0.0
    %vm2163 = vcmp.gt.f32.partialorder %v2147, 0.0
    %vm2164 = vcmp.gt.f32.partialorder %v2148, 0.0
    %vm2165 = vcmp.gt.f32.partialorder %v2149, 0.0
    %vm2166 = vcmp.gt.f32.partialorder %v2150, 0.0
    %vm2167 = vcmp.gt.f32.partialorder %v2151, 0.0
    %vm2168 = vcmp.gt.f32.partialorder %v2152, 0.0
    %vm2169 = vcmp.gt.f32.partialorder %v2153, 0.0
    %vm2170 = vcmp.gt.f32.partialorder %v2154, 0.0
    %vm2171 = vcmp.gt.f32.partialorder %v2155, 0.0
    %v2172 = vsel %vm2156, 1, 0
    %v2173 = vsel %vm2157, 1, 0
    %v2174 = vsel %vm2158, 1, 0
    %v2175 = vsel %vm2159, 1, 0
    %v2176 = vsel %vm2160, 1, 0
    %v2177 = vsel %vm2161, 1, 0
    %v2178 = vsel %vm2162, 1, 0
    %v2179 = vsel %vm2163, 1, 0
    %v2180 = vsel %vm2164, 1, 0
    %v2181 = vsel %vm2165, 1, 0
    %v2182 = vsel %vm2166, 1, 0
    %v2183 = vsel %vm2167, 1, 0
    %v2184 = vsel %vm2168, 1, 0
    %v2185 = vsel %vm2169, 1, 0
    %v2186 = vsel %vm2170, 1, 0
    %v2187 = vsel %vm2171, 1, 0
    %2188 = vset.pattern.permute.xlu0 0
    %2189 = vperm.xlu0 %2188, %v2172
    %v2190 = vpop.permute.xlu0 %2189
    %2191 = vset.pattern.permute.xlu0 0
    %2192 = vperm.xlu0 %2191, %v2173
    %v2193 = vpop.permute.xlu0 %2192
    %2194 = vset.pattern.permute.xlu0 0
    %2195 = vperm.xlu0 %2194, %v2174
    %v2196 = vpop.permute.xlu0 %2195
    %2197 = vset.pattern.permute.xlu0 0
    %2198 = vperm.xlu0 %2197, %v2175
    %v2199 = vpop.permute.xlu0 %2198
    %2200 = vset.pattern.permute.xlu0 0
    %2201 = vperm.xlu0 %2200, %v2176
    %v2202 = vpop.permute.xlu0 %2201
    %2203 = vset.pattern.permute.xlu0 0
    %2204 = vperm.xlu0 %2203, %v2177
    %v2205 = vpop.permute.xlu0 %2204
    %2206 = vset.pattern.permute.xlu0 0
    %2207 = vperm.xlu0 %2206, %v2178
    %v2208 = vpop.permute.xlu0 %2207
    %2209 = vset.pattern.permute.xlu0 0
    %2210 = vperm.xlu0 %2209, %v2179
    %v2211 = vpop.permute.xlu0 %2210
    %2212 = vset.pattern.permute.xlu0 0
    %2213 = vperm.xlu0 %2212, %v2180
    %v2214 = vpop.permute.xlu0 %2213
    %2215 = vset.pattern.permute.xlu0 0
    %2216 = vperm.xlu0 %2215, %v2181
    %v2217 = vpop.permute.xlu0 %2216
    %2218 = vset.pattern.permute.xlu0 0
    %2219 = vperm.xlu0 %2218, %v2182
    %v2220 = vpop.permute.xlu0 %2219
    %2221 = vset.pattern.permute.xlu0 0
    %2222 = vperm.xlu0 %2221, %v2183
    %v2223 = vpop.permute.xlu0 %2222
    %2224 = vset.pattern.permute.xlu0 0
    %2225 = vperm.xlu0 %2224, %v2184
    %v2226 = vpop.permute.xlu0 %2225
    %2227 = vset.pattern.permute.xlu0 0
    %2228 = vperm.xlu0 %2227, %v2185
    %v2229 = vpop.permute.xlu0 %2228
    %2230 = vset.pattern.permute.xlu0 0
    %2231 = vperm.xlu0 %2230, %v2186
    %v2232 = vpop.permute.xlu0 %2231
    %2233 = vset.pattern.permute.xlu0 0
    %2234 = vperm.xlu0 %2233, %v2187
    %v2235 = vpop.permute.xlu0 %2234
    %vm2236 = vcmp.eq.s32.totalorder %v2190, 1
    %vm2237 = vcmp.eq.s32.totalorder %v2193, 1
    %vm2238 = vcmp.eq.s32.totalorder %v2196, 1
    %vm2239 = vcmp.eq.s32.totalorder %v2199, 1
    %vm2240 = vcmp.eq.s32.totalorder %v2202, 1
    %vm2241 = vcmp.eq.s32.totalorder %v2205, 1
    %vm2242 = vcmp.eq.s32.totalorder %v2208, 1
    %vm2243 = vcmp.eq.s32.totalorder %v2211, 1
    %vm2244 = vcmp.eq.s32.totalorder %v2214, 1
    %vm2245 = vcmp.eq.s32.totalorder %v2217, 1
    %vm2246 = vcmp.eq.s32.totalorder %v2220, 1
    %vm2247 = vcmp.eq.s32.totalorder %v2223, 1
    %vm2248 = vcmp.eq.s32.totalorder %v2226, 1
    %vm2249 = vcmp.eq.s32.totalorder %v2229, 1
    %vm2250 = vcmp.eq.s32.totalorder %v2232, 1
    %vm2251 = vcmp.eq.s32.totalorder %v2235, 1
    %v2252 = vsel %vm2236, %v2078, -1e+30
    %v2253 = vsel %vm2237, %v2081, -1e+30
    %v2254 = vsel %vm2238, %v2086, -1e+30
    %v2255 = vsel %vm2239, %v2089, -1e+30
    %v2256 = vsel %vm2240, %v2094, -1e+30
    %v2257 = vsel %vm2241, %v2097, -1e+30
    %v2258 = vsel %vm2242, %v2102, -1e+30
    %v2259 = vsel %vm2243, %v2105, -1e+30
    %v2260 = vsel %vm2244, %v2110, -1e+30
    %v2261 = vsel %vm2245, %v2113, -1e+30
    %v2262 = vsel %vm2246, %v2118, -1e+30
    %v2263 = vsel %vm2247, %v2121, -1e+30
    %v2264 = vsel %vm2248, %v2126, -1e+30
    %v2265 = vsel %vm2249, %v2129, -1e+30
    %v2266 = vsel %vm2250, %v2134, -1e+30
    %v2267 = vsel %vm2251, %v2137, -1e+30
    %v2268 = vmax.f32 %v2252, %v2256
    %v2269 = vmax.f32 %v2253, %v2257
    %v2270 = vmax.f32 %v2254, %v2258
    %v2271 = vmax.f32 %v2255, %v2259
    %v2272 = vmax.f32 %v2268, %v2260
    %v2273 = vmax.f32 %v2269, %v2261
    %v2274 = vmax.f32 %v2270, %v2262
    %v2275 = vmax.f32 %v2271, %v2263
    %v2276 = vmax.f32 %v2272, %v2264
    %v2277 = vmax.f32 %v2273, %v2265
    %v2278 = vmax.f32 %v2274, %v2266
    %v2279 = vmax.f32 %v2275, %v2267
    %v2280 = vmax.f32 %v2276, %v2277
    %v2281 = vmax.f32 %v2278, %v2279
    %v2282 = vmax.f32 %v2280, %v2281
    %v2283 = vrot.slane %v2282, 4
    %v2284 = vmax.f32 %v2282, %v2283
    %v2285 = vrot.slane %v2284, 2
    %v2286 = vmax.f32 %v2284, %v2285
    %v2287 = vrot.slane %v2286, 1
    %v2288 = vmax.f32 %v2286, %v2287
    %2289 = vset.pattern.permute.xlu0 1
    %2290 = vperm.xlu0 %2289, %v2172
    %v2291 = vpop.permute.xlu0 %2290
    %2292 = vset.pattern.permute.xlu0 1
    %2293 = vperm.xlu0 %2292, %v2173
    %v2294 = vpop.permute.xlu0 %2293
    %2295 = vset.pattern.permute.xlu0 1
    %2296 = vperm.xlu0 %2295, %v2174
    %v2297 = vpop.permute.xlu0 %2296
    %2298 = vset.pattern.permute.xlu0 1
    %2299 = vperm.xlu0 %2298, %v2175
    %v2300 = vpop.permute.xlu0 %2299
    %2301 = vset.pattern.permute.xlu0 1
    %2302 = vperm.xlu0 %2301, %v2176
    %v2303 = vpop.permute.xlu0 %2302
    %2304 = vset.pattern.permute.xlu0 1
    %2305 = vperm.xlu0 %2304, %v2177
    %v2306 = vpop.permute.xlu0 %2305
    %2307 = vset.pattern.permute.xlu0 1
    %2308 = vperm.xlu0 %2307, %v2178
    %v2309 = vpop.permute.xlu0 %2308
    %2310 = vset.pattern.permute.xlu0 1
    %2311 = vperm.xlu0 %2310, %v2179
    %v2312 = vpop.permute.xlu0 %2311
    %2313 = vset.pattern.permute.xlu0 1
    %2314 = vperm.xlu0 %2313, %v2180
    %v2315 = vpop.permute.xlu0 %2314
    %2316 = vset.pattern.permute.xlu0 1
    %2317 = vperm.xlu0 %2316, %v2181
    %v2318 = vpop.permute.xlu0 %2317
    %2319 = vset.pattern.permute.xlu0 1
    %2320 = vperm.xlu0 %2319, %v2182
    %v2321 = vpop.permute.xlu0 %2320
    %2322 = vset.pattern.permute.xlu0 1
    %2323 = vperm.xlu0 %2322, %v2183
    %v2324 = vpop.permute.xlu0 %2323
    %2325 = vset.pattern.permute.xlu0 1
    %2326 = vperm.xlu0 %2325, %v2184
    %v2327 = vpop.permute.xlu0 %2326
    %2328 = vset.pattern.permute.xlu0 1
    %2329 = vperm.xlu0 %2328, %v2185
    %v2330 = vpop.permute.xlu0 %2329
    %2331 = vset.pattern.permute.xlu0 1
    %2332 = vperm.xlu0 %2331, %v2186
    %v2333 = vpop.permute.xlu0 %2332
    %2334 = vset.pattern.permute.xlu0 1
    %2335 = vperm.xlu0 %2334, %v2187
    %v2336 = vpop.permute.xlu0 %2335
    %vm2337 = vcmp.eq.s32.totalorder %v2291, 1
    %vm2338 = vcmp.eq.s32.totalorder %v2294, 1
    %vm2339 = vcmp.eq.s32.totalorder %v2297, 1
    %vm2340 = vcmp.eq.s32.totalorder %v2300, 1
    %vm2341 = vcmp.eq.s32.totalorder %v2303, 1
    %vm2342 = vcmp.eq.s32.totalorder %v2306, 1
    %vm2343 = vcmp.eq.s32.totalorder %v2309, 1
    %vm2344 = vcmp.eq.s32.totalorder %v2312, 1
    %vm2345 = vcmp.eq.s32.totalorder %v2315, 1
    %vm2346 = vcmp.eq.s32.totalorder %v2318, 1
    %vm2347 = vcmp.eq.s32.totalorder %v2321, 1
    %vm2348 = vcmp.eq.s32.totalorder %v2324, 1
    %vm2349 = vcmp.eq.s32.totalorder %v2327, 1
    %vm2350 = vcmp.eq.s32.totalorder %v2330, 1
    %vm2351 = vcmp.eq.s32.totalorder %v2333, 1
    %vm2352 = vcmp.eq.s32.totalorder %v2336, 1
    %v2353 = vsel %vm2337, %v2078, -1e+30
    %v2354 = vsel %vm2338, %v2081, -1e+30
    %v2355 = vsel %vm2339, %v2086, -1e+30
    %v2356 = vsel %vm2340, %v2089, -1e+30
    %v2357 = vsel %vm2341, %v2094, -1e+30
    %v2358 = vsel %vm2342, %v2097, -1e+30
    %v2359 = vsel %vm2343, %v2102, -1e+30
    %v2360 = vsel %vm2344, %v2105, -1e+30
    %v2361 = vsel %vm2345, %v2110, -1e+30
    %v2362 = vsel %vm2346, %v2113, -1e+30
    %v2363 = vsel %vm2347, %v2118, -1e+30
    %v2364 = vsel %vm2348, %v2121, -1e+30
    %v2365 = vsel %vm2349, %v2126, -1e+30
    %v2366 = vsel %vm2350, %v2129, -1e+30
    %v2367 = vsel %vm2351, %v2134, -1e+30
    %v2368 = vsel %vm2352, %v2137, -1e+30
    %v2369 = vmax.f32 %v2353, %v2357
    %v2370 = vmax.f32 %v2354, %v2358
    %v2371 = vmax.f32 %v2355, %v2359
    %v2372 = vmax.f32 %v2356, %v2360
    %v2373 = vmax.f32 %v2369, %v2361
    %v2374 = vmax.f32 %v2370, %v2362
    %v2375 = vmax.f32 %v2371, %v2363
    %v2376 = vmax.f32 %v2372, %v2364
    %v2377 = vmax.f32 %v2373, %v2365
    %v2378 = vmax.f32 %v2374, %v2366
    %v2379 = vmax.f32 %v2375, %v2367
    %v2380 = vmax.f32 %v2376, %v2368
    %v2381 = vmax.f32 %v2377, %v2378
    %v2382 = vmax.f32 %v2379, %v2380
    %v2383 = vmax.f32 %v2381, %v2382
    %v2384 = vrot.slane %v2383, 4
    %v2385 = vmax.f32 %v2383, %v2384
    %v2386 = vrot.slane %v2385, 2
    %v2387 = vmax.f32 %v2385, %v2386
    %v2388 = vrot.slane %v2387, 1
    %v2389 = vmax.f32 %v2387, %v2388
    %2390 = vset.pattern.permute.xlu0 2
    %2391 = vperm.xlu0 %2390, %v2172
    %v2392 = vpop.permute.xlu0 %2391
    %2393 = vset.pattern.permute.xlu0 2
    %2394 = vperm.xlu0 %2393, %v2173
    %v2395 = vpop.permute.xlu0 %2394
    %2396 = vset.pattern.permute.xlu0 2
    %2397 = vperm.xlu0 %2396, %v2174
    %v2398 = vpop.permute.xlu0 %2397
    %2399 = vset.pattern.permute.xlu0 2
    %2400 = vperm.xlu0 %2399, %v2175
    %v2401 = vpop.permute.xlu0 %2400
    %2402 = vset.pattern.permute.xlu0 2
    %2403 = vperm.xlu0 %2402, %v2176
    %v2404 = vpop.permute.xlu0 %2403
    %2405 = vset.pattern.permute.xlu0 2
    %2406 = vperm.xlu0 %2405, %v2177
    %v2407 = vpop.permute.xlu0 %2406
    %2408 = vset.pattern.permute.xlu0 2
    %2409 = vperm.xlu0 %2408, %v2178
    %v2410 = vpop.permute.xlu0 %2409
    %2411 = vset.pattern.permute.xlu0 2
    %2412 = vperm.xlu0 %2411, %v2179
    %v2413 = vpop.permute.xlu0 %2412
    %2414 = vset.pattern.permute.xlu0 2
    %2415 = vperm.xlu0 %2414, %v2180
    %v2416 = vpop.permute.xlu0 %2415
    %2417 = vset.pattern.permute.xlu0 2
    %2418 = vperm.xlu0 %2417, %v2181
    %v2419 = vpop.permute.xlu0 %2418
    %2420 = vset.pattern.permute.xlu0 2
    %2421 = vperm.xlu0 %2420, %v2182
    %v2422 = vpop.permute.xlu0 %2421
    %2423 = vset.pattern.permute.xlu0 2
    %2424 = vperm.xlu0 %2423, %v2183
    %v2425 = vpop.permute.xlu0 %2424
    %2426 = vset.pattern.permute.xlu0 2
    %2427 = vperm.xlu0 %2426, %v2184
    %v2428 = vpop.permute.xlu0 %2427
    %2429 = vset.pattern.permute.xlu0 2
    %2430 = vperm.xlu0 %2429, %v2185
    %v2431 = vpop.permute.xlu0 %2430
    %2432 = vset.pattern.permute.xlu0 2
    %2433 = vperm.xlu0 %2432, %v2186
    %v2434 = vpop.permute.xlu0 %2433
    %2435 = vset.pattern.permute.xlu0 2
    %2436 = vperm.xlu0 %2435, %v2187
    %v2437 = vpop.permute.xlu0 %2436
    %vm2438 = vcmp.eq.s32.totalorder %v2392, 1
    %vm2439 = vcmp.eq.s32.totalorder %v2395, 1
    %vm2440 = vcmp.eq.s32.totalorder %v2398, 1
    %vm2441 = vcmp.eq.s32.totalorder %v2401, 1
    %vm2442 = vcmp.eq.s32.totalorder %v2404, 1
    %vm2443 = vcmp.eq.s32.totalorder %v2407, 1
    %vm2444 = vcmp.eq.s32.totalorder %v2410, 1
    %vm2445 = vcmp.eq.s32.totalorder %v2413, 1
    %vm2446 = vcmp.eq.s32.totalorder %v2416, 1
    %vm2447 = vcmp.eq.s32.totalorder %v2419, 1
    %vm2448 = vcmp.eq.s32.totalorder %v2422, 1
    %vm2449 = vcmp.eq.s32.totalorder %v2425, 1
    %vm2450 = vcmp.eq.s32.totalorder %v2428, 1
    %vm2451 = vcmp.eq.s32.totalorder %v2431, 1
    %vm2452 = vcmp.eq.s32.totalorder %v2434, 1
    %vm2453 = vcmp.eq.s32.totalorder %v2437, 1
    %v2454 = vsel %vm2438, %v2078, -1e+30
    %v2455 = vsel %vm2439, %v2081, -1e+30
    %v2456 = vsel %vm2440, %v2086, -1e+30
    %v2457 = vsel %vm2441, %v2089, -1e+30
    %v2458 = vsel %vm2442, %v2094, -1e+30
    %v2459 = vsel %vm2443, %v2097, -1e+30
    %v2460 = vsel %vm2444, %v2102, -1e+30
    %v2461 = vsel %vm2445, %v2105, -1e+30
    %v2462 = vsel %vm2446, %v2110, -1e+30
    %v2463 = vsel %vm2447, %v2113, -1e+30
    %v2464 = vsel %vm2448, %v2118, -1e+30
    %v2465 = vsel %vm2449, %v2121, -1e+30
    %v2466 = vsel %vm2450, %v2126, -1e+30
    %v2467 = vsel %vm2451, %v2129, -1e+30
    %v2468 = vsel %vm2452, %v2134, -1e+30
    %v2469 = vsel %vm2453, %v2137, -1e+30
    %v2470 = vmax.f32 %v2454, %v2458
    %v2471 = vmax.f32 %v2455, %v2459
    %v2472 = vmax.f32 %v2456, %v2460
    %v2473 = vmax.f32 %v2457, %v2461
    %v2474 = vmax.f32 %v2470, %v2462
    %v2475 = vmax.f32 %v2471, %v2463
    %v2476 = vmax.f32 %v2472, %v2464
    %v2477 = vmax.f32 %v2473, %v2465
    %v2478 = vmax.f32 %v2474, %v2466
    %v2479 = vmax.f32 %v2475, %v2467
    %v2480 = vmax.f32 %v2476, %v2468
    %v2481 = vmax.f32 %v2477, %v2469
    %v2482 = vmax.f32 %v2478, %v2479
    %v2483 = vmax.f32 %v2480, %v2481
    %v2484 = vmax.f32 %v2482, %v2483
    %v2485 = vrot.slane %v2484, 4
    %v2486 = vmax.f32 %v2484, %v2485
    %v2487 = vrot.slane %v2486, 2
    %v2488 = vmax.f32 %v2486, %v2487
    %v2489 = vrot.slane %v2488, 1
    %v2490 = vmax.f32 %v2488, %v2489
    %2491 = vset.pattern.permute.xlu0 3
    %2492 = vperm.xlu0 %2491, %v2172
    %v2493 = vpop.permute.xlu0 %2492
    %2494 = vset.pattern.permute.xlu0 3
    %2495 = vperm.xlu0 %2494, %v2173
    %v2496 = vpop.permute.xlu0 %2495
    %2497 = vset.pattern.permute.xlu0 3
    %2498 = vperm.xlu0 %2497, %v2174
    %v2499 = vpop.permute.xlu0 %2498
    %2500 = vset.pattern.permute.xlu0 3
    %2501 = vperm.xlu0 %2500, %v2175
    %v2502 = vpop.permute.xlu0 %2501
    %2503 = vset.pattern.permute.xlu0 3
    %2504 = vperm.xlu0 %2503, %v2176
    %v2505 = vpop.permute.xlu0 %2504
    %2506 = vset.pattern.permute.xlu0 3
    %2507 = vperm.xlu0 %2506, %v2177
    %v2508 = vpop.permute.xlu0 %2507
    %2509 = vset.pattern.permute.xlu0 3
    %2510 = vperm.xlu0 %2509, %v2178
    %v2511 = vpop.permute.xlu0 %2510
    %2512 = vset.pattern.permute.xlu0 3
    %2513 = vperm.xlu0 %2512, %v2179
    %v2514 = vpop.permute.xlu0 %2513
    %2515 = vset.pattern.permute.xlu0 3
    %2516 = vperm.xlu0 %2515, %v2180
    %v2517 = vpop.permute.xlu0 %2516
    %2518 = vset.pattern.permute.xlu0 3
    %2519 = vperm.xlu0 %2518, %v2181
    %v2520 = vpop.permute.xlu0 %2519
    %2521 = vset.pattern.permute.xlu0 3
    %2522 = vperm.xlu0 %2521, %v2182
    %v2523 = vpop.permute.xlu0 %2522
    %2524 = vset.pattern.permute.xlu0 3
    %2525 = vperm.xlu0 %2524, %v2183
    %v2526 = vpop.permute.xlu0 %2525
    %2527 = vset.pattern.permute.xlu0 3
    %2528 = vperm.xlu0 %2527, %v2184
    %v2529 = vpop.permute.xlu0 %2528
    %2530 = vset.pattern.permute.xlu0 3
    %2531 = vperm.xlu0 %2530, %v2185
    %v2532 = vpop.permute.xlu0 %2531
    %2533 = vset.pattern.permute.xlu0 3
    %2534 = vperm.xlu0 %2533, %v2186
    %v2535 = vpop.permute.xlu0 %2534
    %2536 = vset.pattern.permute.xlu0 3
    %2537 = vperm.xlu0 %2536, %v2187
    %v2538 = vpop.permute.xlu0 %2537
    %vm2539 = vcmp.eq.s32.totalorder %v2493, 1
    %vm2540 = vcmp.eq.s32.totalorder %v2496, 1
    %vm2541 = vcmp.eq.s32.totalorder %v2499, 1
    %vm2542 = vcmp.eq.s32.totalorder %v2502, 1
    %vm2543 = vcmp.eq.s32.totalorder %v2505, 1
    %vm2544 = vcmp.eq.s32.totalorder %v2508, 1
    %vm2545 = vcmp.eq.s32.totalorder %v2511, 1
    %vm2546 = vcmp.eq.s32.totalorder %v2514, 1
    %vm2547 = vcmp.eq.s32.totalorder %v2517, 1
    %vm2548 = vcmp.eq.s32.totalorder %v2520, 1
    %vm2549 = vcmp.eq.s32.totalorder %v2523, 1
    %vm2550 = vcmp.eq.s32.totalorder %v2526, 1
    %vm2551 = vcmp.eq.s32.totalorder %v2529, 1
    %vm2552 = vcmp.eq.s32.totalorder %v2532, 1
    %vm2553 = vcmp.eq.s32.totalorder %v2535, 1
    %vm2554 = vcmp.eq.s32.totalorder %v2538, 1
    %v2555 = vsel %vm2539, %v2078, -1e+30
    %v2556 = vsel %vm2540, %v2081, -1e+30
    %v2557 = vsel %vm2541, %v2086, -1e+30
    %v2558 = vsel %vm2542, %v2089, -1e+30
    %v2559 = vsel %vm2543, %v2094, -1e+30
    %v2560 = vsel %vm2544, %v2097, -1e+30
    %v2561 = vsel %vm2545, %v2102, -1e+30
    %v2562 = vsel %vm2546, %v2105, -1e+30
    %v2563 = vsel %vm2547, %v2110, -1e+30
    %v2564 = vsel %vm2548, %v2113, -1e+30
    %v2565 = vsel %vm2549, %v2118, -1e+30
    %v2566 = vsel %vm2550, %v2121, -1e+30
    %v2567 = vsel %vm2551, %v2126, -1e+30
    %v2568 = vsel %vm2552, %v2129, -1e+30
    %v2569 = vsel %vm2553, %v2134, -1e+30
    %v2570 = vsel %vm2554, %v2137, -1e+30
    %v2571 = vmax.f32 %v2555, %v2559
    %v2572 = vmax.f32 %v2556, %v2560
    %v2573 = vmax.f32 %v2557, %v2561
    %v2574 = vmax.f32 %v2558, %v2562
    %v2575 = vmax.f32 %v2571, %v2563
    %v2576 = vmax.f32 %v2572, %v2564
    %v2577 = vmax.f32 %v2573, %v2565
    %v2578 = vmax.f32 %v2574, %v2566
    %v2579 = vmax.f32 %v2575, %v2567
    %v2580 = vmax.f32 %v2576, %v2568
    %v2581 = vmax.f32 %v2577, %v2569
    %v2582 = vmax.f32 %v2578, %v2570
    %v2583 = vmax.f32 %v2579, %v2580
    %v2584 = vmax.f32 %v2581, %v2582
    %v2585 = vmax.f32 %v2583, %v2584
    %v2586 = vrot.slane %v2585, 4
    %v2587 = vmax.f32 %v2585, %v2586
    %v2588 = vrot.slane %v2587, 2
    %v2589 = vmax.f32 %v2587, %v2588
    %v2590 = vrot.slane %v2589, 1
    %v2591 = vmax.f32 %v2589, %v2590
    %2592 = vset.pattern.permute.xlu0 4
    %2593 = vperm.xlu0 %2592, %v2172
    %v2594 = vpop.permute.xlu0 %2593
    %2595 = vset.pattern.permute.xlu0 4
    %2596 = vperm.xlu0 %2595, %v2173
    %v2597 = vpop.permute.xlu0 %2596
    %2598 = vset.pattern.permute.xlu0 4
    %2599 = vperm.xlu0 %2598, %v2174
    %v2600 = vpop.permute.xlu0 %2599
    %2601 = vset.pattern.permute.xlu0 4
    %2602 = vperm.xlu0 %2601, %v2175
    %v2603 = vpop.permute.xlu0 %2602
    %2604 = vset.pattern.permute.xlu0 4
    %2605 = vperm.xlu0 %2604, %v2176
    %v2606 = vpop.permute.xlu0 %2605
    %2607 = vset.pattern.permute.xlu0 4
    %2608 = vperm.xlu0 %2607, %v2177
    %v2609 = vpop.permute.xlu0 %2608
    %2610 = vset.pattern.permute.xlu0 4
    %2611 = vperm.xlu0 %2610, %v2178
    %v2612 = vpop.permute.xlu0 %2611
    %2613 = vset.pattern.permute.xlu0 4
    %2614 = vperm.xlu0 %2613, %v2179
    %v2615 = vpop.permute.xlu0 %2614
    %2616 = vset.pattern.permute.xlu0 4
    %2617 = vperm.xlu0 %2616, %v2180
    %v2618 = vpop.permute.xlu0 %2617
    %2619 = vset.pattern.permute.xlu0 4
    %2620 = vperm.xlu0 %2619, %v2181
    %v2621 = vpop.permute.xlu0 %2620
    %2622 = vset.pattern.permute.xlu0 4
    %2623 = vperm.xlu0 %2622, %v2182
    %v2624 = vpop.permute.xlu0 %2623
    %2625 = vset.pattern.permute.xlu0 4
    %2626 = vperm.xlu0 %2625, %v2183
    %v2627 = vpop.permute.xlu0 %2626
    %2628 = vset.pattern.permute.xlu0 4
    %2629 = vperm.xlu0 %2628, %v2184
    %v2630 = vpop.permute.xlu0 %2629
    %2631 = vset.pattern.permute.xlu0 4
    %2632 = vperm.xlu0 %2631, %v2185
    %v2633 = vpop.permute.xlu0 %2632
    %2634 = vset.pattern.permute.xlu0 4
    %2635 = vperm.xlu0 %2634, %v2186
    %v2636 = vpop.permute.xlu0 %2635
    %2637 = vset.pattern.permute.xlu0 4
    %2638 = vperm.xlu0 %2637, %v2187
    %v2639 = vpop.permute.xlu0 %2638
    %vm2640 = vcmp.eq.s32.totalorder %v2594, 1
    %vm2641 = vcmp.eq.s32.totalorder %v2597, 1
    %vm2642 = vcmp.eq.s32.totalorder %v2600, 1
    %vm2643 = vcmp.eq.s32.totalorder %v2603, 1
    %vm2644 = vcmp.eq.s32.totalorder %v2606, 1
    %vm2645 = vcmp.eq.s32.totalorder %v2609, 1
    %vm2646 = vcmp.eq.s32.totalorder %v2612, 1
    %vm2647 = vcmp.eq.s32.totalorder %v2615, 1
    %vm2648 = vcmp.eq.s32.totalorder %v2618, 1
    %vm2649 = vcmp.eq.s32.totalorder %v2621, 1
    %vm2650 = vcmp.eq.s32.totalorder %v2624, 1
    %vm2651 = vcmp.eq.s32.totalorder %v2627, 1
    %vm2652 = vcmp.eq.s32.totalorder %v2630, 1
    %vm2653 = vcmp.eq.s32.totalorder %v2633, 1
    %vm2654 = vcmp.eq.s32.totalorder %v2636, 1
    %vm2655 = vcmp.eq.s32.totalorder %v2639, 1
    %v2656 = vsel %vm2640, %v2078, -1e+30
    %v2657 = vsel %vm2641, %v2081, -1e+30
    %v2658 = vsel %vm2642, %v2086, -1e+30
    %v2659 = vsel %vm2643, %v2089, -1e+30
    %v2660 = vsel %vm2644, %v2094, -1e+30
    %v2661 = vsel %vm2645, %v2097, -1e+30
    %v2662 = vsel %vm2646, %v2102, -1e+30
    %v2663 = vsel %vm2647, %v2105, -1e+30
    %v2664 = vsel %vm2648, %v2110, -1e+30
    %v2665 = vsel %vm2649, %v2113, -1e+30
    %v2666 = vsel %vm2650, %v2118, -1e+30
    %v2667 = vsel %vm2651, %v2121, -1e+30
    %v2668 = vsel %vm2652, %v2126, -1e+30
    %v2669 = vsel %vm2653, %v2129, -1e+30
    %v2670 = vsel %vm2654, %v2134, -1e+30
    %v2671 = vsel %vm2655, %v2137, -1e+30
    %v2672 = vmax.f32 %v2656, %v2660
    %v2673 = vmax.f32 %v2657, %v2661
    %v2674 = vmax.f32 %v2658, %v2662
    %v2675 = vmax.f32 %v2659, %v2663
    %v2676 = vmax.f32 %v2672, %v2664
    %v2677 = vmax.f32 %v2673, %v2665
    %v2678 = vmax.f32 %v2674, %v2666
    %v2679 = vmax.f32 %v2675, %v2667
    %v2680 = vmax.f32 %v2676, %v2668
    %v2681 = vmax.f32 %v2677, %v2669
    %v2682 = vmax.f32 %v2678, %v2670
    %v2683 = vmax.f32 %v2679, %v2671
    %v2684 = vmax.f32 %v2680, %v2681
    %v2685 = vmax.f32 %v2682, %v2683
    %v2686 = vmax.f32 %v2684, %v2685
    %v2687 = vrot.slane %v2686, 4
    %v2688 = vmax.f32 %v2686, %v2687
    %v2689 = vrot.slane %v2688, 2
    %v2690 = vmax.f32 %v2688, %v2689
    %v2691 = vrot.slane %v2690, 1
    %v2692 = vmax.f32 %v2690, %v2691
    %2693 = vset.pattern.permute.xlu0 5
    %2694 = vperm.xlu0 %2693, %v2172
    %v2695 = vpop.permute.xlu0 %2694
    %2696 = vset.pattern.permute.xlu0 5
    %2697 = vperm.xlu0 %2696, %v2173
    %v2698 = vpop.permute.xlu0 %2697
    %2699 = vset.pattern.permute.xlu0 5
    %2700 = vperm.xlu0 %2699, %v2174
    %v2701 = vpop.permute.xlu0 %2700
    %2702 = vset.pattern.permute.xlu0 5
    %2703 = vperm.xlu0 %2702, %v2175
    %v2704 = vpop.permute.xlu0 %2703
    %2705 = vset.pattern.permute.xlu0 5
    %2706 = vperm.xlu0 %2705, %v2176
    %v2707 = vpop.permute.xlu0 %2706
    %2708 = vset.pattern.permute.xlu0 5
    %2709 = vperm.xlu0 %2708, %v2177
    %v2710 = vpop.permute.xlu0 %2709
    %2711 = vset.pattern.permute.xlu0 5
    %2712 = vperm.xlu0 %2711, %v2178
    %v2713 = vpop.permute.xlu0 %2712
    %2714 = vset.pattern.permute.xlu0 5
    %2715 = vperm.xlu0 %2714, %v2179
    %v2716 = vpop.permute.xlu0 %2715
    %2717 = vset.pattern.permute.xlu0 5
    %2718 = vperm.xlu0 %2717, %v2180
    %v2719 = vpop.permute.xlu0 %2718
    %2720 = vset.pattern.permute.xlu0 5
    %2721 = vperm.xlu0 %2720, %v2181
    %v2722 = vpop.permute.xlu0 %2721
    %2723 = vset.pattern.permute.xlu0 5
    %2724 = vperm.xlu0 %2723, %v2182
    %v2725 = vpop.permute.xlu0 %2724
    %2726 = vset.pattern.permute.xlu0 5
    %2727 = vperm.xlu0 %2726, %v2183
    %v2728 = vpop.permute.xlu0 %2727
    %2729 = vset.pattern.permute.xlu0 5
    %2730 = vperm.xlu0 %2729, %v2184
    %v2731 = vpop.permute.xlu0 %2730
    %2732 = vset.pattern.permute.xlu0 5
    %2733 = vperm.xlu0 %2732, %v2185
    %v2734 = vpop.permute.xlu0 %2733
    %2735 = vset.pattern.permute.xlu0 5
    %2736 = vperm.xlu0 %2735, %v2186
    %v2737 = vpop.permute.xlu0 %2736
    %2738 = vset.pattern.permute.xlu0 5
    %2739 = vperm.xlu0 %2738, %v2187
    %v2740 = vpop.permute.xlu0 %2739
    %vm2741 = vcmp.eq.s32.totalorder %v2695, 1
    %vm2742 = vcmp.eq.s32.totalorder %v2698, 1
    %vm2743 = vcmp.eq.s32.totalorder %v2701, 1
    %vm2744 = vcmp.eq.s32.totalorder %v2704, 1
    %vm2745 = vcmp.eq.s32.totalorder %v2707, 1
    %vm2746 = vcmp.eq.s32.totalorder %v2710, 1
    %vm2747 = vcmp.eq.s32.totalorder %v2713, 1
    %vm2748 = vcmp.eq.s32.totalorder %v2716, 1
    %vm2749 = vcmp.eq.s32.totalorder %v2719, 1
    %vm2750 = vcmp.eq.s32.totalorder %v2722, 1
    %vm2751 = vcmp.eq.s32.totalorder %v2725, 1
    %vm2752 = vcmp.eq.s32.totalorder %v2728, 1
    %vm2753 = vcmp.eq.s32.totalorder %v2731, 1
    %vm2754 = vcmp.eq.s32.totalorder %v2734, 1
    %vm2755 = vcmp.eq.s32.totalorder %v2737, 1
    %vm2756 = vcmp.eq.s32.totalorder %v2740, 1
    %v2757 = vsel %vm2741, %v2078, -1e+30
    %v2758 = vsel %vm2742, %v2081, -1e+30
    %v2759 = vsel %vm2743, %v2086, -1e+30
    %v2760 = vsel %vm2744, %v2089, -1e+30
    %v2761 = vsel %vm2745, %v2094, -1e+30
    %v2762 = vsel %vm2746, %v2097, -1e+30
    %v2763 = vsel %vm2747, %v2102, -1e+30
    %v2764 = vsel %vm2748, %v2105, -1e+30
    %v2765 = vsel %vm2749, %v2110, -1e+30
    %v2766 = vsel %vm2750, %v2113, -1e+30
    %v2767 = vsel %vm2751, %v2118, -1e+30
    %v2768 = vsel %vm2752, %v2121, -1e+30
    %v2769 = vsel %vm2753, %v2126, -1e+30
    %v2770 = vsel %vm2754, %v2129, -1e+30
    %v2771 = vsel %vm2755, %v2134, -1e+30
    %v2772 = vsel %vm2756, %v2137, -1e+30
    %v2773 = vmax.f32 %v2757, %v2761
    %v2774 = vmax.f32 %v2758, %v2762
    %v2775 = vmax.f32 %v2759, %v2763
    %v2776 = vmax.f32 %v2760, %v2764
    %v2777 = vmax.f32 %v2773, %v2765
    %v2778 = vmax.f32 %v2774, %v2766
    %v2779 = vmax.f32 %v2775, %v2767
    %v2780 = vmax.f32 %v2776, %v2768
    %v2781 = vmax.f32 %v2777, %v2769
    %v2782 = vmax.f32 %v2778, %v2770
    %v2783 = vmax.f32 %v2779, %v2771
    %v2784 = vmax.f32 %v2780, %v2772
    %v2785 = vmax.f32 %v2781, %v2782
    %v2786 = vmax.f32 %v2783, %v2784
    %v2787 = vmax.f32 %v2785, %v2786
    %v2788 = vrot.slane %v2787, 4
    %v2789 = vmax.f32 %v2787, %v2788
    %v2790 = vrot.slane %v2789, 2
    %v2791 = vmax.f32 %v2789, %v2790
    %v2792 = vrot.slane %v2791, 1
    %v2793 = vmax.f32 %v2791, %v2792
    %2794 = vset.pattern.permute.xlu0 6
    %2795 = vperm.xlu0 %2794, %v2172
    %v2796 = vpop.permute.xlu0 %2795
    %2797 = vset.pattern.permute.xlu0 6
    %2798 = vperm.xlu0 %2797, %v2173
    %v2799 = vpop.permute.xlu0 %2798
    %2800 = vset.pattern.permute.xlu0 6
    %2801 = vperm.xlu0 %2800, %v2174
    %v2802 = vpop.permute.xlu0 %2801
    %2803 = vset.pattern.permute.xlu0 6
    %2804 = vperm.xlu0 %2803, %v2175
    %v2805 = vpop.permute.xlu0 %2804
    %2806 = vset.pattern.permute.xlu0 6
    %2807 = vperm.xlu0 %2806, %v2176
    %v2808 = vpop.permute.xlu0 %2807
    %2809 = vset.pattern.permute.xlu0 6
    %2810 = vperm.xlu0 %2809, %v2177
    %v2811 = vpop.permute.xlu0 %2810
    %2812 = vset.pattern.permute.xlu0 6
    %2813 = vperm.xlu0 %2812, %v2178
    %v2814 = vpop.permute.xlu0 %2813
    %2815 = vset.pattern.permute.xlu0 6
    %2816 = vperm.xlu0 %2815, %v2179
    %v2817 = vpop.permute.xlu0 %2816
    %2818 = vset.pattern.permute.xlu0 6
    %2819 = vperm.xlu0 %2818, %v2180
    %v2820 = vpop.permute.xlu0 %2819
    %2821 = vset.pattern.permute.xlu0 6
    %2822 = vperm.xlu0 %2821, %v2181
    %v2823 = vpop.permute.xlu0 %2822
    %2824 = vset.pattern.permute.xlu0 6
    %2825 = vperm.xlu0 %2824, %v2182
    %v2826 = vpop.permute.xlu0 %2825
    %2827 = vset.pattern.permute.xlu0 6
    %2828 = vperm.xlu0 %2827, %v2183
    %v2829 = vpop.permute.xlu0 %2828
    %2830 = vset.pattern.permute.xlu0 6
    %2831 = vperm.xlu0 %2830, %v2184
    %v2832 = vpop.permute.xlu0 %2831
    %2833 = vset.pattern.permute.xlu0 6
    %2834 = vperm.xlu0 %2833, %v2185
    %v2835 = vpop.permute.xlu0 %2834
    %2836 = vset.pattern.permute.xlu0 6
    %2837 = vperm.xlu0 %2836, %v2186
    %v2838 = vpop.permute.xlu0 %2837
    %2839 = vset.pattern.permute.xlu0 6
    %2840 = vperm.xlu0 %2839, %v2187
    %v2841 = vpop.permute.xlu0 %2840
    %vm2842 = vcmp.eq.s32.totalorder %v2796, 1
    %vm2843 = vcmp.eq.s32.totalorder %v2799, 1
    %vm2844 = vcmp.eq.s32.totalorder %v2802, 1
    %vm2845 = vcmp.eq.s32.totalorder %v2805, 1
    %vm2846 = vcmp.eq.s32.totalorder %v2808, 1
    %vm2847 = vcmp.eq.s32.totalorder %v2811, 1
    %vm2848 = vcmp.eq.s32.totalorder %v2814, 1
    %vm2849 = vcmp.eq.s32.totalorder %v2817, 1
    %vm2850 = vcmp.eq.s32.totalorder %v2820, 1
    %vm2851 = vcmp.eq.s32.totalorder %v2823, 1
    %vm2852 = vcmp.eq.s32.totalorder %v2826, 1
    %vm2853 = vcmp.eq.s32.totalorder %v2829, 1
    %vm2854 = vcmp.eq.s32.totalorder %v2832, 1
    %vm2855 = vcmp.eq.s32.totalorder %v2835, 1
    %vm2856 = vcmp.eq.s32.totalorder %v2838, 1
    %vm2857 = vcmp.eq.s32.totalorder %v2841, 1
    %v2858 = vsel %vm2842, %v2078, -1e+30
    %v2859 = vsel %vm2843, %v2081, -1e+30
    %v2860 = vsel %vm2844, %v2086, -1e+30
    %v2861 = vsel %vm2845, %v2089, -1e+30
    %v2862 = vsel %vm2846, %v2094, -1e+30
    %v2863 = vsel %vm2847, %v2097, -1e+30
    %v2864 = vsel %vm2848, %v2102, -1e+30
    %v2865 = vsel %vm2849, %v2105, -1e+30
    %v2866 = vsel %vm2850, %v2110, -1e+30
    %v2867 = vsel %vm2851, %v2113, -1e+30
    %v2868 = vsel %vm2852, %v2118, -1e+30
    %v2869 = vsel %vm2853, %v2121, -1e+30
    %v2870 = vsel %vm2854, %v2126, -1e+30
    %v2871 = vsel %vm2855, %v2129, -1e+30
    %v2872 = vsel %vm2856, %v2134, -1e+30
    %v2873 = vsel %vm2857, %v2137, -1e+30
    %v2874 = vmax.f32 %v2858, %v2862
    %v2875 = vmax.f32 %v2859, %v2863
    %v2876 = vmax.f32 %v2860, %v2864
    %v2877 = vmax.f32 %v2861, %v2865
    %v2878 = vmax.f32 %v2874, %v2866
    %v2879 = vmax.f32 %v2875, %v2867
    %v2880 = vmax.f32 %v2876, %v2868
    %v2881 = vmax.f32 %v2877, %v2869
    %v2882 = vmax.f32 %v2878, %v2870
    %v2883 = vmax.f32 %v2879, %v2871
    %v2884 = vmax.f32 %v2880, %v2872
    %v2885 = vmax.f32 %v2881, %v2873
    %v2886 = vmax.f32 %v2882, %v2883
    %v2887 = vmax.f32 %v2884, %v2885
    %v2888 = vmax.f32 %v2886, %v2887
    %v2889 = vrot.slane %v2888, 4
    %v2890 = vmax.f32 %v2888, %v2889
    %v2891 = vrot.slane %v2890, 2
    %v2892 = vmax.f32 %v2890, %v2891
    %v2893 = vrot.slane %v2892, 1
    %v2894 = vmax.f32 %v2892, %v2893
    %2895 = vset.pattern.permute.xlu0 7
    %2896 = vperm.xlu0 %2895, %v2172
    %v2897 = vpop.permute.xlu0 %2896
    %2898 = vset.pattern.permute.xlu0 7
    %2899 = vperm.xlu0 %2898, %v2173
    %v2900 = vpop.permute.xlu0 %2899
    %2901 = vset.pattern.permute.xlu0 7
    %2902 = vperm.xlu0 %2901, %v2174
    %v2903 = vpop.permute.xlu0 %2902
    %2904 = vset.pattern.permute.xlu0 7
    %2905 = vperm.xlu0 %2904, %v2175
    %v2906 = vpop.permute.xlu0 %2905
    %2907 = vset.pattern.permute.xlu0 7
    %2908 = vperm.xlu0 %2907, %v2176
    %v2909 = vpop.permute.xlu0 %2908
    %2910 = vset.pattern.permute.xlu0 7
    %2911 = vperm.xlu0 %2910, %v2177
    %v2912 = vpop.permute.xlu0 %2911
    %2913 = vset.pattern.permute.xlu0 7
    %2914 = vperm.xlu0 %2913, %v2178
    %v2915 = vpop.permute.xlu0 %2914
    %2916 = vset.pattern.permute.xlu0 7
    %2917 = vperm.xlu0 %2916, %v2179
    %v2918 = vpop.permute.xlu0 %2917
    %2919 = vset.pattern.permute.xlu0 7
    %2920 = vperm.xlu0 %2919, %v2180
    %v2921 = vpop.permute.xlu0 %2920
    %2922 = vset.pattern.permute.xlu0 7
    %2923 = vperm.xlu0 %2922, %v2181
    %v2924 = vpop.permute.xlu0 %2923
    %2925 = vset.pattern.permute.xlu0 7
    %2926 = vperm.xlu0 %2925, %v2182
    %v2927 = vpop.permute.xlu0 %2926
    %2928 = vset.pattern.permute.xlu0 7
    %2929 = vperm.xlu0 %2928, %v2183
    %v2930 = vpop.permute.xlu0 %2929
    %2931 = vset.pattern.permute.xlu0 7
    %2932 = vperm.xlu0 %2931, %v2184
    %v2933 = vpop.permute.xlu0 %2932
    %2934 = vset.pattern.permute.xlu0 7
    %2935 = vperm.xlu0 %2934, %v2185
    %v2936 = vpop.permute.xlu0 %2935
    %2937 = vset.pattern.permute.xlu0 7
    %2938 = vperm.xlu0 %2937, %v2186
    %v2939 = vpop.permute.xlu0 %2938
    %2940 = vset.pattern.permute.xlu0 7
    %2941 = vperm.xlu0 %2940, %v2187
    %v2942 = vpop.permute.xlu0 %2941
    %vm2943 = vcmp.eq.s32.totalorder %v2897, 1
    %vm2944 = vcmp.eq.s32.totalorder %v2900, 1
    %vm2945 = vcmp.eq.s32.totalorder %v2903, 1
    %vm2946 = vcmp.eq.s32.totalorder %v2906, 1
    %vm2947 = vcmp.eq.s32.totalorder %v2909, 1
    %vm2948 = vcmp.eq.s32.totalorder %v2912, 1
    %vm2949 = vcmp.eq.s32.totalorder %v2915, 1
    %vm2950 = vcmp.eq.s32.totalorder %v2918, 1
    %vm2951 = vcmp.eq.s32.totalorder %v2921, 1
    %vm2952 = vcmp.eq.s32.totalorder %v2924, 1
    %vm2953 = vcmp.eq.s32.totalorder %v2927, 1
    %vm2954 = vcmp.eq.s32.totalorder %v2930, 1
    %vm2955 = vcmp.eq.s32.totalorder %v2933, 1
    %vm2956 = vcmp.eq.s32.totalorder %v2936, 1
    %vm2957 = vcmp.eq.s32.totalorder %v2939, 1
    %vm2958 = vcmp.eq.s32.totalorder %v2942, 1
    %v2959 = vsel %vm2943, %v2078, -1e+30
    %v2960 = vsel %vm2944, %v2081, -1e+30
    %v2961 = vsel %vm2945, %v2086, -1e+30
    %v2962 = vsel %vm2946, %v2089, -1e+30
    %v2963 = vsel %vm2947, %v2094, -1e+30
    %v2964 = vsel %vm2948, %v2097, -1e+30
    %v2965 = vsel %vm2949, %v2102, -1e+30
    %v2966 = vsel %vm2950, %v2105, -1e+30
    %v2967 = vsel %vm2951, %v2110, -1e+30
    %v2968 = vsel %vm2952, %v2113, -1e+30
    %v2969 = vsel %vm2953, %v2118, -1e+30
    %v2970 = vsel %vm2954, %v2121, -1e+30
    %v2971 = vsel %vm2955, %v2126, -1e+30
    %v2972 = vsel %vm2956, %v2129, -1e+30
    %v2973 = vsel %vm2957, %v2134, -1e+30
    %v2974 = vsel %vm2958, %v2137, -1e+30
    %v2975 = vmax.f32 %v2959, %v2963
    %v2976 = vmax.f32 %v2960, %v2964
    %v2977 = vmax.f32 %v2961, %v2965
    %v2978 = vmax.f32 %v2962, %v2966
    %v2979 = vmax.f32 %v2975, %v2967
    %v2980 = vmax.f32 %v2976, %v2968
    %v2981 = vmax.f32 %v2977, %v2969
    %v2982 = vmax.f32 %v2978, %v2970
    %v2983 = vmax.f32 %v2979, %v2971
    %v2984 = vmax.f32 %v2980, %v2972
    %v2985 = vmax.f32 %v2981, %v2973
    %v2986 = vmax.f32 %v2982, %v2974
    %v2987 = vmax.f32 %v2983, %v2984
    %v2988 = vmax.f32 %v2985, %v2986
    %v2989 = vmax.f32 %v2987, %v2988
    %v2990 = vrot.slane %v2989, 4
    %v2991 = vmax.f32 %v2989, %v2990
    %v2992 = vrot.slane %v2991, 2
    %v2993 = vmax.f32 %v2991, %v2992
    %v2994 = vrot.slane %v2993, 1
    %v2995 = vmax.f32 %v2993, %v2994
    %vm2996 = vcmask 1040384
    %v2997 = vsel %vm2996, %v2288, %v2389
    %vm2998 = vcmask 1041408
    %v2999 = vsel %vm2998, %v2997, %v2490
    %vm3000 = vcmask 1042432
    %v3001 = vsel %vm3000, %v2999, %v2591
    %vm3002 = vcmask 1043456
    %v3003 = vsel %vm3002, %v3001, %v2692
    %vm3004 = vcmask 1044480
    %v3005 = vsel %vm3004, %v3003, %v2793
    %vm3006 = vcmask 1045504
    %v3007 = vsel %vm3006, %v3005, %v2894
    %vm3008 = vcmask 1046528
    %v3009 = vsel %vm3008, %v3007, %v2995
    %3010 = vst [vmem:[#allocation11] sm:$0xff] %v3009
    // Predicated region
    $region58: #{tpu_custom_call.1} parent=1 // pred_check
      _
    $region59: #{tpu_custom_call.1} parent=1 // pred_check_branch
      %3012 = sbr.rel (0) target = $region61
    $region60: #{tpu_custom_call.1} parent=1 // pred_region
      %s3014 = ssub.s32 128, 128
      %3015 = vsyncadd [#allocation4], %s3014
      %s3017 = sshll.u32 [#allocation11], 4
      %s3018 = int_to_ptr.vmem [resolvable:$true] %s3017
      %3020 = dma.vmem_to_hbm [thread:$0]  %s3018, 128, %s9, [#allocation4]
    $region61: #{tpu_custom_call.1} parent=1 // pred_fallthru
      _
    // Predicated region
    $region62: #{tpu_custom_call.1} parent=1 // pred_check
      _
    $region63: #{tpu_custom_call.1} parent=1 // pred_check_branch
      %3022 = sbr.rel (0) target = $region65
    $region64: #{tpu_custom_call.1} parent=1 // pred_region
      %3023 = dma.done [#allocation4], 128
    $region65: #{tpu_custom_call.1} parent=1 // pred_fallthru
      _
    %3024 = vsyncpa [#allocation3], 1
    %3025 = vsyncpa [#allocation6], 1
    %3026 = vsyncpa [#allocation9], 1
    %3027 = vsyncpa [#allocation4], 1

</llo_original>
